<compile_context>
chip_gen: v7x
topology: tpu7x:2x2x1
jax: 0.10.0
libtpu: 0.0.40
codegen_flags: <defaults>
</compile_context>

<pallas_src>
import functools

import jax
import jax.numpy as jnp
from jax import lax
from jax.experimental import pallas as pl
from jax.experimental.pallas import tpu as pltpu


# ----------------------------- Pallas kernel -------------------------------

def _textrnn_fused_kernel(*refs, hidden, seq_len, batch, num_layers):
    """Whole network: num_layers bidirectional LSTM layers + FC head.

    refs layout (inputs..., output):
      refs[0]                : x        (T*B, E)      bf16  time-major embeddings
      refs[1 + 3*l + 0]      : w_ih[l]  (2, F_l, 4H)  bf16  (F_0 = E, F_l>0 = 2H)
      refs[1 + 3*l + 1]      : w_hh[l]  (2, H, 4H)    bf16
      refs[1 + 3*l + 2]      : b[l]     (2, 1, 4H)    f32   (b_ih + b_hh combined)
      refs[1 + 3*L + 0]      : fc_w     (2H, C)       f32
      refs[1 + 3*L + 1]      : fc_b     (1, C)        f32
      refs[1 + 3*L + 2]      : out      (B, C)        f32
    Gate order matches PyTorch: i, f, g, o.
    """
    H, T, B = hidden, seq_len, batch
    x_ref = refs[0]
    fc_w_ref = refs[1 + 3 * num_layers]
    fc_b_ref = refs[2 + 3 * num_layers]
    out_ref = refs[3 + 3 * num_layers]

    def gates_act(g):
        # Full-tile nonlinearities: (B, 4H) == (8, 128) == one f32 vreg at
        # these shapes -> 2 EUP pushes instead of 4, no pre-EUP lane slicing.
        s = jax.nn.sigmoid(g)
        t = jnp.tanh(g)
        return (s[:, 0 * H:1 * H], s[:, 1 * H:2 * H],
                t[:, 2 * H:3 * H], s[:, 3 * H:4 * H])

    x = x_ref[...]                                    # (T*B, F) bf16 value

    for li in range(num_layers):
        w_ih_ref = refs[1 + 3 * li]
        w_hh_ref = refs[2 + 3 * li]
        b_ref = refs[3 + 3 * li]
        last = li == num_layers - 1

        w_ih_f, w_ih_b = w_ih_ref[0], w_ih_ref[1]     # (F, 4H) bf16
        whh_f, whh_b = w_hh_ref[0], w_hh_ref[1]       # (H, 4H) bf16
        b_f, b_b = b_ref[0], b_ref[1]                 # (1, 4H) f32

        # ---- hoisted input projection: one big MXU matmul per direction ----
        pre_f = jnp.dot(x, w_ih_f, preferred_element_type=jnp.float32) + b_f
        if last:
            # Only x[T-1] feeds the single backward step of the last layer.
            pre_b = jnp.dot(x[(T - 1) * B:T * B, :], w_ih_b,
                            preferred_element_type=jnp.float32) + b_b
        else:
            pre_b = jnp.dot(x, w_ih_b, preferred_element_type=jnp.float32) + b_b

        hf = jnp.zeros((B, H), jnp.float32)
        cf = jnp.zeros((B, H), jnp.float32)

        if last:
            # Forward chain: full recurrence, only the final h is needed.
            for s in range(T):
                g = pre_f[s * B:(s + 1) * B, :] + jnp.dot(
                    hf.astype(whh_f.dtype), whh_f,
                    preferred_element_type=jnp.float32)
                i, f, gg, o = gates_act(g)
                cf = f * cf + i * gg
                hf = o * jnp.tanh(cf)
            # Backward chain: zero init state => one step; c_prev = 0 so the
            # f-gate term vanishes.
            i, _, gg, o = gates_act(pre_b)
            hb = o * jnp.tanh(i * gg)
            # Fused FC head: concat(hf, hb) @ W_fc == two half matmuls.
            out_ref[...] = (
                jnp.dot(hf, fc_w_ref[0:H, :], preferred_element_type=jnp.float32)
                + jnp.dot(hb, fc_w_ref[H:2 * H, :],
                          preferred_element_type=jnp.float32)
                + fc_b_ref[...])
        else:
            hb = jnp.zeros((B, H), jnp.float32)
            cb = jnp.zeros((B, H), jnp.float32)
            hs_f = [None] * T
            hs_b = [None] * T
            # Interleaved fwd/bwd recurrences: two independent serial chains
            # in the same unrolled loop body fill each other's latency bubbles.
            for s in range(T):
                tf = s
                tb = T - 1 - s
                gf = pre_f[tf * B:(tf + 1) * B, :] + jnp.dot(
                    hf.astype(whh_f.dtype), whh_f,
                    preferred_element_type=jnp.float32)
                gb = pre_b[tb * B:(tb + 1) * B, :] + jnp.dot(
                    hb.astype(whh_b.dtype), whh_b,
                    preferred_element_type=jnp.float32)
                i, f, gg, o = gates_act(gf)
                cf = f * cf + i * gg
                hf = o * jnp.tanh(cf)
                i, f, gg, o = gates_act(gb)
                cb = f * cb + i * gg
                hb = o * jnp.tanh(cb)
                hs_f[tf] = hf
                hs_b[tb] = hb
            # Lane-concatenated (T*B, 2H) layer output (stays in vregs): the
            # next layer's projection contracts K = 2H in a single matmul.
            xf = jnp.concatenate(hs_f, axis=0)        # (T*B, H)
            xb = jnp.concatenate(hs_b, axis=0)        # (T*B, H)
            x = jnp.concatenate([xf, xb], axis=-1).astype(jnp.bfloat16)


def textrnn_fused_pallas(x, layer_args, fc_w, fc_b, *, hidden, seq_len, batch,
                         num_layers):
    kernel = functools.partial(_textrnn_fused_kernel, hidden=hidden,
                               seq_len=seq_len, batch=batch,
                               num_layers=num_layers)
    num_classes = fc_w.shape[1]
    args = [x] + list(layer_args) + [fc_w, fc_b]
    return pl.pallas_call(
        kernel,
        out_shape=jax.ShapeDtypeStruct((batch, num_classes), jnp.float32),
        in_specs=[pl.BlockSpec(memory_space=pltpu.MemorySpace.VMEM)] * len(args),
        out_specs=pl.BlockSpec(memory_space=pltpu.MemorySpace.VMEM),
        compiler_params=pltpu.CompilerParams(
            vmem_limit_bytes=32 * 1024 * 1024),
    )(*args)


# ------------------------------ Model forward ------------------------------

def textrnn_forward(params, tokens, hidden):
    B, T = tokens.shape
    # Pad batch to a sublane multiple so (B, H) state / matmul rows are dense.
    bp = max(8, ((B + 7) // 8) * 8)
    # Single bf16 gather directly in time-major order; one pad + reshape.
    emb = params["embedding"][tokens.T]                    # (T, B, E) bf16
    if bp != B:
        emb = jnp.pad(emb, ((0, 0), (0, bp - B), (0, 0)))
    x = emb.reshape(T * bp, -1)                            # (T*Bp, E) bf16

    layer_args = []
    for layer in params["lstm"]:
        layer_args += [layer["w_ih"], layer["w_hh"], layer["b"]]

    logits = textrnn_fused_pallas(
        x, layer_args, params["fc_w"], params["fc_b"],
        hidden=hidden, seq_len=T, batch=bp,
        num_layers=len(params["lstm"]))                    # (Bp, C)
    return logits[:B]


# --------------------------- Pure-JAX reference ----------------------------

def _lstm_dir_ref(x_tbf, w_ih, w_hh, b, hidden, reverse):
    T, B, _ = x_tbf.shape
    xs = x_tbf[::-1] if reverse else x_tbf

    def step(carry, x_t):
        h, c = carry
        gates = x_t @ w_ih + h @ w_hh + b
        i, f, g, o = jnp.split(gates, 4, axis=-1)
        i, f, o = jax.nn.sigmoid(i), jax.nn.sigmoid(f), jax.nn.sigmoid(o)
        g = jnp.tanh(g)
        c = f * c + i * g
        h = o * jnp.tanh(c)
        return (h, c), h

    init = (jnp.zeros((B, hidden), jnp.float32),
            jnp.zeros((B, hidden), jnp.float32))
    _, hs = lax.scan(step, init, xs)
    return hs[::-1] if reverse else hs


def textrnn_ref(params, tokens, hidden):
    emb = params["embedding"][tokens].astype(jnp.float32)  # (B, T, E)
    out = jnp.transpose(emb, (1, 0, 2))                    # (T, B, E)
    for layer in params["lstm"]:
        w_ih = layer["w_ih"].astype(jnp.float32)           # (2, F, 4H)
        w_hh = layer["w_hh"].astype(jnp.float32)           # (2, H, 4H)
        b = layer["b"]                                     # (2, 1, 4H)
        fwd = _lstm_dir_ref(out, w_ih[0], w_hh[0], b[0], hidden, False)
        bwd = _lstm_dir_ref(out, w_ih[1], w_hh[1], b[1], hidden, True)
        out = jnp.concatenate([fwd, bwd], axis=-1)         # (T, B, 2H)
    return out[-1] @ params["fc_w"] + params["fc_b"]


# ---------------------------------- Setup ----------------------------------

def init_params(key, vocab, embed, hidden, num_layers, num_classes):
    keys = iter(jax.random.split(key, 4 + 3 * num_layers))
    scale = float(hidden) ** -0.5

    def u(shape, dtype=jnp.float32):
        v = jax.random.uniform(next(keys), shape, jnp.float32, -scale, scale)
        return v.astype(dtype)

    # Weights / embedding stored bf16 once at init (no per-forward converts).
    params = {"embedding": jax.random.normal(
        next(keys), (vocab, embed), jnp.float32).astype(jnp.bfloat16)}
    layers = []
    for li in range(num_layers):
        fin = embed if li == 0 else 2 * hidden
        layers.append({
            "w_ih": u((2, fin, 4 * hidden), jnp.bfloat16),   # [dir, Fin, 4H]
            "w_hh": u((2, hidden, 4 * hidden), jnp.bfloat16),  # [dir, H, 4H]
            "b":    u((2, 1, 4 * hidden)),                   # b_ih + b_hh
        })
    params["lstm"] = layers
    params["fc_w"] = u((2 * hidden, num_classes))
    params["fc_b"] = u((1, num_classes))
    return params


if __name__ == "__main__":
    B, T = 2, 8
    VOCAB, EMBED, HIDDEN, NUM_LAYERS, NUM_CLASSES = 100, 32, 32, 2, 4

    key = jax.random.PRNGKey(0)
    k_params, k_tok = jax.random.split(key)
    params = init_params(k_params, VOCAB, EMBED, HIDDEN, NUM_LAYERS,
                         NUM_CLASSES)
    tokens = jax.random.randint(k_tok, (B, T), 0, VOCAB)  # "x" of the tuple
    # TODO(synk): the seq_len element of the input tuple is unused by the
    #             reference forward and is therefore not modeled.

    fwd_fn = jax.jit(functools.partial(textrnn_forward, hidden=HIDDEN))
    logits = jax.block_until_ready(fwd_fn(params, tokens))

    ref = jax.block_until_ready(textrnn_ref(params, tokens, HIDDEN))
    assert logits.shape == (B, NUM_CLASSES)
    # bf16 MXU operands / bf16 inter-layer activations (f32 accumulation), so
    # tolerance is wider than an all-f32 implementation.
    err = float(jnp.max(jnp.abs(logits - ref)))
    assert jnp.allclose(logits, ref, rtol=5e-2, atol=5e-2), f"mismatch: {err}"

    print("KERNEL_OK")
</pallas_src>

<mosaic_0001>
module attributes {stable_mosaic.version = 11 : i64} {
  func.func @_textrnn_fused_kernel(%arg0: memref<64x32xbf16, #tpu.memory_space<vmem>>, %arg1: memref<2x32x128xbf16, #tpu.memory_space<vmem>>, %arg2: memref<2x32x128xbf16, #tpu.memory_space<vmem>>, %arg3: memref<2x1x128xf32, #tpu.memory_space<vmem>>, %arg4: memref<2x64x128xbf16, #tpu.memory_space<vmem>>, %arg5: memref<2x32x128xbf16, #tpu.memory_space<vmem>>, %arg6: memref<2x1x128xf32, #tpu.memory_space<vmem>>, %arg7: memref<64x4xf32, #tpu.memory_space<vmem>>, %arg8: memref<1x4xf32, #tpu.memory_space<vmem>>, %arg9: memref<8x4xf32, #tpu.memory_space<vmem>>) attributes {dimension_semantics = [], scalar_prefetch = 0 : i64, scratch_operands = 0 : i64, tpu.core_type = #tpu.core_type<tc>} {
    %c0 = arith.constant 0 : index
    %c0_0 = arith.constant 0 : index
    %0 = vector.load %arg0[%c0, %c0_0] : memref<64x32xbf16, #tpu.memory_space<vmem>>, vector<64x32xbf16>
    %c0_1 = arith.constant 0 : index
    %c0_2 = arith.constant 0 : index
    %c0_3 = arith.constant 0 : index
    %1 = vector.load %arg1[%c0_1, %c0_2, %c0_3] : memref<2x32x128xbf16, #tpu.memory_space<vmem>>, vector<1x32x128xbf16>
    %2 = vector.shape_cast %1 : vector<1x32x128xbf16> to vector<32x128xbf16>
    %c1 = arith.constant 1 : index
    %c0_4 = arith.constant 0 : index
    %c0_5 = arith.constant 0 : index
    %3 = vector.load %arg1[%c1, %c0_4, %c0_5] : memref<2x32x128xbf16, #tpu.memory_space<vmem>>, vector<1x32x128xbf16>
    %4 = vector.shape_cast %3 : vector<1x32x128xbf16> to vector<32x128xbf16>
    %c0_6 = arith.constant 0 : index
    %c0_7 = arith.constant 0 : index
    %c0_8 = arith.constant 0 : index
    %5 = vector.load %arg2[%c0_6, %c0_7, %c0_8] : memref<2x32x128xbf16, #tpu.memory_space<vmem>>, vector<1x32x128xbf16>
    %6 = vector.shape_cast %5 : vector<1x32x128xbf16> to vector<32x128xbf16>
    %c1_9 = arith.constant 1 : index
    %c0_10 = arith.constant 0 : index
    %c0_11 = arith.constant 0 : index
    %7 = vector.load %arg2[%c1_9, %c0_10, %c0_11] : memref<2x32x128xbf16, #tpu.memory_space<vmem>>, vector<1x32x128xbf16>
    %8 = vector.shape_cast %7 : vector<1x32x128xbf16> to vector<32x128xbf16>
    %c0_12 = arith.constant 0 : index
    %c0_13 = arith.constant 0 : index
    %c0_14 = arith.constant 0 : index
    %9 = vector.load %arg3[%c0_12, %c0_13, %c0_14] : memref<2x1x128xf32, #tpu.memory_space<vmem>>, vector<1x1x128xf32>
    %10 = vector.shape_cast %9 : vector<1x1x128xf32> to vector<1x128xf32>
    %c1_15 = arith.constant 1 : index
    %c0_16 = arith.constant 0 : index
    %c0_17 = arith.constant 0 : index
    %11 = vector.load %arg3[%c1_15, %c0_16, %c0_17] : memref<2x1x128xf32, #tpu.memory_space<vmem>>, vector<1x1x128xf32>
    %12 = vector.shape_cast %11 : vector<1x1x128xf32> to vector<1x128xf32>
    %cst = arith.constant dense<0.000000e+00> : vector<64x128xf32>
    %13 = tpu.matmul %0, %2, %cst {dimension_numbers = #tpu.dot_dimension_numbers<[1], [0], [0], [1], [0, 0, 1, 1], [], []>} : vector<64x32xbf16>, vector<32x128xbf16>, vector<64x128xf32> -> vector<64x128xf32>
    %14 = vector.broadcast %10 : vector<1x128xf32> to vector<64x128xf32>
    %15 = arith.addf %13, %14 : vector<64x128xf32>
    %cst_18 = arith.constant dense<0.000000e+00> : vector<64x128xf32>
    %16 = tpu.matmul %0, %4, %cst_18 {dimension_numbers = #tpu.dot_dimension_numbers<[1], [0], [0], [1], [0, 0, 1, 1], [], []>} : vector<64x32xbf16>, vector<32x128xbf16>, vector<64x128xf32> -> vector<64x128xf32>
    %17 = vector.broadcast %12 : vector<1x128xf32> to vector<64x128xf32>
    %18 = arith.addf %16, %17 : vector<64x128xf32>
    %cst_19 = arith.constant 0.000000e+00 : f32
    %19 = vector.broadcast %cst_19 : f32 to vector<8x32xf32>
    %cst_20 = arith.constant 0.000000e+00 : f32
    %20 = vector.broadcast %cst_20 : f32 to vector<8x32xf32>
    %cst_21 = arith.constant 0.000000e+00 : f32
    %21 = vector.broadcast %cst_21 : f32 to vector<8x32xf32>
    %cst_22 = arith.constant 0.000000e+00 : f32
    %22 = vector.broadcast %cst_22 : f32 to vector<8x32xf32>
    %23 = vector.extract_strided_slice %15 {offsets = [0, 0], sizes = [8, 128], strides = [1, 1]} : vector<64x128xf32> to vector<8x128xf32>
    %24 = arith.truncf %19 : vector<8x32xf32> to vector<8x32xbf16>
    %cst_23 = arith.constant dense<0.000000e+00> : vector<8x128xf32>
    %25 = tpu.matmul %24, %6, %cst_23 {dimension_numbers = #tpu.dot_dimension_numbers<[1], [0], [0], [1], [0, 0, 1, 1], [], []>} : vector<8x32xbf16>, vector<32x128xbf16>, vector<8x128xf32> -> vector<8x128xf32>
    %26 = arith.addf %23, %25 : vector<8x128xf32>
    %27 = vector.extract_strided_slice %18 {offsets = [56, 0], sizes = [8, 128], strides = [1, 1]} : vector<64x128xf32> to vector<8x128xf32>
    %28 = arith.truncf %21 : vector<8x32xf32> to vector<8x32xbf16>
    %cst_24 = arith.constant dense<0.000000e+00> : vector<8x128xf32>
    %29 = tpu.matmul %28, %8, %cst_24 {dimension_numbers = #tpu.dot_dimension_numbers<[1], [0], [0], [1], [0, 0, 1, 1], [], []>} : vector<8x32xbf16>, vector<32x128xbf16>, vector<8x128xf32> -> vector<8x128xf32>
    %30 = arith.addf %27, %29 : vector<8x128xf32>
    %31 = arith.negf %26 : vector<8x128xf32>
    %32 = math.exp %31 : vector<8x128xf32>
    %cst_25 = arith.constant 1.000000e+00 : f32
    %33 = vector.broadcast %cst_25 : f32 to vector<8x128xf32>
    %34 = arith.addf %33, %32 : vector<8x128xf32>
    %35 = arith.divf %33, %34 : vector<8x128xf32>
    %36 = math.tanh %26 : vector<8x128xf32>
    %37 = vector.extract_strided_slice %35 {offsets = [0, 0], sizes = [8, 32], strides = [1, 1]} : vector<8x128xf32> to vector<8x32xf32>
    %38 = vector.extract_strided_slice %35 {offsets = [0, 32], sizes = [8, 32], strides = [1, 1]} : vector<8x128xf32> to vector<8x32xf32>
    %39 = vector.extract_strided_slice %36 {offsets = [0, 64], sizes = [8, 32], strides = [1, 1]} : vector<8x128xf32> to vector<8x32xf32>
    %40 = vector.extract_strided_slice %35 {offsets = [0, 96], sizes = [8, 32], strides = [1, 1]} : vector<8x128xf32> to vector<8x32xf32>
    %41 = arith.mulf %38, %20 : vector<8x32xf32>
    %42 = arith.mulf %37, %39 : vector<8x32xf32>
    %43 = arith.addf %41, %42 : vector<8x32xf32>
    %44 = math.tanh %43 : vector<8x32xf32>
    %45 = arith.mulf %40, %44 : vector<8x32xf32>
    %46 = arith.negf %30 : vector<8x128xf32>
    %47 = math.exp %46 : vector<8x128xf32>
    %cst_26 = arith.constant 1.000000e+00 : f32
    %48 = vector.broadcast %cst_26 : f32 to vector<8x128xf32>
    %49 = arith.addf %48, %47 : vector<8x128xf32>
    %50 = arith.divf %48, %49 : vector<8x128xf32>
    %51 = math.tanh %30 : vector<8x128xf32>
    %52 = vector.extract_strided_slice %50 {offsets = [0, 0], sizes = [8, 32], strides = [1, 1]} : vector<8x128xf32> to vector<8x32xf32>
    %53 = vector.extract_strided_slice %50 {offsets = [0, 32], sizes = [8, 32], strides = [1, 1]} : vector<8x128xf32> to vector<8x32xf32>
    %54 = vector.extract_strided_slice %51 {offsets = [0, 64], sizes = [8, 32], strides = [1, 1]} : vector<8x128xf32> to vector<8x32xf32>
    %55 = vector.extract_strided_slice %50 {offsets = [0, 96], sizes = [8, 32], strides = [1, 1]} : vector<8x128xf32> to vector<8x32xf32>
    %56 = arith.mulf %53, %22 : vector<8x32xf32>
    %57 = arith.mulf %52, %54 : vector<8x32xf32>
    %58 = arith.addf %56, %57 : vector<8x32xf32>
    %59 = math.tanh %58 : vector<8x32xf32>
    %60 = arith.mulf %55, %59 : vector<8x32xf32>
    %61 = vector.extract_strided_slice %15 {offsets = [8, 0], sizes = [8, 128], strides = [1, 1]} : vector<64x128xf32> to vector<8x128xf32>
    %62 = arith.truncf %45 : vector<8x32xf32> to vector<8x32xbf16>
    %cst_27 = arith.constant dense<0.000000e+00> : vector<8x128xf32>
    %63 = tpu.matmul %62, %6, %cst_27 {dimension_numbers = #tpu.dot_dimension_numbers<[1], [0], [0], [1], [0, 0, 1, 1], [], []>} : vector<8x32xbf16>, vector<32x128xbf16>, vector<8x128xf32> -> vector<8x128xf32>
    %64 = arith.addf %61, %63 : vector<8x128xf32>
    %65 = vector.extract_strided_slice %18 {offsets = [48, 0], sizes = [8, 128], strides = [1, 1]} : vector<64x128xf32> to vector<8x128xf32>
    %66 = arith.truncf %60 : vector<8x32xf32> to vector<8x32xbf16>
    %cst_28 = arith.constant dense<0.000000e+00> : vector<8x128xf32>
    %67 = tpu.matmul %66, %8, %cst_28 {dimension_numbers = #tpu.dot_dimension_numbers<[1], [0], [0], [1], [0, 0, 1, 1], [], []>} : vector<8x32xbf16>, vector<32x128xbf16>, vector<8x128xf32> -> vector<8x128xf32>
    %68 = arith.addf %65, %67 : vector<8x128xf32>
    %69 = arith.negf %64 : vector<8x128xf32>
    %70 = math.exp %69 : vector<8x128xf32>
    %cst_29 = arith.constant 1.000000e+00 : f32
    %71 = vector.broadcast %cst_29 : f32 to vector<8x128xf32>
    %72 = arith.addf %71, %70 : vector<8x128xf32>
    %73 = arith.divf %71, %72 : vector<8x128xf32>
    %74 = math.tanh %64 : vector<8x128xf32>
    %75 = vector.extract_strided_slice %73 {offsets = [0, 0], sizes = [8, 32], strides = [1, 1]} : vector<8x128xf32> to vector<8x32xf32>
    %76 = vector.extract_strided_slice %73 {offsets = [0, 32], sizes = [8, 32], strides = [1, 1]} : vector<8x128xf32> to vector<8x32xf32>
    %77 = vector.extract_strided_slice %74 {offsets = [0, 64], sizes = [8, 32], strides = [1, 1]} : vector<8x128xf32> to vector<8x32xf32>
    %78 = vector.extract_strided_slice %73 {offsets = [0, 96], sizes = [8, 32], strides = [1, 1]} : vector<8x128xf32> to vector<8x32xf32>
    %79 = arith.mulf %76, %43 : vector<8x32xf32>
    %80 = arith.mulf %75, %77 : vector<8x32xf32>
    %81 = arith.addf %79, %80 : vector<8x32xf32>
    %82 = math.tanh %81 : vector<8x32xf32>
    %83 = arith.mulf %78, %82 : vector<8x32xf32>
    %84 = arith.negf %68 : vector<8x128xf32>
    %85 = math.exp %84 : vector<8x128xf32>
    %cst_30 = arith.constant 1.000000e+00 : f32
    %86 = vector.broadcast %cst_30 : f32 to vector<8x128xf32>
    %87 = arith.addf %86, %85 : vector<8x128xf32>
    %88 = arith.divf %86, %87 : vector<8x128xf32>
    %89 = math.tanh %68 : vector<8x128xf32>
    %90 = vector.extract_strided_slice %88 {offsets = [0, 0], sizes = [8, 32], strides = [1, 1]} : vector<8x128xf32> to vector<8x32xf32>
    %91 = vector.extract_strided_slice %88 {offsets = [0, 32], sizes = [8, 32], strides = [1, 1]} : vector<8x128xf32> to vector<8x32xf32>
    %92 = vector.extract_strided_slice %89 {offsets = [0, 64], sizes = [8, 32], strides = [1, 1]} : vector<8x128xf32> to vector<8x32xf32>
    %93 = vector.extract_strided_slice %88 {offsets = [0, 96], sizes = [8, 32], strides = [1, 1]} : vector<8x128xf32> to vector<8x32xf32>
    %94 = arith.mulf %91, %58 : vector<8x32xf32>
    %95 = arith.mulf %90, %92 : vector<8x32xf32>
    %96 = arith.addf %94, %95 : vector<8x32xf32>
    %97 = math.tanh %96 : vector<8x32xf32>
    %98 = arith.mulf %93, %97 : vector<8x32xf32>
    %99 = vector.extract_strided_slice %15 {offsets = [16, 0], sizes = [8, 128], strides = [1, 1]} : vector<64x128xf32> to vector<8x128xf32>
    %100 = arith.truncf %83 : vector<8x32xf32> to vector<8x32xbf16>
    %cst_31 = arith.constant dense<0.000000e+00> : vector<8x128xf32>
    %101 = tpu.matmul %100, %6, %cst_31 {dimension_numbers = #tpu.dot_dimension_numbers<[1], [0], [0], [1], [0, 0, 1, 1], [], []>} : vector<8x32xbf16>, vector<32x128xbf16>, vector<8x128xf32> -> vector<8x128xf32>
    %102 = arith.addf %99, %101 : vector<8x128xf32>
    %103 = vector.extract_strided_slice %18 {offsets = [40, 0], sizes = [8, 128], strides = [1, 1]} : vector<64x128xf32> to vector<8x128xf32>
    %104 = arith.truncf %98 : vector<8x32xf32> to vector<8x32xbf16>
    %cst_32 = arith.constant dense<0.000000e+00> : vector<8x128xf32>
    %105 = tpu.matmul %104, %8, %cst_32 {dimension_numbers = #tpu.dot_dimension_numbers<[1], [0], [0], [1], [0, 0, 1, 1], [], []>} : vector<8x32xbf16>, vector<32x128xbf16>, vector<8x128xf32> -> vector<8x128xf32>
    %106 = arith.addf %103, %105 : vector<8x128xf32>
    %107 = arith.negf %102 : vector<8x128xf32>
    %108 = math.exp %107 : vector<8x128xf32>
    %cst_33 = arith.constant 1.000000e+00 : f32
    %109 = vector.broadcast %cst_33 : f32 to vector<8x128xf32>
    %110 = arith.addf %109, %108 : vector<8x128xf32>
    %111 = arith.divf %109, %110 : vector<8x128xf32>
    %112 = math.tanh %102 : vector<8x128xf32>
    %113 = vector.extract_strided_slice %111 {offsets = [0, 0], sizes = [8, 32], strides = [1, 1]} : vector<8x128xf32> to vector<8x32xf32>
    %114 = vector.extract_strided_slice %111 {offsets = [0, 32], sizes = [8, 32], strides = [1, 1]} : vector<8x128xf32> to vector<8x32xf32>
    %115 = vector.extract_strided_slice %112 {offsets = [0, 64], sizes = [8, 32], strides = [1, 1]} : vector<8x128xf32> to vector<8x32xf32>
    %116 = vector.extract_strided_slice %111 {offsets = [0, 96], sizes = [8, 32], strides = [1, 1]} : vector<8x128xf32> to vector<8x32xf32>
    %117 = arith.mulf %114, %81 : vector<8x32xf32>
    %118 = arith.mulf %113, %115 : vector<8x32xf32>
    %119 = arith.addf %117, %118 : vector<8x32xf32>
    %120 = math.tanh %119 : vector<8x32xf32>
    %121 = arith.mulf %116, %120 : vector<8x32xf32>
    %122 = arith.negf %106 : vector<8x128xf32>
    %123 = math.exp %122 : vector<8x128xf32>
    %cst_34 = arith.constant 1.000000e+00 : f32
    %124 = vector.broadcast %cst_34 : f32 to vector<8x128xf32>
    %125 = arith.addf %124, %123 : vector<8x128xf32>
    %126 = arith.divf %124, %125 : vector<8x128xf32>
    %127 = math.tanh %106 : vector<8x128xf32>
    %128 = vector.extract_strided_slice %126 {offsets = [0, 0], sizes = [8, 32], strides = [1, 1]} : vector<8x128xf32> to vector<8x32xf32>
    %129 = vector.extract_strided_slice %126 {offsets = [0, 32], sizes = [8, 32], strides = [1, 1]} : vector<8x128xf32> to vector<8x32xf32>
    %130 = vector.extract_strided_slice %127 {offsets = [0, 64], sizes = [8, 32], strides = [1, 1]} : vector<8x128xf32> to vector<8x32xf32>
    %131 = vector.extract_strided_slice %126 {offsets = [0, 96], sizes = [8, 32], strides = [1, 1]} : vector<8x128xf32> to vector<8x32xf32>
    %132 = arith.mulf %129, %96 : vector<8x32xf32>
    %133 = arith.mulf %128, %130 : vector<8x32xf32>
    %134 = arith.addf %132, %133 : vector<8x32xf32>
    %135 = math.tanh %134 : vector<8x32xf32>
    %136 = arith.mulf %131, %135 : vector<8x32xf32>
    %137 = vector.extract_strided_slice %15 {offsets = [24, 0], sizes = [8, 128], strides = [1, 1]} : vector<64x128xf32> to vector<8x128xf32>
    %138 = arith.truncf %121 : vector<8x32xf32> to vector<8x32xbf16>
    %cst_35 = arith.constant dense<0.000000e+00> : vector<8x128xf32>
    %139 = tpu.matmul %138, %6, %cst_35 {dimension_numbers = #tpu.dot_dimension_numbers<[1], [0], [0], [1], [0, 0, 1, 1], [], []>} : vector<8x32xbf16>, vector<32x128xbf16>, vector<8x128xf32> -> vector<8x128xf32>
    %140 = arith.addf %137, %139 : vector<8x128xf32>
    %141 = vector.extract_strided_slice %18 {offsets = [32, 0], sizes = [8, 128], strides = [1, 1]} : vector<64x128xf32> to vector<8x128xf32>
    %142 = arith.truncf %136 : vector<8x32xf32> to vector<8x32xbf16>
    %cst_36 = arith.constant dense<0.000000e+00> : vector<8x128xf32>
    %143 = tpu.matmul %142, %8, %cst_36 {dimension_numbers = #tpu.dot_dimension_numbers<[1], [0], [0], [1], [0, 0, 1, 1], [], []>} : vector<8x32xbf16>, vector<32x128xbf16>, vector<8x128xf32> -> vector<8x128xf32>
    %144 = arith.addf %141, %143 : vector<8x128xf32>
    %145 = arith.negf %140 : vector<8x128xf32>
    %146 = math.exp %145 : vector<8x128xf32>
    %cst_37 = arith.constant 1.000000e+00 : f32
    %147 = vector.broadcast %cst_37 : f32 to vector<8x128xf32>
    %148 = arith.addf %147, %146 : vector<8x128xf32>
    %149 = arith.divf %147, %148 : vector<8x128xf32>
    %150 = math.tanh %140 : vector<8x128xf32>
    %151 = vector.extract_strided_slice %149 {offsets = [0, 0], sizes = [8, 32], strides = [1, 1]} : vector<8x128xf32> to vector<8x32xf32>
    %152 = vector.extract_strided_slice %149 {offsets = [0, 32], sizes = [8, 32], strides = [1, 1]} : vector<8x128xf32> to vector<8x32xf32>
    %153 = vector.extract_strided_slice %150 {offsets = [0, 64], sizes = [8, 32], strides = [1, 1]} : vector<8x128xf32> to vector<8x32xf32>
    %154 = vector.extract_strided_slice %149 {offsets = [0, 96], sizes = [8, 32], strides = [1, 1]} : vector<8x128xf32> to vector<8x32xf32>
    %155 = arith.mulf %152, %119 : vector<8x32xf32>
    %156 = arith.mulf %151, %153 : vector<8x32xf32>
    %157 = arith.addf %155, %156 : vector<8x32xf32>
    %158 = math.tanh %157 : vector<8x32xf32>
    %159 = arith.mulf %154, %158 : vector<8x32xf32>
    %160 = arith.negf %144 : vector<8x128xf32>
    %161 = math.exp %160 : vector<8x128xf32>
    %cst_38 = arith.constant 1.000000e+00 : f32
    %162 = vector.broadcast %cst_38 : f32 to vector<8x128xf32>
    %163 = arith.addf %162, %161 : vector<8x128xf32>
    %164 = arith.divf %162, %163 : vector<8x128xf32>
    %165 = math.tanh %144 : vector<8x128xf32>
    %166 = vector.extract_strided_slice %164 {offsets = [0, 0], sizes = [8, 32], strides = [1, 1]} : vector<8x128xf32> to vector<8x32xf32>
    %167 = vector.extract_strided_slice %164 {offsets = [0, 32], sizes = [8, 32], strides = [1, 1]} : vector<8x128xf32> to vector<8x32xf32>
    %168 = vector.extract_strided_slice %165 {offsets = [0, 64], sizes = [8, 32], strides = [1, 1]} : vector<8x128xf32> to vector<8x32xf32>
    %169 = vector.extract_strided_slice %164 {offsets = [0, 96], sizes = [8, 32], strides = [1, 1]} : vector<8x128xf32> to vector<8x32xf32>
    %170 = arith.mulf %167, %134 : vector<8x32xf32>
    %171 = arith.mulf %166, %168 : vector<8x32xf32>
    %172 = arith.addf %170, %171 : vector<8x32xf32>
    %173 = math.tanh %172 : vector<8x32xf32>
    %174 = arith.mulf %169, %173 : vector<8x32xf32>
    %175 = vector.extract_strided_slice %15 {offsets = [32, 0], sizes = [8, 128], strides = [1, 1]} : vector<64x128xf32> to vector<8x128xf32>
    %176 = arith.truncf %159 : vector<8x32xf32> to vector<8x32xbf16>
    %cst_39 = arith.constant dense<0.000000e+00> : vector<8x128xf32>
    %177 = tpu.matmul %176, %6, %cst_39 {dimension_numbers = #tpu.dot_dimension_numbers<[1], [0], [0], [1], [0, 0, 1, 1], [], []>} : vector<8x32xbf16>, vector<32x128xbf16>, vector<8x128xf32> -> vector<8x128xf32>
    %178 = arith.addf %175, %177 : vector<8x128xf32>
    %179 = vector.extract_strided_slice %18 {offsets = [24, 0], sizes = [8, 128], strides = [1, 1]} : vector<64x128xf32> to vector<8x128xf32>
    %180 = arith.truncf %174 : vector<8x32xf32> to vector<8x32xbf16>
    %cst_40 = arith.constant dense<0.000000e+00> : vector<8x128xf32>
    %181 = tpu.matmul %180, %8, %cst_40 {dimension_numbers = #tpu.dot_dimension_numbers<[1], [0], [0], [1], [0, 0, 1, 1], [], []>} : vector<8x32xbf16>, vector<32x128xbf16>, vector<8x128xf32> -> vector<8x128xf32>
    %182 = arith.addf %179, %181 : vector<8x128xf32>
    %183 = arith.negf %178 : vector<8x128xf32>
    %184 = math.exp %183 : vector<8x128xf32>
    %cst_41 = arith.constant 1.000000e+00 : f32
    %185 = vector.broadcast %cst_41 : f32 to vector<8x128xf32>
    %186 = arith.addf %185, %184 : vector<8x128xf32>
    %187 = arith.divf %185, %186 : vector<8x128xf32>
    %188 = math.tanh %178 : vector<8x128xf32>
    %189 = vector.extract_strided_slice %187 {offsets = [0, 0], sizes = [8, 32], strides = [1, 1]} : vector<8x128xf32> to vector<8x32xf32>
    %190 = vector.extract_strided_slice %187 {offsets = [0, 32], sizes = [8, 32], strides = [1, 1]} : vector<8x128xf32> to vector<8x32xf32>
    %191 = vector.extract_strided_slice %188 {offsets = [0, 64], sizes = [8, 32], strides = [1, 1]} : vector<8x128xf32> to vector<8x32xf32>
    %192 = vector.extract_strided_slice %187 {offsets = [0, 96], sizes = [8, 32], strides = [1, 1]} : vector<8x128xf32> to vector<8x32xf32>
    %193 = arith.mulf %190, %157 : vector<8x32xf32>
    %194 = arith.mulf %189, %191 : vector<8x32xf32>
    %195 = arith.addf %193, %194 : vector<8x32xf32>
    %196 = math.tanh %195 : vector<8x32xf32>
    %197 = arith.mulf %192, %196 : vector<8x32xf32>
    %198 = arith.negf %182 : vector<8x128xf32>
    %199 = math.exp %198 : vector<8x128xf32>
    %cst_42 = arith.constant 1.000000e+00 : f32
    %200 = vector.broadcast %cst_42 : f32 to vector<8x128xf32>
    %201 = arith.addf %200, %199 : vector<8x128xf32>
    %202 = arith.divf %200, %201 : vector<8x128xf32>
    %203 = math.tanh %182 : vector<8x128xf32>
    %204 = vector.extract_strided_slice %202 {offsets = [0, 0], sizes = [8, 32], strides = [1, 1]} : vector<8x128xf32> to vector<8x32xf32>
    %205 = vector.extract_strided_slice %202 {offsets = [0, 32], sizes = [8, 32], strides = [1, 1]} : vector<8x128xf32> to vector<8x32xf32>
    %206 = vector.extract_strided_slice %203 {offsets = [0, 64], sizes = [8, 32], strides = [1, 1]} : vector<8x128xf32> to vector<8x32xf32>
    %207 = vector.extract_strided_slice %202 {offsets = [0, 96], sizes = [8, 32], strides = [1, 1]} : vector<8x128xf32> to vector<8x32xf32>
    %208 = arith.mulf %205, %172 : vector<8x32xf32>
    %209 = arith.mulf %204, %206 : vector<8x32xf32>
    %210 = arith.addf %208, %209 : vector<8x32xf32>
    %211 = math.tanh %210 : vector<8x32xf32>
    %212 = arith.mulf %207, %211 : vector<8x32xf32>
    %213 = vector.extract_strided_slice %15 {offsets = [40, 0], sizes = [8, 128], strides = [1, 1]} : vector<64x128xf32> to vector<8x128xf32>
    %214 = arith.truncf %197 : vector<8x32xf32> to vector<8x32xbf16>
    %cst_43 = arith.constant dense<0.000000e+00> : vector<8x128xf32>
    %215 = tpu.matmul %214, %6, %cst_43 {dimension_numbers = #tpu.dot_dimension_numbers<[1], [0], [0], [1], [0, 0, 1, 1], [], []>} : vector<8x32xbf16>, vector<32x128xbf16>, vector<8x128xf32> -> vector<8x128xf32>
    %216 = arith.addf %213, %215 : vector<8x128xf32>
    %217 = vector.extract_strided_slice %18 {offsets = [16, 0], sizes = [8, 128], strides = [1, 1]} : vector<64x128xf32> to vector<8x128xf32>
    %218 = arith.truncf %212 : vector<8x32xf32> to vector<8x32xbf16>
    %cst_44 = arith.constant dense<0.000000e+00> : vector<8x128xf32>
    %219 = tpu.matmul %218, %8, %cst_44 {dimension_numbers = #tpu.dot_dimension_numbers<[1], [0], [0], [1], [0, 0, 1, 1], [], []>} : vector<8x32xbf16>, vector<32x128xbf16>, vector<8x128xf32> -> vector<8x128xf32>
    %220 = arith.addf %217, %219 : vector<8x128xf32>
    %221 = arith.negf %216 : vector<8x128xf32>
    %222 = math.exp %221 : vector<8x128xf32>
    %cst_45 = arith.constant 1.000000e+00 : f32
    %223 = vector.broadcast %cst_45 : f32 to vector<8x128xf32>
    %224 = arith.addf %223, %222 : vector<8x128xf32>
    %225 = arith.divf %223, %224 : vector<8x128xf32>
    %226 = math.tanh %216 : vector<8x128xf32>
    %227 = vector.extract_strided_slice %225 {offsets = [0, 0], sizes = [8, 32], strides = [1, 1]} : vector<8x128xf32> to vector<8x32xf32>
    %228 = vector.extract_strided_slice %225 {offsets = [0, 32], sizes = [8, 32], strides = [1, 1]} : vector<8x128xf32> to vector<8x32xf32>
    %229 = vector.extract_strided_slice %226 {offsets = [0, 64], sizes = [8, 32], strides = [1, 1]} : vector<8x128xf32> to vector<8x32xf32>
    %230 = vector.extract_strided_slice %225 {offsets = [0, 96], sizes = [8, 32], strides = [1, 1]} : vector<8x128xf32> to vector<8x32xf32>
    %231 = arith.mulf %228, %195 : vector<8x32xf32>
    %232 = arith.mulf %227, %229 : vector<8x32xf32>
    %233 = arith.addf %231, %232 : vector<8x32xf32>
    %234 = math.tanh %233 : vector<8x32xf32>
    %235 = arith.mulf %230, %234 : vector<8x32xf32>
    %236 = arith.negf %220 : vector<8x128xf32>
    %237 = math.exp %236 : vector<8x128xf32>
    %cst_46 = arith.constant 1.000000e+00 : f32
    %238 = vector.broadcast %cst_46 : f32 to vector<8x128xf32>
    %239 = arith.addf %238, %237 : vector<8x128xf32>
    %240 = arith.divf %238, %239 : vector<8x128xf32>
    %241 = math.tanh %220 : vector<8x128xf32>
    %242 = vector.extract_strided_slice %240 {offsets = [0, 0], sizes = [8, 32], strides = [1, 1]} : vector<8x128xf32> to vector<8x32xf32>
    %243 = vector.extract_strided_slice %240 {offsets = [0, 32], sizes = [8, 32], strides = [1, 1]} : vector<8x128xf32> to vector<8x32xf32>
    %244 = vector.extract_strided_slice %241 {offsets = [0, 64], sizes = [8, 32], strides = [1, 1]} : vector<8x128xf32> to vector<8x32xf32>
    %245 = vector.extract_strided_slice %240 {offsets = [0, 96], sizes = [8, 32], strides = [1, 1]} : vector<8x128xf32> to vector<8x32xf32>
    %246 = arith.mulf %243, %210 : vector<8x32xf32>
    %247 = arith.mulf %242, %244 : vector<8x32xf32>
    %248 = arith.addf %246, %247 : vector<8x32xf32>
    %249 = math.tanh %248 : vector<8x32xf32>
    %250 = arith.mulf %245, %249 : vector<8x32xf32>
    %251 = vector.extract_strided_slice %15 {offsets = [48, 0], sizes = [8, 128], strides = [1, 1]} : vector<64x128xf32> to vector<8x128xf32>
    %252 = arith.truncf %235 : vector<8x32xf32> to vector<8x32xbf16>
    %cst_47 = arith.constant dense<0.000000e+00> : vector<8x128xf32>
    %253 = tpu.matmul %252, %6, %cst_47 {dimension_numbers = #tpu.dot_dimension_numbers<[1], [0], [0], [1], [0, 0, 1, 1], [], []>} : vector<8x32xbf16>, vector<32x128xbf16>, vector<8x128xf32> -> vector<8x128xf32>
    %254 = arith.addf %251, %253 : vector<8x128xf32>
    %255 = vector.extract_strided_slice %18 {offsets = [8, 0], sizes = [8, 128], strides = [1, 1]} : vector<64x128xf32> to vector<8x128xf32>
    %256 = arith.truncf %250 : vector<8x32xf32> to vector<8x32xbf16>
    %cst_48 = arith.constant dense<0.000000e+00> : vector<8x128xf32>
    %257 = tpu.matmul %256, %8, %cst_48 {dimension_numbers = #tpu.dot_dimension_numbers<[1], [0], [0], [1], [0, 0, 1, 1], [], []>} : vector<8x32xbf16>, vector<32x128xbf16>, vector<8x128xf32> -> vector<8x128xf32>
    %258 = arith.addf %255, %257 : vector<8x128xf32>
    %259 = arith.negf %254 : vector<8x128xf32>
    %260 = math.exp %259 : vector<8x128xf32>
    %cst_49 = arith.constant 1.000000e+00 : f32
    %261 = vector.broadcast %cst_49 : f32 to vector<8x128xf32>
    %262 = arith.addf %261, %260 : vector<8x128xf32>
    %263 = arith.divf %261, %262 : vector<8x128xf32>
    %264 = math.tanh %254 : vector<8x128xf32>
    %265 = vector.extract_strided_slice %263 {offsets = [0, 0], sizes = [8, 32], strides = [1, 1]} : vector<8x128xf32> to vector<8x32xf32>
    %266 = vector.extract_strided_slice %263 {offsets = [0, 32], sizes = [8, 32], strides = [1, 1]} : vector<8x128xf32> to vector<8x32xf32>
    %267 = vector.extract_strided_slice %264 {offsets = [0, 64], sizes = [8, 32], strides = [1, 1]} : vector<8x128xf32> to vector<8x32xf32>
    %268 = vector.extract_strided_slice %263 {offsets = [0, 96], sizes = [8, 32], strides = [1, 1]} : vector<8x128xf32> to vector<8x32xf32>
    %269 = arith.mulf %266, %233 : vector<8x32xf32>
    %270 = arith.mulf %265, %267 : vector<8x32xf32>
    %271 = arith.addf %269, %270 : vector<8x32xf32>
    %272 = math.tanh %271 : vector<8x32xf32>
    %273 = arith.mulf %268, %272 : vector<8x32xf32>
    %274 = arith.negf %258 : vector<8x128xf32>
    %275 = math.exp %274 : vector<8x128xf32>
    %cst_50 = arith.constant 1.000000e+00 : f32
    %276 = vector.broadcast %cst_50 : f32 to vector<8x128xf32>
    %277 = arith.addf %276, %275 : vector<8x128xf32>
    %278 = arith.divf %276, %277 : vector<8x128xf32>
    %279 = math.tanh %258 : vector<8x128xf32>
    %280 = vector.extract_strided_slice %278 {offsets = [0, 0], sizes = [8, 32], strides = [1, 1]} : vector<8x128xf32> to vector<8x32xf32>
    %281 = vector.extract_strided_slice %278 {offsets = [0, 32], sizes = [8, 32], strides = [1, 1]} : vector<8x128xf32> to vector<8x32xf32>
    %282 = vector.extract_strided_slice %279 {offsets = [0, 64], sizes = [8, 32], strides = [1, 1]} : vector<8x128xf32> to vector<8x32xf32>
    %283 = vector.extract_strided_slice %278 {offsets = [0, 96], sizes = [8, 32], strides = [1, 1]} : vector<8x128xf32> to vector<8x32xf32>
    %284 = arith.mulf %281, %248 : vector<8x32xf32>
    %285 = arith.mulf %280, %282 : vector<8x32xf32>
    %286 = arith.addf %284, %285 : vector<8x32xf32>
    %287 = math.tanh %286 : vector<8x32xf32>
    %288 = arith.mulf %283, %287 : vector<8x32xf32>
    %289 = vector.extract_strided_slice %15 {offsets = [56, 0], sizes = [8, 128], strides = [1, 1]} : vector<64x128xf32> to vector<8x128xf32>
    %290 = arith.truncf %273 : vector<8x32xf32> to vector<8x32xbf16>
    %cst_51 = arith.constant dense<0.000000e+00> : vector<8x128xf32>
    %291 = tpu.matmul %290, %6, %cst_51 {dimension_numbers = #tpu.dot_dimension_numbers<[1], [0], [0], [1], [0, 0, 1, 1], [], []>} : vector<8x32xbf16>, vector<32x128xbf16>, vector<8x128xf32> -> vector<8x128xf32>
    %292 = arith.addf %289, %291 : vector<8x128xf32>
    %293 = vector.extract_strided_slice %18 {offsets = [0, 0], sizes = [8, 128], strides = [1, 1]} : vector<64x128xf32> to vector<8x128xf32>
    %294 = arith.truncf %288 : vector<8x32xf32> to vector<8x32xbf16>
    %cst_52 = arith.constant dense<0.000000e+00> : vector<8x128xf32>
    %295 = tpu.matmul %294, %8, %cst_52 {dimension_numbers = #tpu.dot_dimension_numbers<[1], [0], [0], [1], [0, 0, 1, 1], [], []>} : vector<8x32xbf16>, vector<32x128xbf16>, vector<8x128xf32> -> vector<8x128xf32>
    %296 = arith.addf %293, %295 : vector<8x128xf32>
    %297 = arith.negf %292 : vector<8x128xf32>
    %298 = math.exp %297 : vector<8x128xf32>
    %cst_53 = arith.constant 1.000000e+00 : f32
    %299 = vector.broadcast %cst_53 : f32 to vector<8x128xf32>
    %300 = arith.addf %299, %298 : vector<8x128xf32>
    %301 = arith.divf %299, %300 : vector<8x128xf32>
    %302 = math.tanh %292 : vector<8x128xf32>
    %303 = vector.extract_strided_slice %301 {offsets = [0, 0], sizes = [8, 32], strides = [1, 1]} : vector<8x128xf32> to vector<8x32xf32>
    %304 = vector.extract_strided_slice %301 {offsets = [0, 32], sizes = [8, 32], strides = [1, 1]} : vector<8x128xf32> to vector<8x32xf32>
    %305 = vector.extract_strided_slice %302 {offsets = [0, 64], sizes = [8, 32], strides = [1, 1]} : vector<8x128xf32> to vector<8x32xf32>
    %306 = vector.extract_strided_slice %301 {offsets = [0, 96], sizes = [8, 32], strides = [1, 1]} : vector<8x128xf32> to vector<8x32xf32>
    %307 = arith.mulf %304, %271 : vector<8x32xf32>
    %308 = arith.mulf %303, %305 : vector<8x32xf32>
    %309 = arith.addf %307, %308 : vector<8x32xf32>
    %310 = math.tanh %309 : vector<8x32xf32>
    %311 = arith.mulf %306, %310 : vector<8x32xf32>
    %312 = arith.negf %296 : vector<8x128xf32>
    %313 = math.exp %312 : vector<8x128xf32>
    %cst_54 = arith.constant 1.000000e+00 : f32
    %314 = vector.broadcast %cst_54 : f32 to vector<8x128xf32>
    %315 = arith.addf %314, %313 : vector<8x128xf32>
    %316 = arith.divf %314, %315 : vector<8x128xf32>
    %317 = math.tanh %296 : vector<8x128xf32>
    %318 = vector.extract_strided_slice %316 {offsets = [0, 0], sizes = [8, 32], strides = [1, 1]} : vector<8x128xf32> to vector<8x32xf32>
    %319 = vector.extract_strided_slice %316 {offsets = [0, 32], sizes = [8, 32], strides = [1, 1]} : vector<8x128xf32> to vector<8x32xf32>
    %320 = vector.extract_strided_slice %317 {offsets = [0, 64], sizes = [8, 32], strides = [1, 1]} : vector<8x128xf32> to vector<8x32xf32>
    %321 = vector.extract_strided_slice %316 {offsets = [0, 96], sizes = [8, 32], strides = [1, 1]} : vector<8x128xf32> to vector<8x32xf32>
    %322 = arith.mulf %319, %286 : vector<8x32xf32>
    %323 = arith.mulf %318, %320 : vector<8x32xf32>
    %324 = arith.addf %322, %323 : vector<8x32xf32>
    %325 = math.tanh %324 : vector<8x32xf32>
    %326 = arith.mulf %321, %325 : vector<8x32xf32>
    %327 = tpu.concatenate %45, %83, %121, %159, %197, %235, %273, %311 in 0 : vector<8x32xf32>, vector<8x32xf32>, vector<8x32xf32>, vector<8x32xf32>, vector<8x32xf32>, vector<8x32xf32>, vector<8x32xf32>, vector<8x32xf32> -> vector<64x32xf32>
    %328 = tpu.concatenate %326, %288, %250, %212, %174, %136, %98, %60 in 0 : vector<8x32xf32>, vector<8x32xf32>, vector<8x32xf32>, vector<8x32xf32>, vector<8x32xf32>, vector<8x32xf32>, vector<8x32xf32>, vector<8x32xf32> -> vector<64x32xf32>
    %329 = tpu.concatenate %327, %328 in 1 : vector<64x32xf32>, vector<64x32xf32> -> vector<64x64xf32>
    %330 = arith.truncf %329 : vector<64x64xf32> to vector<64x64xbf16>
    %c0_55 = arith.constant 0 : index
    %c0_56 = arith.constant 0 : index
    %c0_57 = arith.constant 0 : index
    %331 = vector.load %arg4[%c0_55, %c0_56, %c0_57] : memref<2x64x128xbf16, #tpu.memory_space<vmem>>, vector<1x64x128xbf16>
    %332 = vector.shape_cast %331 : vector<1x64x128xbf16> to vector<64x128xbf16>
    %c1_58 = arith.constant 1 : index
    %c0_59 = arith.constant 0 : index
    %c0_60 = arith.constant 0 : index
    %333 = vector.load %arg4[%c1_58, %c0_59, %c0_60] : memref<2x64x128xbf16, #tpu.memory_space<vmem>>, vector<1x64x128xbf16>
    %334 = vector.shape_cast %333 : vector<1x64x128xbf16> to vector<64x128xbf16>
    %c0_61 = arith.constant 0 : index
    %c0_62 = arith.constant 0 : index
    %c0_63 = arith.constant 0 : index
    %335 = vector.load %arg5[%c0_61, %c0_62, %c0_63] : memref<2x32x128xbf16, #tpu.memory_space<vmem>>, vector<1x32x128xbf16>
    %336 = vector.shape_cast %335 : vector<1x32x128xbf16> to vector<32x128xbf16>
    %c0_64 = arith.constant 0 : index
    %c0_65 = arith.constant 0 : index
    %c0_66 = arith.constant 0 : index
    %337 = vector.load %arg6[%c0_64, %c0_65, %c0_66] : memref<2x1x128xf32, #tpu.memory_space<vmem>>, vector<1x1x128xf32>
    %338 = vector.shape_cast %337 : vector<1x1x128xf32> to vector<1x128xf32>
    %c1_67 = arith.constant 1 : index
    %c0_68 = arith.constant 0 : index
    %c0_69 = arith.constant 0 : index
    %339 = vector.load %arg6[%c1_67, %c0_68, %c0_69] : memref<2x1x128xf32, #tpu.memory_space<vmem>>, vector<1x1x128xf32>
    %340 = vector.shape_cast %339 : vector<1x1x128xf32> to vector<1x128xf32>
    %cst_70 = arith.constant dense<0.000000e+00> : vector<64x128xf32>
    %341 = tpu.matmul %330, %332, %cst_70 {dimension_numbers = #tpu.dot_dimension_numbers<[1], [0], [0], [1], [0, 0, 1, 1], [], []>} : vector<64x64xbf16>, vector<64x128xbf16>, vector<64x128xf32> -> vector<64x128xf32>
    %342 = vector.broadcast %338 : vector<1x128xf32> to vector<64x128xf32>
    %343 = arith.addf %341, %342 : vector<64x128xf32>
    %344 = vector.extract_strided_slice %330 {offsets = [56, 0], sizes = [8, 64], strides = [1, 1]} : vector<64x64xbf16> to vector<8x64xbf16>
    %cst_71 = arith.constant dense<0.000000e+00> : vector<8x128xf32>
    %345 = tpu.matmul %344, %334, %cst_71 {dimension_numbers = #tpu.dot_dimension_numbers<[1], [0], [0], [1], [0, 0, 1, 1], [], []>} : vector<8x64xbf16>, vector<64x128xbf16>, vector<8x128xf32> -> vector<8x128xf32>
    %346 = vector.broadcast %340 : vector<1x128xf32> to vector<8x128xf32>
    %347 = arith.addf %345, %346 : vector<8x128xf32>
    %cst_72 = arith.constant 0.000000e+00 : f32
    %348 = vector.broadcast %cst_72 : f32 to vector<8x32xf32>
    %cst_73 = arith.constant 0.000000e+00 : f32
    %349 = vector.broadcast %cst_73 : f32 to vector<8x32xf32>
    %350 = vector.extract_strided_slice %343 {offsets = [0, 0], sizes = [8, 128], strides = [1, 1]} : vector<64x128xf32> to vector<8x128xf32>
    %351 = arith.truncf %348 : vector<8x32xf32> to vector<8x32xbf16>
    %cst_74 = arith.constant dense<0.000000e+00> : vector<8x128xf32>
    %352 = tpu.matmul %351, %336, %cst_74 {dimension_numbers = #tpu.dot_dimension_numbers<[1], [0], [0], [1], [0, 0, 1, 1], [], []>} : vector<8x32xbf16>, vector<32x128xbf16>, vector<8x128xf32> -> vector<8x128xf32>
    %353 = arith.addf %350, %352 : vector<8x128xf32>
    %354 = arith.negf %353 : vector<8x128xf32>
    %355 = math.exp %354 : vector<8x128xf32>
    %cst_75 = arith.constant 1.000000e+00 : f32
    %356 = vector.broadcast %cst_75 : f32 to vector<8x128xf32>
    %357 = arith.addf %356, %355 : vector<8x128xf32>
    %358 = arith.divf %356, %357 : vector<8x128xf32>
    %359 = math.tanh %353 : vector<8x128xf32>
    %360 = vector.extract_strided_slice %358 {offsets = [0, 0], sizes = [8, 32], strides = [1, 1]} : vector<8x128xf32> to vector<8x32xf32>
    %361 = vector.extract_strided_slice %358 {offsets = [0, 32], sizes = [8, 32], strides = [1, 1]} : vector<8x128xf32> to vector<8x32xf32>
    %362 = vector.extract_strided_slice %359 {offsets = [0, 64], sizes = [8, 32], strides = [1, 1]} : vector<8x128xf32> to vector<8x32xf32>
    %363 = vector.extract_strided_slice %358 {offsets = [0, 96], sizes = [8, 32], strides = [1, 1]} : vector<8x128xf32> to vector<8x32xf32>
    %364 = arith.mulf %361, %349 : vector<8x32xf32>
    %365 = arith.mulf %360, %362 : vector<8x32xf32>
    %366 = arith.addf %364, %365 : vector<8x32xf32>
    %367 = math.tanh %366 : vector<8x32xf32>
    %368 = arith.mulf %363, %367 : vector<8x32xf32>
    %369 = vector.extract_strided_slice %343 {offsets = [8, 0], sizes = [8, 128], strides = [1, 1]} : vector<64x128xf32> to vector<8x128xf32>
    %370 = arith.truncf %368 : vector<8x32xf32> to vector<8x32xbf16>
    %cst_76 = arith.constant dense<0.000000e+00> : vector<8x128xf32>
    %371 = tpu.matmul %370, %336, %cst_76 {dimension_numbers = #tpu.dot_dimension_numbers<[1], [0], [0], [1], [0, 0, 1, 1], [], []>} : vector<8x32xbf16>, vector<32x128xbf16>, vector<8x128xf32> -> vector<8x128xf32>
    %372 = arith.addf %369, %371 : vector<8x128xf32>
    %373 = arith.negf %372 : vector<8x128xf32>
    %374 = math.exp %373 : vector<8x128xf32>
    %cst_77 = arith.constant 1.000000e+00 : f32
    %375 = vector.broadcast %cst_77 : f32 to vector<8x128xf32>
    %376 = arith.addf %375, %374 : vector<8x128xf32>
    %377 = arith.divf %375, %376 : vector<8x128xf32>
    %378 = math.tanh %372 : vector<8x128xf32>
    %379 = vector.extract_strided_slice %377 {offsets = [0, 0], sizes = [8, 32], strides = [1, 1]} : vector<8x128xf32> to vector<8x32xf32>
    %380 = vector.extract_strided_slice %377 {offsets = [0, 32], sizes = [8, 32], strides = [1, 1]} : vector<8x128xf32> to vector<8x32xf32>
    %381 = vector.extract_strided_slice %378 {offsets = [0, 64], sizes = [8, 32], strides = [1, 1]} : vector<8x128xf32> to vector<8x32xf32>
    %382 = vector.extract_strided_slice %377 {offsets = [0, 96], sizes = [8, 32], strides = [1, 1]} : vector<8x128xf32> to vector<8x32xf32>
    %383 = arith.mulf %380, %366 : vector<8x32xf32>
    %384 = arith.mulf %379, %381 : vector<8x32xf32>
    %385 = arith.addf %383, %384 : vector<8x32xf32>
    %386 = math.tanh %385 : vector<8x32xf32>
    %387 = arith.mulf %382, %386 : vector<8x32xf32>
    %388 = vector.extract_strided_slice %343 {offsets = [16, 0], sizes = [8, 128], strides = [1, 1]} : vector<64x128xf32> to vector<8x128xf32>
    %389 = arith.truncf %387 : vector<8x32xf32> to vector<8x32xbf16>
    %cst_78 = arith.constant dense<0.000000e+00> : vector<8x128xf32>
    %390 = tpu.matmul %389, %336, %cst_78 {dimension_numbers = #tpu.dot_dimension_numbers<[1], [0], [0], [1], [0, 0, 1, 1], [], []>} : vector<8x32xbf16>, vector<32x128xbf16>, vector<8x128xf32> -> vector<8x128xf32>
    %391 = arith.addf %388, %390 : vector<8x128xf32>
    %392 = arith.negf %391 : vector<8x128xf32>
    %393 = math.exp %392 : vector<8x128xf32>
    %cst_79 = arith.constant 1.000000e+00 : f32
    %394 = vector.broadcast %cst_79 : f32 to vector<8x128xf32>
    %395 = arith.addf %394, %393 : vector<8x128xf32>
    %396 = arith.divf %394, %395 : vector<8x128xf32>
    %397 = math.tanh %391 : vector<8x128xf32>
    %398 = vector.extract_strided_slice %396 {offsets = [0, 0], sizes = [8, 32], strides = [1, 1]} : vector<8x128xf32> to vector<8x32xf32>
    %399 = vector.extract_strided_slice %396 {offsets = [0, 32], sizes = [8, 32], strides = [1, 1]} : vector<8x128xf32> to vector<8x32xf32>
    %400 = vector.extract_strided_slice %397 {offsets = [0, 64], sizes = [8, 32], strides = [1, 1]} : vector<8x128xf32> to vector<8x32xf32>
    %401 = vector.extract_strided_slice %396 {offsets = [0, 96], sizes = [8, 32], strides = [1, 1]} : vector<8x128xf32> to vector<8x32xf32>
    %402 = arith.mulf %399, %385 : vector<8x32xf32>
    %403 = arith.mulf %398, %400 : vector<8x32xf32>
    %404 = arith.addf %402, %403 : vector<8x32xf32>
    %405 = math.tanh %404 : vector<8x32xf32>
    %406 = arith.mulf %401, %405 : vector<8x32xf32>
    %407 = vector.extract_strided_slice %343 {offsets = [24, 0], sizes = [8, 128], strides = [1, 1]} : vector<64x128xf32> to vector<8x128xf32>
    %408 = arith.truncf %406 : vector<8x32xf32> to vector<8x32xbf16>
    %cst_80 = arith.constant dense<0.000000e+00> : vector<8x128xf32>
    %409 = tpu.matmul %408, %336, %cst_80 {dimension_numbers = #tpu.dot_dimension_numbers<[1], [0], [0], [1], [0, 0, 1, 1], [], []>} : vector<8x32xbf16>, vector<32x128xbf16>, vector<8x128xf32> -> vector<8x128xf32>
    %410 = arith.addf %407, %409 : vector<8x128xf32>
    %411 = arith.negf %410 : vector<8x128xf32>
    %412 = math.exp %411 : vector<8x128xf32>
    %cst_81 = arith.constant 1.000000e+00 : f32
    %413 = vector.broadcast %cst_81 : f32 to vector<8x128xf32>
    %414 = arith.addf %413, %412 : vector<8x128xf32>
    %415 = arith.divf %413, %414 : vector<8x128xf32>
    %416 = math.tanh %410 : vector<8x128xf32>
    %417 = vector.extract_strided_slice %415 {offsets = [0, 0], sizes = [8, 32], strides = [1, 1]} : vector<8x128xf32> to vector<8x32xf32>
    %418 = vector.extract_strided_slice %415 {offsets = [0, 32], sizes = [8, 32], strides = [1, 1]} : vector<8x128xf32> to vector<8x32xf32>
    %419 = vector.extract_strided_slice %416 {offsets = [0, 64], sizes = [8, 32], strides = [1, 1]} : vector<8x128xf32> to vector<8x32xf32>
    %420 = vector.extract_strided_slice %415 {offsets = [0, 96], sizes = [8, 32], strides = [1, 1]} : vector<8x128xf32> to vector<8x32xf32>
    %421 = arith.mulf %418, %404 : vector<8x32xf32>
    %422 = arith.mulf %417, %419 : vector<8x32xf32>
    %423 = arith.addf %421, %422 : vector<8x32xf32>
    %424 = math.tanh %423 : vector<8x32xf32>
    %425 = arith.mulf %420, %424 : vector<8x32xf32>
    %426 = vector.extract_strided_slice %343 {offsets = [32, 0], sizes = [8, 128], strides = [1, 1]} : vector<64x128xf32> to vector<8x128xf32>
    %427 = arith.truncf %425 : vector<8x32xf32> to vector<8x32xbf16>
    %cst_82 = arith.constant dense<0.000000e+00> : vector<8x128xf32>
    %428 = tpu.matmul %427, %336, %cst_82 {dimension_numbers = #tpu.dot_dimension_numbers<[1], [0], [0], [1], [0, 0, 1, 1], [], []>} : vector<8x32xbf16>, vector<32x128xbf16>, vector<8x128xf32> -> vector<8x128xf32>
    %429 = arith.addf %426, %428 : vector<8x128xf32>
    %430 = arith.negf %429 : vector<8x128xf32>
    %431 = math.exp %430 : vector<8x128xf32>
    %cst_83 = arith.constant 1.000000e+00 : f32
    %432 = vector.broadcast %cst_83 : f32 to vector<8x128xf32>
    %433 = arith.addf %432, %431 : vector<8x128xf32>
    %434 = arith.divf %432, %433 : vector<8x128xf32>
    %435 = math.tanh %429 : vector<8x128xf32>
    %436 = vector.extract_strided_slice %434 {offsets = [0, 0], sizes = [8, 32], strides = [1, 1]} : vector<8x128xf32> to vector<8x32xf32>
    %437 = vector.extract_strided_slice %434 {offsets = [0, 32], sizes = [8, 32], strides = [1, 1]} : vector<8x128xf32> to vector<8x32xf32>
    %438 = vector.extract_strided_slice %435 {offsets = [0, 64], sizes = [8, 32], strides = [1, 1]} : vector<8x128xf32> to vector<8x32xf32>
    %439 = vector.extract_strided_slice %434 {offsets = [0, 96], sizes = [8, 32], strides = [1, 1]} : vector<8x128xf32> to vector<8x32xf32>
    %440 = arith.mulf %437, %423 : vector<8x32xf32>
    %441 = arith.mulf %436, %438 : vector<8x32xf32>
    %442 = arith.addf %440, %441 : vector<8x32xf32>
    %443 = math.tanh %442 : vector<8x32xf32>
    %444 = arith.mulf %439, %443 : vector<8x32xf32>
    %445 = vector.extract_strided_slice %343 {offsets = [40, 0], sizes = [8, 128], strides = [1, 1]} : vector<64x128xf32> to vector<8x128xf32>
    %446 = arith.truncf %444 : vector<8x32xf32> to vector<8x32xbf16>
    %cst_84 = arith.constant dense<0.000000e+00> : vector<8x128xf32>
    %447 = tpu.matmul %446, %336, %cst_84 {dimension_numbers = #tpu.dot_dimension_numbers<[1], [0], [0], [1], [0, 0, 1, 1], [], []>} : vector<8x32xbf16>, vector<32x128xbf16>, vector<8x128xf32> -> vector<8x128xf32>
    %448 = arith.addf %445, %447 : vector<8x128xf32>
    %449 = arith.negf %448 : vector<8x128xf32>
    %450 = math.exp %449 : vector<8x128xf32>
    %cst_85 = arith.constant 1.000000e+00 : f32
    %451 = vector.broadcast %cst_85 : f32 to vector<8x128xf32>
    %452 = arith.addf %451, %450 : vector<8x128xf32>
    %453 = arith.divf %451, %452 : vector<8x128xf32>
    %454 = math.tanh %448 : vector<8x128xf32>
    %455 = vector.extract_strided_slice %453 {offsets = [0, 0], sizes = [8, 32], strides = [1, 1]} : vector<8x128xf32> to vector<8x32xf32>
    %456 = vector.extract_strided_slice %453 {offsets = [0, 32], sizes = [8, 32], strides = [1, 1]} : vector<8x128xf32> to vector<8x32xf32>
    %457 = vector.extract_strided_slice %454 {offsets = [0, 64], sizes = [8, 32], strides = [1, 1]} : vector<8x128xf32> to vector<8x32xf32>
    %458 = vector.extract_strided_slice %453 {offsets = [0, 96], sizes = [8, 32], strides = [1, 1]} : vector<8x128xf32> to vector<8x32xf32>
    %459 = arith.mulf %456, %442 : vector<8x32xf32>
    %460 = arith.mulf %455, %457 : vector<8x32xf32>
    %461 = arith.addf %459, %460 : vector<8x32xf32>
    %462 = math.tanh %461 : vector<8x32xf32>
    %463 = arith.mulf %458, %462 : vector<8x32xf32>
    %464 = vector.extract_strided_slice %343 {offsets = [48, 0], sizes = [8, 128], strides = [1, 1]} : vector<64x128xf32> to vector<8x128xf32>
    %465 = arith.truncf %463 : vector<8x32xf32> to vector<8x32xbf16>
    %cst_86 = arith.constant dense<0.000000e+00> : vector<8x128xf32>
    %466 = tpu.matmul %465, %336, %cst_86 {dimension_numbers = #tpu.dot_dimension_numbers<[1], [0], [0], [1], [0, 0, 1, 1], [], []>} : vector<8x32xbf16>, vector<32x128xbf16>, vector<8x128xf32> -> vector<8x128xf32>
    %467 = arith.addf %464, %466 : vector<8x128xf32>
    %468 = arith.negf %467 : vector<8x128xf32>
    %469 = math.exp %468 : vector<8x128xf32>
    %cst_87 = arith.constant 1.000000e+00 : f32
    %470 = vector.broadcast %cst_87 : f32 to vector<8x128xf32>
    %471 = arith.addf %470, %469 : vector<8x128xf32>
    %472 = arith.divf %470, %471 : vector<8x128xf32>
    %473 = math.tanh %467 : vector<8x128xf32>
    %474 = vector.extract_strided_slice %472 {offsets = [0, 0], sizes = [8, 32], strides = [1, 1]} : vector<8x128xf32> to vector<8x32xf32>
    %475 = vector.extract_strided_slice %472 {offsets = [0, 32], sizes = [8, 32], strides = [1, 1]} : vector<8x128xf32> to vector<8x32xf32>
    %476 = vector.extract_strided_slice %473 {offsets = [0, 64], sizes = [8, 32], strides = [1, 1]} : vector<8x128xf32> to vector<8x32xf32>
    %477 = vector.extract_strided_slice %472 {offsets = [0, 96], sizes = [8, 32], strides = [1, 1]} : vector<8x128xf32> to vector<8x32xf32>
    %478 = arith.mulf %475, %461 : vector<8x32xf32>
    %479 = arith.mulf %474, %476 : vector<8x32xf32>
    %480 = arith.addf %478, %479 : vector<8x32xf32>
    %481 = math.tanh %480 : vector<8x32xf32>
    %482 = arith.mulf %477, %481 : vector<8x32xf32>
    %483 = vector.extract_strided_slice %343 {offsets = [56, 0], sizes = [8, 128], strides = [1, 1]} : vector<64x128xf32> to vector<8x128xf32>
    %484 = arith.truncf %482 : vector<8x32xf32> to vector<8x32xbf16>
    %cst_88 = arith.constant dense<0.000000e+00> : vector<8x128xf32>
    %485 = tpu.matmul %484, %336, %cst_88 {dimension_numbers = #tpu.dot_dimension_numbers<[1], [0], [0], [1], [0, 0, 1, 1], [], []>} : vector<8x32xbf16>, vector<32x128xbf16>, vector<8x128xf32> -> vector<8x128xf32>
    %486 = arith.addf %483, %485 : vector<8x128xf32>
    %487 = arith.negf %486 : vector<8x128xf32>
    %488 = math.exp %487 : vector<8x128xf32>
    %cst_89 = arith.constant 1.000000e+00 : f32
    %489 = vector.broadcast %cst_89 : f32 to vector<8x128xf32>
    %490 = arith.addf %489, %488 : vector<8x128xf32>
    %491 = arith.divf %489, %490 : vector<8x128xf32>
    %492 = math.tanh %486 : vector<8x128xf32>
    %493 = vector.extract_strided_slice %491 {offsets = [0, 0], sizes = [8, 32], strides = [1, 1]} : vector<8x128xf32> to vector<8x32xf32>
    %494 = vector.extract_strided_slice %491 {offsets = [0, 32], sizes = [8, 32], strides = [1, 1]} : vector<8x128xf32> to vector<8x32xf32>
    %495 = vector.extract_strided_slice %492 {offsets = [0, 64], sizes = [8, 32], strides = [1, 1]} : vector<8x128xf32> to vector<8x32xf32>
    %496 = vector.extract_strided_slice %491 {offsets = [0, 96], sizes = [8, 32], strides = [1, 1]} : vector<8x128xf32> to vector<8x32xf32>
    %497 = arith.mulf %494, %480 : vector<8x32xf32>
    %498 = arith.mulf %493, %495 : vector<8x32xf32>
    %499 = arith.addf %497, %498 : vector<8x32xf32>
    %500 = math.tanh %499 : vector<8x32xf32>
    %501 = arith.mulf %496, %500 : vector<8x32xf32>
    %502 = arith.negf %347 : vector<8x128xf32>
    %503 = math.exp %502 : vector<8x128xf32>
    %cst_90 = arith.constant 1.000000e+00 : f32
    %504 = vector.broadcast %cst_90 : f32 to vector<8x128xf32>
    %505 = arith.addf %504, %503 : vector<8x128xf32>
    %506 = arith.divf %504, %505 : vector<8x128xf32>
    %507 = math.tanh %347 : vector<8x128xf32>
    %508 = vector.extract_strided_slice %506 {offsets = [0, 0], sizes = [8, 32], strides = [1, 1]} : vector<8x128xf32> to vector<8x32xf32>
    %509 = vector.extract_strided_slice %507 {offsets = [0, 64], sizes = [8, 32], strides = [1, 1]} : vector<8x128xf32> to vector<8x32xf32>
    %510 = vector.extract_strided_slice %506 {offsets = [0, 96], sizes = [8, 32], strides = [1, 1]} : vector<8x128xf32> to vector<8x32xf32>
    %511 = arith.mulf %508, %509 : vector<8x32xf32>
    %512 = math.tanh %511 : vector<8x32xf32>
    %513 = arith.mulf %510, %512 : vector<8x32xf32>
    %c0_91 = arith.constant 0 : index
    %c0_92 = arith.constant 0 : index
    %514 = vector.load %arg7[%c0_91, %c0_92] : memref<64x4xf32, #tpu.memory_space<vmem>>, vector<32x4xf32>
    %cst_93 = arith.constant dense<0.000000e+00> : vector<8x4xf32>
    %515 = tpu.matmul %501, %514, %cst_93 {dimension_numbers = #tpu.dot_dimension_numbers<[1], [0], [0], [1], [0, 0, 1, 1], [], []>} : vector<8x32xf32>, vector<32x4xf32>, vector<8x4xf32> -> vector<8x4xf32>
    %c32 = arith.constant 32 : index
    %c0_94 = arith.constant 0 : index
    %516 = vector.load %arg7[%c32, %c0_94] : memref<64x4xf32, #tpu.memory_space<vmem>>, vector<32x4xf32>
    %cst_95 = arith.constant dense<0.000000e+00> : vector<8x4xf32>
    %517 = tpu.matmul %513, %516, %cst_95 {dimension_numbers = #tpu.dot_dimension_numbers<[1], [0], [0], [1], [0, 0, 1, 1], [], []>} : vector<8x32xf32>, vector<32x4xf32>, vector<8x4xf32> -> vector<8x4xf32>
    %518 = arith.addf %515, %517 : vector<8x4xf32>
    %c0_96 = arith.constant 0 : index
    %c0_97 = arith.constant 0 : index
    %519 = vector.load %arg8[%c0_96, %c0_97] : memref<1x4xf32, #tpu.memory_space<vmem>>, vector<1x4xf32>
    %520 = vector.broadcast %519 : vector<1x4xf32> to vector<8x4xf32>
    %521 = arith.addf %518, %520 : vector<8x4xf32>
    %c0_98 = arith.constant 0 : index
    %c0_99 = arith.constant 0 : index
    %522 = vector.load %arg9[%c0_98, %c0_99] : memref<8x4xf32, #tpu.memory_space<vmem>>, vector<8x4xf32>
    tpu.vector_store %arg9[%c0_98, %c0_99], %521 {strides = array<i32>} : memref<8x4xf32, #tpu.memory_space<vmem>>, vector<8x4xf32>,
    return
  }
}

</mosaic_0001>

<llo_original>
// kernel: textrnn_forward.1
$region0: #{textrnn_forward.1}
  #allocation0 [shape = 'u32[]', space=smem, size = 0x4, offset = 0x4, fixed_abs, tag = 'smem constant byte address 0x4 - core index']
  #allocation1 [shape = 'u32[144,128]{1,0:T(1,128)}', space=vmem, size = 0x12000, scoped, tag = 'internal scratch']
  %s0 = inlined_call_operand.vmem [shape: bf16[64,32], index: 0, kind: input, shape index: {}]
  %s1 = inlined_call_operand.vmem [shape: bf16[2,32,128], index: 1, kind: input, shape index: {}]
  %s2 = inlined_call_operand.vmem [shape: bf16[2,32,128], index: 2, kind: input, shape index: {}]
  %s3 = inlined_call_operand.vmem [shape: f32[2,1,128], index: 3, kind: input, shape index: {}]
  %s4 = inlined_call_operand.vmem [shape: bf16[2,64,128], index: 4, kind: input, shape index: {}]
  %s5 = inlined_call_operand.vmem [shape: bf16[2,32,128], index: 5, kind: input, shape index: {}]
  %s6 = inlined_call_operand.vmem [shape: f32[2,1,128], index: 6, kind: input, shape index: {}]
  %s7 = inlined_call_operand.vmem [shape: f32[64,4], index: 7, kind: input, shape index: {}]
  %s8 = inlined_call_operand.vmem [shape: f32[1,4], index: 8, kind: input, shape index: {}]
  %s9 = inlined_call_operand.vmem [shape: f32[8,4], index: 9, kind: output, shape index: {}]
  %s10 = sld [smem:[#allocation0]]
  $region46: #{textrnn_forward.1} parent=0
    _
  %s12 = ssub.s32 1, %s10
  %s13 = scalar_select 0, %s12, %s10
  // Predicated region
  $region2: #{textrnn_forward.1} parent=0 // pred_check
    _
  $region3: #{textrnn_forward.1} parent=0 // pred_check_branch
    %15 = sbr.rel (0) target = $region5
  $region4: #{textrnn_forward.1} parent=0 // pred_region
    _
  $region5: #{textrnn_forward.1} parent=0 // pred_fallthru
    _
  // Predicated region
  $region6: #{textrnn_forward.1} parent=0 // pred_check
    _
  $region7: #{textrnn_forward.1} parent=0 // pred_check_branch
    %17 = sbr.rel (0) target = $region9
  $region8: #{textrnn_forward.1} parent=0 // pred_region
    _
  $region9: #{textrnn_forward.1} parent=0 // pred_fallthru
    _
  // Predicated region
  $region10: #{textrnn_forward.1} parent=0 // pred_check
    _
  $region11: #{textrnn_forward.1} parent=0 // pred_check_branch
    %19 = sbr.rel (0) target = $region13
  $region12: #{textrnn_forward.1} parent=0 // pred_region
    _
  $region13: #{textrnn_forward.1} parent=0 // pred_fallthru
    _
  // Predicated region
  $region14: #{textrnn_forward.1} parent=0 // pred_check
    _
  $region15: #{textrnn_forward.1} parent=0 // pred_check_branch
    %21 = sbr.rel (0) target = $region17
  $region16: #{textrnn_forward.1} parent=0 // pred_region
    _
  $region17: #{textrnn_forward.1} parent=0 // pred_fallthru
    _
  // Predicated region
  $region18: #{textrnn_forward.1} parent=0 // pred_check
    _
  $region19: #{textrnn_forward.1} parent=0 // pred_check_branch
    %23 = sbr.rel (0) target = $region21
  $region20: #{textrnn_forward.1} parent=0 // pred_region
    _
  $region21: #{textrnn_forward.1} parent=0 // pred_fallthru
    _
  // Predicated region
  $region22: #{textrnn_forward.1} parent=0 // pred_check
    _
  $region23: #{textrnn_forward.1} parent=0 // pred_check_branch
    %25 = sbr.rel (0) target = $region25
  $region24: #{textrnn_forward.1} parent=0 // pred_region
    _
  $region25: #{textrnn_forward.1} parent=0 // pred_fallthru
    _
  // Predicated region
  $region26: #{textrnn_forward.1} parent=0 // pred_check
    _
  $region27: #{textrnn_forward.1} parent=0 // pred_check_branch
    %27 = sbr.rel (0) target = $region29
  $region28: #{textrnn_forward.1} parent=0 // pred_region
    _
  $region29: #{textrnn_forward.1} parent=0 // pred_fallthru
    _
  // Predicated region
  $region30: #{textrnn_forward.1} parent=0 // pred_check
    _
  $region31: #{textrnn_forward.1} parent=0 // pred_check_branch
    %29 = sbr.rel (0) target = $region33
  $region32: #{textrnn_forward.1} parent=0 // pred_region
    _
  $region33: #{textrnn_forward.1} parent=0 // pred_fallthru
    _
  // Predicated region
  $region34: #{textrnn_forward.1} parent=0 // pred_check
    _
  $region35: #{textrnn_forward.1} parent=0 // pred_check_branch
    %31 = sbr.rel (0) target = $region37
  $region36: #{textrnn_forward.1} parent=0 // pred_region
    _
  $region37: #{textrnn_forward.1} parent=0 // pred_fallthru
    _
  %v33 = vld [vmem:[%s0] sm:$0xf]
  %v34 = vld [vmem:[%s0 + $0x4] sm:$0xf]
  %v35 = vld [vmem:[%s0 + $0x8] sm:$0xf]
  %v36 = vld [vmem:[%s0 + $0xc] sm:$0xf]
  %v37 = vld [vmem:[%s0 + $0x10] sm:$0xf]
  %v38 = vld [vmem:[%s0 + $0x14] sm:$0xf]
  %v39 = vld [vmem:[%s0 + $0x18] sm:$0xf]
  %v40 = vld [vmem:[%s0 + $0x1c] sm:$0xf]
  %v41 = vld [vmem:[%s1] sm:$0xf]
  %v42 = vld [vmem:[%s1 + $0x4] sm:$0xf]
  %v43 = vld [vmem:[%s1 + $0x8] sm:$0xf]
  %v44 = vld [vmem:[%s1 + $0xc] sm:$0xf]
  %s45 = scalar_lea.vmem %s1, 16
  %v46 = vld [vmem:[%s45] sm:$0xf]
  %v47 = vld [vmem:[%s45 + $0x4] sm:$0xf]
  %v48 = vld [vmem:[%s45 + $0x8] sm:$0xf]
  %v49 = vld [vmem:[%s45 + $0xc] sm:$0xf]
  %v50 = vld [vmem:[%s2] sm:$0xf]
  %v51 = vld [vmem:[%s2 + $0x4] sm:$0xf]
  %v52 = vld [vmem:[%s2 + $0x8] sm:$0xf]
  %v53 = vld [vmem:[%s2 + $0xc] sm:$0xf]
  %s54 = scalar_lea.vmem %s2, 16
  %v55 = vld [vmem:[%s54] sm:$0xf]
  %v56 = vld [vmem:[%s54 + $0x4] sm:$0xf]
  %v57 = vld [vmem:[%s54 + $0x8] sm:$0xf]
  %v58 = vld [vmem:[%s54 + $0xc] sm:$0xf]
  %v59 = vld [vmem:[%s3] sm:$0x1]
  %s60 = scalar_lea.vmem %s3, 1
  %v61 = vld [vmem:[%s60] sm:$0x1]
  %v63 = vlaneseq
  %v64 = vshrl.u32 %v63, 7
  %v65 = vsub.s32 0, %v64
  %v66 = vrot.slane %v59, %v65
  %v76 = vunpack.c.l.b16 %v33
  %v77 = vunpack.c.l.b16 %v34
  %v78 = vunpack.c.l.b16 %v35
  %v79 = vunpack.c.l.b16 %v36
  %v80 = vunpack.c.l.b16 %v37
  %v81 = vunpack.c.l.b16 %v38
  %v82 = vunpack.c.l.b16 %v39
  %v83 = vunpack.c.l.b16 %v40
  %v84 = vpack.c.b16 %v77, %v76
  %v85 = vpack.c.b16 %v79, %v78
  %v86 = vpack.c.b16 %v81, %v80
  %v87 = vpack.c.b16 %v83, %v82
  %v92 = vunpack.c.l.b16 %v41
  %v93 = vunpack.c.l.b16 %v42
  %v94 = vunpack.c.l.b16 %v43
  %v95 = vunpack.c.l.b16 %v44
  %v96 = vpack.c.b16 %v93, %v92
  %v97 = vpack.c.b16 %v95, %v94
  %vm100 = vcmask 261120
  %v102 = vsel %vm100, %v84, 0
  %v105 = vsel %vm100, %v85, 0
  %v108 = vsel %vm100, %v86, 0
  %v111 = vsel %vm100, %v87, 0
  %113 = vmatprep.subr.bf16.mxu0 0
  %114 = vmatpush1.bf16.msra.mxu0 %v96
  %115 = vmatprep.subr.bf16.mxu0 0
  %116 = vmatpush1.bf16.msra.mxu0 %v97
  %117 = vmatprep.subr.bf16.mxu0 0
  %118 = vmatpush1.bf16.msra.mxu0 0
  %119 = vmatprep.subr.bf16.mxu0 0
  %120 = vmatpush1.bf16.msra.mxu0 0
  %121 = vmatprep.subr.bf16.mxu0 0
  %122 = vmatpush1.bf16.msra.mxu0 0
  %123 = vmatprep.subr.bf16.mxu0 0
  %124 = vmatpush1.bf16.msra.mxu0 0
  %125 = vmatprep.subr.bf16.mxu0 0
  %126 = vmatpush1.bf16.msra.mxu0 0
  %127 = vmatprep.subr.bf16.mxu0 0
  %128 = vmatpush1.bf16.msra.mxu0 0
  %129 = vmatprep.subr.bf16.mxu0 0
  %130 = vmatpush1.bf16.msra.mxu0 0
  %131 = vmatprep.subr.bf16.mxu0 0
  %132 = vmatpush1.bf16.msra.mxu0 0
  %133 = vmatprep.subr.bf16.mxu0 0
  %134 = vmatpush1.bf16.msra.mxu0 0
  %135 = vmatprep.subr.bf16.mxu0 0
  %136 = vmatpush1.bf16.msra.mxu0 0
  %137 = vmatprep.subr.bf16.mxu0 0
  %138 = vmatpush1.bf16.msra.mxu0 0
  %139 = vmatprep.subr.bf16.mxu0 0
  %140 = vmatpush1.bf16.msra.mxu0 0
  %141 = vmatprep.subr.bf16.mxu0 0
  %142 = vmatpush1.bf16.msra.mxu0 0
  %143 = vmatprep.subr.bf16.mxu0 0
  %144 = vmatpush1.bf16.msra.mxu0 0
  %145 = vmatprep.mubr.bf16.mxu0 0
  %146 = vmatmul.mubr.bf16.gmra.mrb[0].mxu0 %v102
  %v147 = vpop.f32.mrb[0].mxu0
  %v148 = vadd.f32 %v66, %v147
  %v149 = vpop.f32.mrb[0].mxu0
  %v150 = vpop.f32.mrb[0].mxu0
  %v151 = vadd.f32 %v66, %v150
  %v152 = vpop.f32.mrb[0].mxu0
  %153 = vmatprep.mubr.bf16.mxu0 0
  %154 = vmatmul.mubr.bf16.gmra.mrb[0].mxu0 %v105
  %v155 = vpop.f32.mrb[0].mxu0
  %v156 = vadd.f32 %v66, %v155
  %v157 = vpop.f32.mrb[0].mxu0
  %v158 = vpop.f32.mrb[0].mxu0
  %v159 = vadd.f32 %v66, %v158
  %v160 = vpop.f32.mrb[0].mxu0
  %161 = vmatprep.mubr.bf16.mxu0 0
  %162 = vmatmul.mubr.bf16.gmra.mrb[0].mxu0 %v108
  %v163 = vpop.f32.mrb[0].mxu0
  %v164 = vadd.f32 %v66, %v163
  %v165 = vpop.f32.mrb[0].mxu0
  %v166 = vpop.f32.mrb[0].mxu0
  %v167 = vadd.f32 %v66, %v166
  %v168 = vpop.f32.mrb[0].mxu0
  %169 = vmatprep.mubr.bf16.mxu0 0
  %170 = vmatmul.mubr.bf16.gmra.mrb[0].mxu0 %v111
  %v171 = vpop.f32.mrb[0].mxu0
  %v172 = vadd.f32 %v66, %v171
  %v173 = vpop.f32.mrb[0].mxu0
  %v174 = vpop.f32.mrb[0].mxu0
  %v175 = vadd.f32 %v66, %v174
  %v176 = vpop.f32.mrb[0].mxu0
  %177 = vdwg.mxu0
  %v179 = vlaneseq
  %v180 = vshrl.u32 %v179, 7
  %v181 = vsub.s32 0, %v180
  %v182 = vrot.slane %v61, %v181
  %v188 = vunpack.c.l.b16 %v46
  %v189 = vunpack.c.l.b16 %v47
  %v190 = vunpack.c.l.b16 %v48
  %v191 = vunpack.c.l.b16 %v49
  %v192 = vpack.c.b16 %v189, %v188
  %v193 = vpack.c.b16 %v191, %v190
  %196 = vmatprep.subr.bf16.mxu0 0
  %197 = vmatpush1.bf16.msra.mxu0 %v192
  %198 = vmatprep.subr.bf16.mxu0 0
  %199 = vmatpush1.bf16.msra.mxu0 %v193
  %200 = vmatprep.subr.bf16.mxu0 0
  %201 = vmatpush1.bf16.msra.mxu0 0
  %202 = vmatprep.subr.bf16.mxu0 0
  %203 = vmatpush1.bf16.msra.mxu0 0
  %204 = vmatprep.subr.bf16.mxu0 0
  %205 = vmatpush1.bf16.msra.mxu0 0
  %206 = vmatprep.subr.bf16.mxu0 0
  %207 = vmatpush1.bf16.msra.mxu0 0
  %208 = vmatprep.subr.bf16.mxu0 0
  %209 = vmatpush1.bf16.msra.mxu0 0
  %210 = vmatprep.subr.bf16.mxu0 0
  %211 = vmatpush1.bf16.msra.mxu0 0
  %212 = vmatprep.subr.bf16.mxu0 0
  %213 = vmatpush1.bf16.msra.mxu0 0
  %214 = vmatprep.subr.bf16.mxu0 0
  %215 = vmatpush1.bf16.msra.mxu0 0
  %216 = vmatprep.subr.bf16.mxu0 0
  %217 = vmatpush1.bf16.msra.mxu0 0
  %218 = vmatprep.subr.bf16.mxu0 0
  %219 = vmatpush1.bf16.msra.mxu0 0
  %220 = vmatprep.subr.bf16.mxu0 0
  %221 = vmatpush1.bf16.msra.mxu0 0
  %222 = vmatprep.subr.bf16.mxu0 0
  %223 = vmatpush1.bf16.msra.mxu0 0
  %224 = vmatprep.subr.bf16.mxu0 0
  %225 = vmatpush1.bf16.msra.mxu0 0
  %226 = vmatprep.subr.bf16.mxu0 0
  %227 = vmatpush1.bf16.msra.mxu0 0
  %228 = vmatprep.mubr.bf16.mxu0 0
  %229 = vmatmul.mubr.bf16.gmra.mrb[0].mxu0 %v102
  %v230 = vpop.f32.mrb[0].mxu0
  %v231 = vadd.f32 %v182, %v230
  %v232 = vpop.f32.mrb[0].mxu0
  %v233 = vpop.f32.mrb[0].mxu0
  %v234 = vadd.f32 %v182, %v233
  %v235 = vpop.f32.mrb[0].mxu0
  %236 = vmatprep.mubr.bf16.mxu0 0
  %237 = vmatmul.mubr.bf16.gmra.mrb[0].mxu0 %v105
  %v238 = vpop.f32.mrb[0].mxu0
  %v239 = vadd.f32 %v182, %v238
  %v240 = vpop.f32.mrb[0].mxu0
  %v241 = vpop.f32.mrb[0].mxu0
  %v242 = vadd.f32 %v182, %v241
  %v243 = vpop.f32.mrb[0].mxu0
  %244 = vmatprep.mubr.bf16.mxu0 0
  %245 = vmatmul.mubr.bf16.gmra.mrb[0].mxu0 %v108
  %v246 = vpop.f32.mrb[0].mxu0
  %v247 = vadd.f32 %v182, %v246
  %v248 = vpop.f32.mrb[0].mxu0
  %v249 = vpop.f32.mrb[0].mxu0
  %v250 = vadd.f32 %v182, %v249
  %v251 = vpop.f32.mrb[0].mxu0
  %252 = vmatprep.mubr.bf16.mxu0 0
  %253 = vmatmul.mubr.bf16.gmra.mrb[0].mxu0 %v111
  %v254 = vpop.f32.mrb[0].mxu0
  %v255 = vadd.f32 %v182, %v254
  %v256 = vpop.f32.mrb[0].mxu0
  %v257 = vpop.f32.mrb[0].mxu0
  %v258 = vadd.f32 %v182, %v257
  %v259 = vpop.f32.mrb[0].mxu0
  %260 = vdwg.mxu0
  %v265 = vunpack.c.l.b16 %v50
  %v266 = vunpack.c.l.b16 %v51
  %v267 = vunpack.c.l.b16 %v52
  %v268 = vunpack.c.l.b16 %v53
  %v269 = vpack.c.b16 %v266, %v265
  %v270 = vpack.c.b16 %v268, %v267
  %v274 = vsel %vm100, 0, 0
  %276 = vmatprep.subr.bf16.mxu0 0
  %277 = vmatpush1.bf16.msra.mxu0 %v269
  %278 = vmatprep.subr.bf16.mxu0 0
  %279 = vmatpush1.bf16.msra.mxu0 %v270
  %280 = vmatprep.subr.bf16.mxu0 0
  %281 = vmatpush1.bf16.msra.mxu0 0
  %282 = vmatprep.subr.bf16.mxu0 0
  %283 = vmatpush1.bf16.msra.mxu0 0
  %284 = vmatprep.subr.bf16.mxu0 0
  %285 = vmatpush1.bf16.msra.mxu0 0
  %286 = vmatprep.subr.bf16.mxu0 0
  %287 = vmatpush1.bf16.msra.mxu0 0
  %288 = vmatprep.subr.bf16.mxu0 0
  %289 = vmatpush1.bf16.msra.mxu0 0
  %290 = vmatprep.subr.bf16.mxu0 0
  %291 = vmatpush1.bf16.msra.mxu0 0
  %292 = vmatprep.subr.bf16.mxu0 0
  %293 = vmatpush1.bf16.msra.mxu0 0
  %294 = vmatprep.subr.bf16.mxu0 0
  %295 = vmatpush1.bf16.msra.mxu0 0
  %296 = vmatprep.subr.bf16.mxu0 0
  %297 = vmatpush1.bf16.msra.mxu0 0
  %298 = vmatprep.subr.bf16.mxu0 0
  %299 = vmatpush1.bf16.msra.mxu0 0
  %300 = vmatprep.subr.bf16.mxu0 0
  %301 = vmatpush1.bf16.msra.mxu0 0
  %302 = vmatprep.subr.bf16.mxu0 0
  %303 = vmatpush1.bf16.msra.mxu0 0
  %304 = vmatprep.subr.bf16.mxu0 0
  %305 = vmatpush1.bf16.msra.mxu0 0
  %306 = vmatprep.subr.bf16.mxu0 0
  %307 = vmatpush1.bf16.msra.mxu0 0
  %308 = vmatprep.mubr.bf16.mxu0 0
  %309 = vmatmul.mubr.bf16.gmra.mrb[0].mxu0 %v274
  %v310 = vpop.f32.mrb[0].mxu0
  %v311 = vadd.f32 0.0, %v310
  %v312 = vpop.f32.mrb[0].mxu0
  %v313 = vpop.f32.mrb[0].mxu0
  %v314 = vpop.f32.mrb[0].mxu0
  %315 = vdwg.mxu0
  %v316 = vadd.f32 %v148, %v311
  %v321 = vunpack.c.l.b16 %v55
  %v322 = vunpack.c.l.b16 %v56
  %v323 = vunpack.c.l.b16 %v57
  %v324 = vunpack.c.l.b16 %v58
  %v325 = vpack.c.b16 %v322, %v321
  %v326 = vpack.c.b16 %v324, %v323
  %329 = vmatprep.subr.bf16.mxu0 0
  %330 = vmatpush1.bf16.msra.mxu0 %v325
  %331 = vmatprep.subr.bf16.mxu0 0
  %332 = vmatpush1.bf16.msra.mxu0 %v326
  %333 = vmatprep.subr.bf16.mxu0 0
  %334 = vmatpush1.bf16.msra.mxu0 0
  %335 = vmatprep.subr.bf16.mxu0 0
  %336 = vmatpush1.bf16.msra.mxu0 0
  %337 = vmatprep.subr.bf16.mxu0 0
  %338 = vmatpush1.bf16.msra.mxu0 0
  %339 = vmatprep.subr.bf16.mxu0 0
  %340 = vmatpush1.bf16.msra.mxu0 0
  %341 = vmatprep.subr.bf16.mxu0 0
  %342 = vmatpush1.bf16.msra.mxu0 0
  %343 = vmatprep.subr.bf16.mxu0 0
  %344 = vmatpush1.bf16.msra.mxu0 0
  %345 = vmatprep.subr.bf16.mxu0 0
  %346 = vmatpush1.bf16.msra.mxu0 0
  %347 = vmatprep.subr.bf16.mxu0 0
  %348 = vmatpush1.bf16.msra.mxu0 0
  %349 = vmatprep.subr.bf16.mxu0 0
  %350 = vmatpush1.bf16.msra.mxu0 0
  %351 = vmatprep.subr.bf16.mxu0 0
  %352 = vmatpush1.bf16.msra.mxu0 0
  %353 = vmatprep.subr.bf16.mxu0 0
  %354 = vmatpush1.bf16.msra.mxu0 0
  %355 = vmatprep.subr.bf16.mxu0 0
  %356 = vmatpush1.bf16.msra.mxu0 0
  %357 = vmatprep.subr.bf16.mxu0 0
  %358 = vmatpush1.bf16.msra.mxu0 0
  %359 = vmatprep.subr.bf16.mxu0 0
  %360 = vmatpush1.bf16.msra.mxu0 0
  %361 = vmatprep.mubr.bf16.mxu0 0
  %362 = vmatmul.mubr.bf16.gmra.mrb[0].mxu0 %v274
  %v363 = vpop.f32.mrb[0].mxu0
  %v364 = vadd.f32 0.0, %v363
  %v365 = vpop.f32.mrb[0].mxu0
  %v366 = vpop.f32.mrb[0].mxu0
  %v367 = vpop.f32.mrb[0].mxu0
  %368 = vdwg.mxu0
  %v369 = vadd.f32 %v258, %v364
  %v370 = vxor.u32 %v316, 2147483648
  %v371 = vmul.f32 %v370, 1.442695
  %v372 = vpow.pop %v371
  %v373 = vadd.f32 %v372, 1.0
  %v374 = vrcp.pop %v373
  %v375 = vmul.f32 1.0, %v374
  %v376 = vtanh.pop %v316
  %v377 = vmul.f32 %v375, 0.0
  %379 = vrot.lane.b32.xlu0 %v376, 64
  %v380 = vpop.permute.xlu0 %379
  %v382 = vmul.f32 %v375, %v380
  %384 = vrot.lane.b32.xlu0 %v382, 32
  %v385 = vpop.permute.xlu0 %384
  %v387 = vadd.f32 %v377, %v385
  %v388 = vtanh.pop %v387
  %390 = vrot.lane.b32.xlu0 %v388, 64
  %v391 = vpop.permute.xlu0 %390
  %v393 = vmul.f32 %v375, %v391
  %v394 = vxor.u32 %v369, 2147483648
  %v395 = vmul.f32 %v394, 1.442695
  %v396 = vpow.pop %v395
  %v397 = vadd.f32 %v396, 1.0
  %v398 = vrcp.pop %v397
  %v399 = vmul.f32 1.0, %v398
  %v400 = vtanh.pop %v369
  %v401 = vmul.f32 %v399, 0.0
  %403 = vrot.lane.b32.xlu0 %v400, 64
  %v404 = vpop.permute.xlu0 %403
  %v406 = vmul.f32 %v399, %v404
  %408 = vrot.lane.b32.xlu0 %v406, 32
  %v409 = vpop.permute.xlu0 %408
  %v411 = vadd.f32 %v401, %v409
  %v412 = vtanh.pop %v411
  %414 = vrot.lane.b32.xlu0 %v412, 64
  %v415 = vpop.permute.xlu0 %414
  %v417 = vmul.f32 %v399, %v415
  %v418 = vpack.c.bf16 %v393, %v393
  %420 = vrot.lane.b32.xlu0 %v418, 32
  %v421 = vpop.permute.xlu0 %420
  %v423 = vsel %vm100, %v421, 0
  %425 = vmatprep.subr.bf16.mxu0 0
  %426 = vmatpush1.bf16.msra.mxu0 %v269
  %427 = vmatprep.subr.bf16.mxu0 0
  %428 = vmatpush1.bf16.msra.mxu0 %v270
  %429 = vmatprep.subr.bf16.mxu0 0
  %430 = vmatpush1.bf16.msra.mxu0 0
  %431 = vmatprep.subr.bf16.mxu0 0
  %432 = vmatpush1.bf16.msra.mxu0 0
  %433 = vmatprep.subr.bf16.mxu0 0
  %434 = vmatpush1.bf16.msra.mxu0 0
  %435 = vmatprep.subr.bf16.mxu0 0
  %436 = vmatpush1.bf16.msra.mxu0 0
  %437 = vmatprep.subr.bf16.mxu0 0
  %438 = vmatpush1.bf16.msra.mxu0 0
  %439 = vmatprep.subr.bf16.mxu0 0
  %440 = vmatpush1.bf16.msra.mxu0 0
  %441 = vmatprep.subr.bf16.mxu0 0
  %442 = vmatpush1.bf16.msra.mxu0 0
  %443 = vmatprep.subr.bf16.mxu0 0
  %444 = vmatpush1.bf16.msra.mxu0 0
  %445 = vmatprep.subr.bf16.mxu0 0
  %446 = vmatpush1.bf16.msra.mxu0 0
  %447 = vmatprep.subr.bf16.mxu0 0
  %448 = vmatpush1.bf16.msra.mxu0 0
  %449 = vmatprep.subr.bf16.mxu0 0
  %450 = vmatpush1.bf16.msra.mxu0 0
  %451 = vmatprep.subr.bf16.mxu0 0
  %452 = vmatpush1.bf16.msra.mxu0 0
  %453 = vmatprep.subr.bf16.mxu0 0
  %454 = vmatpush1.bf16.msra.mxu0 0
  %455 = vmatprep.subr.bf16.mxu0 0
  %456 = vmatpush1.bf16.msra.mxu0 0
  %457 = vmatprep.mubr.bf16.mxu0 0
  %458 = vmatmul.mubr.bf16.gmra.mrb[0].mxu0 %v423
  %v459 = vpop.f32.mrb[0].mxu0
  %v460 = vadd.f32 0.0, %v459
  %v461 = vpop.f32.mrb[0].mxu0
  %v462 = vpop.f32.mrb[0].mxu0
  %v463 = vpop.f32.mrb[0].mxu0
  %464 = vdwg.mxu0
  %v465 = vadd.f32 %v151, %v460
  %v466 = vpack.c.bf16 %v417, %v417
  %468 = vrot.lane.b32.xlu0 %v466, 32
  %v469 = vpop.permute.xlu0 %468
  %v471 = vsel %vm100, %v469, 0
  %473 = vmatprep.subr.bf16.mxu0 0
  %474 = vmatpush1.bf16.msra.mxu0 %v325
  %475 = vmatprep.subr.bf16.mxu0 0
  %476 = vmatpush1.bf16.msra.mxu0 %v326
  %477 = vmatprep.subr.bf16.mxu0 0
  %478 = vmatpush1.bf16.msra.mxu0 0
  %479 = vmatprep.subr.bf16.mxu0 0
  %480 = vmatpush1.bf16.msra.mxu0 0
  %481 = vmatprep.subr.bf16.mxu0 0
  %482 = vmatpush1.bf16.msra.mxu0 0
  %483 = vmatprep.subr.bf16.mxu0 0
  %484 = vmatpush1.bf16.msra.mxu0 0
  %485 = vmatprep.subr.bf16.mxu0 0
  %486 = vmatpush1.bf16.msra.mxu0 0
  %487 = vmatprep.subr.bf16.mxu0 0
  %488 = vmatpush1.bf16.msra.mxu0 0
  %489 = vmatprep.subr.bf16.mxu0 0
  %490 = vmatpush1.bf16.msra.mxu0 0
  %491 = vmatprep.subr.bf16.mxu0 0
  %492 = vmatpush1.bf16.msra.mxu0 0
  %493 = vmatprep.subr.bf16.mxu0 0
  %494 = vmatpush1.bf16.msra.mxu0 0
  %495 = vmatprep.subr.bf16.mxu0 0
  %496 = vmatpush1.bf16.msra.mxu0 0
  %497 = vmatprep.subr.bf16.mxu0 0
  %498 = vmatpush1.bf16.msra.mxu0 0
  %499 = vmatprep.subr.bf16.mxu0 0
  %500 = vmatpush1.bf16.msra.mxu0 0
  %501 = vmatprep.subr.bf16.mxu0 0
  %502 = vmatpush1.bf16.msra.mxu0 0
  %503 = vmatprep.subr.bf16.mxu0 0
  %504 = vmatpush1.bf16.msra.mxu0 0
  %505 = vmatprep.mubr.bf16.mxu0 0
  %506 = vmatmul.mubr.bf16.gmra.mrb[0].mxu0 %v471
  %v507 = vpop.f32.mrb[0].mxu0
  %v508 = vadd.f32 0.0, %v507
  %v509 = vpop.f32.mrb[0].mxu0
  %v510 = vpop.f32.mrb[0].mxu0
  %v511 = vpop.f32.mrb[0].mxu0
  %512 = vdwg.mxu0
  %v513 = vadd.f32 %v255, %v508
  %v514 = vxor.u32 %v465, 2147483648
  %v515 = vmul.f32 %v514, 1.442695
  %v516 = vpow.pop %v515
  %v517 = vadd.f32 %v516, 1.0
  %v518 = vrcp.pop %v517
  %v519 = vmul.f32 1.0, %v518
  %v520 = vtanh.pop %v465
  %v521 = vmul.f32 %v519, %v387
  %523 = vrot.lane.b32.xlu0 %v520, 64
  %v524 = vpop.permute.xlu0 %523
  %v526 = vmul.f32 %v519, %v524
  %528 = vrot.lane.b32.xlu0 %v526, 32
  %v529 = vpop.permute.xlu0 %528
  %v531 = vadd.f32 %v521, %v529
  %v532 = vtanh.pop %v531
  %534 = vrot.lane.b32.xlu0 %v532, 64
  %v535 = vpop.permute.xlu0 %534
  %v537 = vmul.f32 %v519, %v535
  %v538 = vxor.u32 %v513, 2147483648
  %v539 = vmul.f32 %v538, 1.442695
  %v540 = vpow.pop %v539
  %v541 = vadd.f32 %v540, 1.0
  %v542 = vrcp.pop %v541
  %v543 = vmul.f32 1.0, %v542
  %v544 = vtanh.pop %v513
  %v545 = vmul.f32 %v543, %v411
  %547 = vrot.lane.b32.xlu0 %v544, 64
  %v548 = vpop.permute.xlu0 %547
  %v550 = vmul.f32 %v543, %v548
  %552 = vrot.lane.b32.xlu0 %v550, 32
  %v553 = vpop.permute.xlu0 %552
  %v555 = vadd.f32 %v545, %v553
  %v556 = vtanh.pop %v555
  %558 = vrot.lane.b32.xlu0 %v556, 64
  %v559 = vpop.permute.xlu0 %558
  %v561 = vmul.f32 %v543, %v559
  %v562 = vpack.c.bf16 %v537, %v537
  %564 = vrot.lane.b32.xlu0 %v562, 32
  %v565 = vpop.permute.xlu0 %564
  %v567 = vsel %vm100, %v565, 0
  %569 = vmatprep.subr.bf16.mxu0 0
  %570 = vmatpush1.bf16.msra.mxu0 %v269
  %571 = vmatprep.subr.bf16.mxu0 0
  %572 = vmatpush1.bf16.msra.mxu0 %v270
  %573 = vmatprep.subr.bf16.mxu0 0
  %574 = vmatpush1.bf16.msra.mxu0 0
  %575 = vmatprep.subr.bf16.mxu0 0
  %576 = vmatpush1.bf16.msra.mxu0 0
  %577 = vmatprep.subr.bf16.mxu0 0
  %578 = vmatpush1.bf16.msra.mxu0 0
  %579 = vmatprep.subr.bf16.mxu0 0
  %580 = vmatpush1.bf16.msra.mxu0 0
  %581 = vmatprep.subr.bf16.mxu0 0
  %582 = vmatpush1.bf16.msra.mxu0 0
  %583 = vmatprep.subr.bf16.mxu0 0
  %584 = vmatpush1.bf16.msra.mxu0 0
  %585 = vmatprep.subr.bf16.mxu0 0
  %586 = vmatpush1.bf16.msra.mxu0 0
  %587 = vmatprep.subr.bf16.mxu0 0
  %588 = vmatpush1.bf16.msra.mxu0 0
  %589 = vmatprep.subr.bf16.mxu0 0
  %590 = vmatpush1.bf16.msra.mxu0 0
  %591 = vmatprep.subr.bf16.mxu0 0
  %592 = vmatpush1.bf16.msra.mxu0 0
  %593 = vmatprep.subr.bf16.mxu0 0
  %594 = vmatpush1.bf16.msra.mxu0 0
  %595 = vmatprep.subr.bf16.mxu0 0
  %596 = vmatpush1.bf16.msra.mxu0 0
  %597 = vmatprep.subr.bf16.mxu0 0
  %598 = vmatpush1.bf16.msra.mxu0 0
  %599 = vmatprep.subr.bf16.mxu0 0
  %600 = vmatpush1.bf16.msra.mxu0 0
  %601 = vmatprep.mubr.bf16.mxu0 0
  %602 = vmatmul.mubr.bf16.gmra.mrb[0].mxu0 %v567
  %v603 = vpop.f32.mrb[0].mxu0
  %v604 = vadd.f32 0.0, %v603
  %v605 = vpop.f32.mrb[0].mxu0
  %v606 = vpop.f32.mrb[0].mxu0
  %v607 = vpop.f32.mrb[0].mxu0
  %608 = vdwg.mxu0
  %v609 = vadd.f32 %v156, %v604
  %v610 = vpack.c.bf16 %v561, %v561
  %612 = vrot.lane.b32.xlu0 %v610, 32
  %v613 = vpop.permute.xlu0 %612
  %v615 = vsel %vm100, %v613, 0
  %617 = vmatprep.subr.bf16.mxu0 0
  %618 = vmatpush1.bf16.msra.mxu0 %v325
  %619 = vmatprep.subr.bf16.mxu0 0
  %620 = vmatpush1.bf16.msra.mxu0 %v326
  %621 = vmatprep.subr.bf16.mxu0 0
  %622 = vmatpush1.bf16.msra.mxu0 0
  %623 = vmatprep.subr.bf16.mxu0 0
  %624 = vmatpush1.bf16.msra.mxu0 0
  %625 = vmatprep.subr.bf16.mxu0 0
  %626 = vmatpush1.bf16.msra.mxu0 0
  %627 = vmatprep.subr.bf16.mxu0 0
  %628 = vmatpush1.bf16.msra.mxu0 0
  %629 = vmatprep.subr.bf16.mxu0 0
  %630 = vmatpush1.bf16.msra.mxu0 0
  %631 = vmatprep.subr.bf16.mxu0 0
  %632 = vmatpush1.bf16.msra.mxu0 0
  %633 = vmatprep.subr.bf16.mxu0 0
  %634 = vmatpush1.bf16.msra.mxu0 0
  %635 = vmatprep.subr.bf16.mxu0 0
  %636 = vmatpush1.bf16.msra.mxu0 0
  %637 = vmatprep.subr.bf16.mxu0 0
  %638 = vmatpush1.bf16.msra.mxu0 0
  %639 = vmatprep.subr.bf16.mxu0 0
  %640 = vmatpush1.bf16.msra.mxu0 0
  %641 = vmatprep.subr.bf16.mxu0 0
  %642 = vmatpush1.bf16.msra.mxu0 0
  %643 = vmatprep.subr.bf16.mxu0 0
  %644 = vmatpush1.bf16.msra.mxu0 0
  %645 = vmatprep.subr.bf16.mxu0 0
  %646 = vmatpush1.bf16.msra.mxu0 0
  %647 = vmatprep.subr.bf16.mxu0 0
  %648 = vmatpush1.bf16.msra.mxu0 0
  %649 = vmatprep.mubr.bf16.mxu0 0
  %650 = vmatmul.mubr.bf16.gmra.mrb[0].mxu0 %v615
  %v651 = vpop.f32.mrb[0].mxu0
  %v652 = vadd.f32 0.0, %v651
  %v653 = vpop.f32.mrb[0].mxu0
  %v654 = vpop.f32.mrb[0].mxu0
  %v655 = vpop.f32.mrb[0].mxu0
  %656 = vdwg.mxu0
  %v657 = vadd.f32 %v250, %v652
  %v658 = vxor.u32 %v609, 2147483648
  %v659 = vmul.f32 %v658, 1.442695
  %v660 = vpow.pop %v659
  %v661 = vadd.f32 %v660, 1.0
  %v662 = vrcp.pop %v661
  %v663 = vmul.f32 1.0, %v662
  %v664 = vtanh.pop %v609
  %v665 = vmul.f32 %v663, %v531
  %667 = vrot.lane.b32.xlu0 %v664, 64
  %v668 = vpop.permute.xlu0 %667
  %v670 = vmul.f32 %v663, %v668
  %672 = vrot.lane.b32.xlu0 %v670, 32
  %v673 = vpop.permute.xlu0 %672
  %v675 = vadd.f32 %v665, %v673
  %v676 = vtanh.pop %v675
  %678 = vrot.lane.b32.xlu0 %v676, 64
  %v679 = vpop.permute.xlu0 %678
  %v681 = vmul.f32 %v663, %v679
  %v682 = vxor.u32 %v657, 2147483648
  %v683 = vmul.f32 %v682, 1.442695
  %v684 = vpow.pop %v683
  %v685 = vadd.f32 %v684, 1.0
  %v686 = vrcp.pop %v685
  %v687 = vmul.f32 1.0, %v686
  %v688 = vtanh.pop %v657
  %v689 = vmul.f32 %v687, %v555
  %691 = vrot.lane.b32.xlu0 %v688, 64
  %v692 = vpop.permute.xlu0 %691
  %v694 = vmul.f32 %v687, %v692
  %696 = vrot.lane.b32.xlu0 %v694, 32
  %v697 = vpop.permute.xlu0 %696
  %v699 = vadd.f32 %v689, %v697
  %v700 = vtanh.pop %v699
  %702 = vrot.lane.b32.xlu0 %v700, 64
  %v703 = vpop.permute.xlu0 %702
  %v705 = vmul.f32 %v687, %v703
  %v706 = vpack.c.bf16 %v681, %v681
  %708 = vrot.lane.b32.xlu0 %v706, 32
  %v709 = vpop.permute.xlu0 %708
  %v711 = vsel %vm100, %v709, 0
  %713 = vmatprep.subr.bf16.mxu0 0
  %714 = vmatpush1.bf16.msra.mxu0 %v269
  %715 = vmatprep.subr.bf16.mxu0 0
  %716 = vmatpush1.bf16.msra.mxu0 %v270
  %717 = vmatprep.subr.bf16.mxu0 0
  %718 = vmatpush1.bf16.msra.mxu0 0
  %719 = vmatprep.subr.bf16.mxu0 0
  %720 = vmatpush1.bf16.msra.mxu0 0
  %721 = vmatprep.subr.bf16.mxu0 0
  %722 = vmatpush1.bf16.msra.mxu0 0
  %723 = vmatprep.subr.bf16.mxu0 0
  %724 = vmatpush1.bf16.msra.mxu0 0
  %725 = vmatprep.subr.bf16.mxu0 0
  %726 = vmatpush1.bf16.msra.mxu0 0
  %727 = vmatprep.subr.bf16.mxu0 0
  %728 = vmatpush1.bf16.msra.mxu0 0
  %729 = vmatprep.subr.bf16.mxu0 0
  %730 = vmatpush1.bf16.msra.mxu0 0
  %731 = vmatprep.subr.bf16.mxu0 0
  %732 = vmatpush1.bf16.msra.mxu0 0
  %733 = vmatprep.subr.bf16.mxu0 0
  %734 = vmatpush1.bf16.msra.mxu0 0
  %735 = vmatprep.subr.bf16.mxu0 0
  %736 = vmatpush1.bf16.msra.mxu0 0
  %737 = vmatprep.subr.bf16.mxu0 0
  %738 = vmatpush1.bf16.msra.mxu0 0
  %739 = vmatprep.subr.bf16.mxu0 0
  %740 = vmatpush1.bf16.msra.mxu0 0
  %741 = vmatprep.subr.bf16.mxu0 0
  %742 = vmatpush1.bf16.msra.mxu0 0
  %743 = vmatprep.subr.bf16.mxu0 0
  %744 = vmatpush1.bf16.msra.mxu0 0
  %745 = vmatprep.mubr.bf16.mxu0 0
  %746 = vmatmul.mubr.bf16.gmra.mrb[0].mxu0 %v711
  %v747 = vpop.f32.mrb[0].mxu0
  %v748 = vadd.f32 0.0, %v747
  %v749 = vpop.f32.mrb[0].mxu0
  %v750 = vpop.f32.mrb[0].mxu0
  %v751 = vpop.f32.mrb[0].mxu0
  %752 = vdwg.mxu0
  %v753 = vadd.f32 %v159, %v748
  %v754 = vpack.c.bf16 %v705, %v705
  %756 = vrot.lane.b32.xlu0 %v754, 32
  %v757 = vpop.permute.xlu0 %756
  %v759 = vsel %vm100, %v757, 0
  %761 = vmatprep.subr.bf16.mxu0 0
  %762 = vmatpush1.bf16.msra.mxu0 %v325
  %763 = vmatprep.subr.bf16.mxu0 0
  %764 = vmatpush1.bf16.msra.mxu0 %v326
  %765 = vmatprep.subr.bf16.mxu0 0
  %766 = vmatpush1.bf16.msra.mxu0 0
  %767 = vmatprep.subr.bf16.mxu0 0
  %768 = vmatpush1.bf16.msra.mxu0 0
  %769 = vmatprep.subr.bf16.mxu0 0
  %770 = vmatpush1.bf16.msra.mxu0 0
  %771 = vmatprep.subr.bf16.mxu0 0
  %772 = vmatpush1.bf16.msra.mxu0 0
  %773 = vmatprep.subr.bf16.mxu0 0
  %774 = vmatpush1.bf16.msra.mxu0 0
  %775 = vmatprep.subr.bf16.mxu0 0
  %776 = vmatpush1.bf16.msra.mxu0 0
  %777 = vmatprep.subr.bf16.mxu0 0
  %778 = vmatpush1.bf16.msra.mxu0 0
  %779 = vmatprep.subr.bf16.mxu0 0
  %780 = vmatpush1.bf16.msra.mxu0 0
  %781 = vmatprep.subr.bf16.mxu0 0
  %782 = vmatpush1.bf16.msra.mxu0 0
  %783 = vmatprep.subr.bf16.mxu0 0
  %784 = vmatpush1.bf16.msra.mxu0 0
  %785 = vmatprep.subr.bf16.mxu0 0
  %786 = vmatpush1.bf16.msra.mxu0 0
  %787 = vmatprep.subr.bf16.mxu0 0
  %788 = vmatpush1.bf16.msra.mxu0 0
  %789 = vmatprep.subr.bf16.mxu0 0
  %790 = vmatpush1.bf16.msra.mxu0 0
  %791 = vmatprep.subr.bf16.mxu0 0
  %792 = vmatpush1.bf16.msra.mxu0 0
  %793 = vmatprep.mubr.bf16.mxu0 0
  %794 = vmatmul.mubr.bf16.gmra.mrb[0].mxu0 %v759
  %v795 = vpop.f32.mrb[0].mxu0
  %v796 = vadd.f32 0.0, %v795
  %v797 = vpop.f32.mrb[0].mxu0
  %v798 = vpop.f32.mrb[0].mxu0
  %v799 = vpop.f32.mrb[0].mxu0
  %800 = vdwg.mxu0
  %v801 = vadd.f32 %v247, %v796
  %v802 = vxor.u32 %v753, 2147483648
  %v803 = vmul.f32 %v802, 1.442695
  %v804 = vpow.pop %v803
  %v805 = vadd.f32 %v804, 1.0
  %v806 = vrcp.pop %v805
  %v807 = vmul.f32 1.0, %v806
  %v808 = vtanh.pop %v753
  %v809 = vmul.f32 %v807, %v675
  %811 = vrot.lane.b32.xlu0 %v808, 64
  %v812 = vpop.permute.xlu0 %811
  %v814 = vmul.f32 %v807, %v812
  %816 = vrot.lane.b32.xlu0 %v814, 32
  %v817 = vpop.permute.xlu0 %816
  %v819 = vadd.f32 %v809, %v817
  %v820 = vtanh.pop %v819
  %822 = vrot.lane.b32.xlu0 %v820, 64
  %v823 = vpop.permute.xlu0 %822
  %v825 = vmul.f32 %v807, %v823
  %v826 = vxor.u32 %v801, 2147483648
  %v827 = vmul.f32 %v826, 1.442695
  %v828 = vpow.pop %v827
  %v829 = vadd.f32 %v828, 1.0
  %v830 = vrcp.pop %v829
  %v831 = vmul.f32 1.0, %v830
  %v832 = vtanh.pop %v801
  %v833 = vmul.f32 %v831, %v699
  %835 = vrot.lane.b32.xlu0 %v832, 64
  %v836 = vpop.permute.xlu0 %835
  %v838 = vmul.f32 %v831, %v836
  %840 = vrot.lane.b32.xlu0 %v838, 32
  %v841 = vpop.permute.xlu0 %840
  %v843 = vadd.f32 %v833, %v841
  %v844 = vtanh.pop %v843
  %846 = vrot.lane.b32.xlu0 %v844, 64
  %v847 = vpop.permute.xlu0 %846
  %v849 = vmul.f32 %v831, %v847
  %v850 = vpack.c.bf16 %v825, %v825
  %852 = vrot.lane.b32.xlu0 %v850, 32
  %v853 = vpop.permute.xlu0 %852
  %v855 = vsel %vm100, %v853, 0
  %857 = vmatprep.subr.bf16.mxu0 0
  %858 = vmatpush1.bf16.msra.mxu0 %v269
  %859 = vmatprep.subr.bf16.mxu0 0
  %860 = vmatpush1.bf16.msra.mxu0 %v270
  %861 = vmatprep.subr.bf16.mxu0 0
  %862 = vmatpush1.bf16.msra.mxu0 0
  %863 = vmatprep.subr.bf16.mxu0 0
  %864 = vmatpush1.bf16.msra.mxu0 0
  %865 = vmatprep.subr.bf16.mxu0 0
  %866 = vmatpush1.bf16.msra.mxu0 0
  %867 = vmatprep.subr.bf16.mxu0 0
  %868 = vmatpush1.bf16.msra.mxu0 0
  %869 = vmatprep.subr.bf16.mxu0 0
  %870 = vmatpush1.bf16.msra.mxu0 0
  %871 = vmatprep.subr.bf16.mxu0 0
  %872 = vmatpush1.bf16.msra.mxu0 0
  %873 = vmatprep.subr.bf16.mxu0 0
  %874 = vmatpush1.bf16.msra.mxu0 0
  %875 = vmatprep.subr.bf16.mxu0 0
  %876 = vmatpush1.bf16.msra.mxu0 0
  %877 = vmatprep.subr.bf16.mxu0 0
  %878 = vmatpush1.bf16.msra.mxu0 0
  %879 = vmatprep.subr.bf16.mxu0 0
  %880 = vmatpush1.bf16.msra.mxu0 0
  %881 = vmatprep.subr.bf16.mxu0 0
  %882 = vmatpush1.bf16.msra.mxu0 0
  %883 = vmatprep.subr.bf16.mxu0 0
  %884 = vmatpush1.bf16.msra.mxu0 0
  %885 = vmatprep.subr.bf16.mxu0 0
  %886 = vmatpush1.bf16.msra.mxu0 0
  %887 = vmatprep.subr.bf16.mxu0 0
  %888 = vmatpush1.bf16.msra.mxu0 0
  %889 = vmatprep.mubr.bf16.mxu0 0
  %890 = vmatmul.mubr.bf16.gmra.mrb[0].mxu0 %v855
  %v891 = vpop.f32.mrb[0].mxu0
  %v892 = vadd.f32 0.0, %v891
  %v893 = vpop.f32.mrb[0].mxu0
  %v894 = vpop.f32.mrb[0].mxu0
  %v895 = vpop.f32.mrb[0].mxu0
  %896 = vdwg.mxu0
  %v897 = vadd.f32 %v164, %v892
  %v898 = vpack.c.bf16 %v849, %v849
  %900 = vrot.lane.b32.xlu0 %v898, 32
  %v901 = vpop.permute.xlu0 %900
  %v903 = vsel %vm100, %v901, 0
  %905 = vmatprep.subr.bf16.mxu0 0
  %906 = vmatpush1.bf16.msra.mxu0 %v325
  %907 = vmatprep.subr.bf16.mxu0 0
  %908 = vmatpush1.bf16.msra.mxu0 %v326
  %909 = vmatprep.subr.bf16.mxu0 0
  %910 = vmatpush1.bf16.msra.mxu0 0
  %911 = vmatprep.subr.bf16.mxu0 0
  %912 = vmatpush1.bf16.msra.mxu0 0
  %913 = vmatprep.subr.bf16.mxu0 0
  %914 = vmatpush1.bf16.msra.mxu0 0
  %915 = vmatprep.subr.bf16.mxu0 0
  %916 = vmatpush1.bf16.msra.mxu0 0
  %917 = vmatprep.subr.bf16.mxu0 0
  %918 = vmatpush1.bf16.msra.mxu0 0
  %919 = vmatprep.subr.bf16.mxu0 0
  %920 = vmatpush1.bf16.msra.mxu0 0
  %921 = vmatprep.subr.bf16.mxu0 0
  %922 = vmatpush1.bf16.msra.mxu0 0
  %923 = vmatprep.subr.bf16.mxu0 0
  %924 = vmatpush1.bf16.msra.mxu0 0
  %925 = vmatprep.subr.bf16.mxu0 0
  %926 = vmatpush1.bf16.msra.mxu0 0
  %927 = vmatprep.subr.bf16.mxu0 0
  %928 = vmatpush1.bf16.msra.mxu0 0
  %929 = vmatprep.subr.bf16.mxu0 0
  %930 = vmatpush1.bf16.msra.mxu0 0
  %931 = vmatprep.subr.bf16.mxu0 0
  %932 = vmatpush1.bf16.msra.mxu0 0
  %933 = vmatprep.subr.bf16.mxu0 0
  %934 = vmatpush1.bf16.msra.mxu0 0
  %935 = vmatprep.subr.bf16.mxu0 0
  %936 = vmatpush1.bf16.msra.mxu0 0
  %937 = vmatprep.mubr.bf16.mxu0 0
  %938 = vmatmul.mubr.bf16.gmra.mrb[0].mxu0 %v903
  %v939 = vpop.f32.mrb[0].mxu0
  %v940 = vadd.f32 0.0, %v939
  %v941 = vpop.f32.mrb[0].mxu0
  %v942 = vpop.f32.mrb[0].mxu0
  %v943 = vpop.f32.mrb[0].mxu0
  %944 = vdwg.mxu0
  %v945 = vadd.f32 %v242, %v940
  %v946 = vxor.u32 %v897, 2147483648
  %v947 = vmul.f32 %v946, 1.442695
  %v948 = vpow.pop %v947
  %v949 = vadd.f32 %v948, 1.0
  %v950 = vrcp.pop %v949
  %v951 = vmul.f32 1.0, %v950
  %v952 = vtanh.pop %v897
  %v953 = vmul.f32 %v951, %v819
  %955 = vrot.lane.b32.xlu0 %v952, 64
  %v956 = vpop.permute.xlu0 %955
  %v958 = vmul.f32 %v951, %v956
  %960 = vrot.lane.b32.xlu0 %v958, 32
  %v961 = vpop.permute.xlu0 %960
  %v963 = vadd.f32 %v953, %v961
  %v964 = vtanh.pop %v963
  %966 = vrot.lane.b32.xlu0 %v964, 64
  %v967 = vpop.permute.xlu0 %966
  %v969 = vmul.f32 %v951, %v967
  %v970 = vxor.u32 %v945, 2147483648
  %v971 = vmul.f32 %v970, 1.442695
  %v972 = vpow.pop %v971
  %v973 = vadd.f32 %v972, 1.0
  %v974 = vrcp.pop %v973
  %v975 = vmul.f32 1.0, %v974
  %v976 = vtanh.pop %v945
  %v977 = vmul.f32 %v975, %v843
  %979 = vrot.lane.b32.xlu0 %v976, 64
  %v980 = vpop.permute.xlu0 %979
  %v982 = vmul.f32 %v975, %v980
  %984 = vrot.lane.b32.xlu0 %v982, 32
  %v985 = vpop.permute.xlu0 %984
  %v987 = vadd.f32 %v977, %v985
  %v988 = vtanh.pop %v987
  %990 = vrot.lane.b32.xlu0 %v988, 64
  %v991 = vpop.permute.xlu0 %990
  %v993 = vmul.f32 %v975, %v991
  %v994 = vpack.c.bf16 %v969, %v969
  %996 = vrot.lane.b32.xlu0 %v994, 32
  %v997 = vpop.permute.xlu0 %996
  %v999 = vsel %vm100, %v997, 0
  %1001 = vmatprep.subr.bf16.mxu0 0
  %1002 = vmatpush1.bf16.msra.mxu0 %v269
  %1003 = vmatprep.subr.bf16.mxu0 0
  %1004 = vmatpush1.bf16.msra.mxu0 %v270
  %1005 = vmatprep.subr.bf16.mxu0 0
  %1006 = vmatpush1.bf16.msra.mxu0 0
  %1007 = vmatprep.subr.bf16.mxu0 0
  %1008 = vmatpush1.bf16.msra.mxu0 0
  %1009 = vmatprep.subr.bf16.mxu0 0
  %1010 = vmatpush1.bf16.msra.mxu0 0
  %1011 = vmatprep.subr.bf16.mxu0 0
  %1012 = vmatpush1.bf16.msra.mxu0 0
  %1013 = vmatprep.subr.bf16.mxu0 0
  %1014 = vmatpush1.bf16.msra.mxu0 0
  %1015 = vmatprep.subr.bf16.mxu0 0
  %1016 = vmatpush1.bf16.msra.mxu0 0
  %1017 = vmatprep.subr.bf16.mxu0 0
  %1018 = vmatpush1.bf16.msra.mxu0 0
  %1019 = vmatprep.subr.bf16.mxu0 0
  %1020 = vmatpush1.bf16.msra.mxu0 0
  %1021 = vmatprep.subr.bf16.mxu0 0
  %1022 = vmatpush1.bf16.msra.mxu0 0
  %1023 = vmatprep.subr.bf16.mxu0 0
  %1024 = vmatpush1.bf16.msra.mxu0 0
  %1025 = vmatprep.subr.bf16.mxu0 0
  %1026 = vmatpush1.bf16.msra.mxu0 0
  %1027 = vmatprep.subr.bf16.mxu0 0
  %1028 = vmatpush1.bf16.msra.mxu0 0
  %1029 = vmatprep.subr.bf16.mxu0 0
  %1030 = vmatpush1.bf16.msra.mxu0 0
  %1031 = vmatprep.subr.bf16.mxu0 0
  %1032 = vmatpush1.bf16.msra.mxu0 0
  %1033 = vmatprep.mubr.bf16.mxu0 0
  %1034 = vmatmul.mubr.bf16.gmra.mrb[0].mxu0 %v999
  %v1035 = vpop.f32.mrb[0].mxu0
  %v1036 = vadd.f32 0.0, %v1035
  %v1037 = vpop.f32.mrb[0].mxu0
  %v1038 = vpop.f32.mrb[0].mxu0
  %v1039 = vpop.f32.mrb[0].mxu0
  %1040 = vdwg.mxu0
  %v1041 = vadd.f32 %v167, %v1036
  %v1042 = vpack.c.bf16 %v993, %v993
  %1044 = vrot.lane.b32.xlu0 %v1042, 32
  %v1045 = vpop.permute.xlu0 %1044
  %v1047 = vsel %vm100, %v1045, 0
  %1049 = vmatprep.subr.bf16.mxu0 0
  %1050 = vmatpush1.bf16.msra.mxu0 %v325
  %1051 = vmatprep.subr.bf16.mxu0 0
  %1052 = vmatpush1.bf16.msra.mxu0 %v326
  %1053 = vmatprep.subr.bf16.mxu0 0
  %1054 = vmatpush1.bf16.msra.mxu0 0
  %1055 = vmatprep.subr.bf16.mxu0 0
  %1056 = vmatpush1.bf16.msra.mxu0 0
  %1057 = vmatprep.subr.bf16.mxu0 0
  %1058 = vmatpush1.bf16.msra.mxu0 0
  %1059 = vmatprep.subr.bf16.mxu0 0
  %1060 = vmatpush1.bf16.msra.mxu0 0
  %1061 = vmatprep.subr.bf16.mxu0 0
  %1062 = vmatpush1.bf16.msra.mxu0 0
  %1063 = vmatprep.subr.bf16.mxu0 0
  %1064 = vmatpush1.bf16.msra.mxu0 0
  %1065 = vmatprep.subr.bf16.mxu0 0
  %1066 = vmatpush1.bf16.msra.mxu0 0
  %1067 = vmatprep.subr.bf16.mxu0 0
  %1068 = vmatpush1.bf16.msra.mxu0 0
  %1069 = vmatprep.subr.bf16.mxu0 0
  %1070 = vmatpush1.bf16.msra.mxu0 0
  %1071 = vmatprep.subr.bf16.mxu0 0
  %1072 = vmatpush1.bf16.msra.mxu0 0
  %1073 = vmatprep.subr.bf16.mxu0 0
  %1074 = vmatpush1.bf16.msra.mxu0 0
  %1075 = vmatprep.subr.bf16.mxu0 0
  %1076 = vmatpush1.bf16.msra.mxu0 0
  %1077 = vmatprep.subr.bf16.mxu0 0
  %1078 = vmatpush1.bf16.msra.mxu0 0
  %1079 = vmatprep.subr.bf16.mxu0 0
  %1080 = vmatpush1.bf16.msra.mxu0 0
  %1081 = vmatprep.mubr.bf16.mxu0 0
  %1082 = vmatmul.mubr.bf16.gmra.mrb[0].mxu0 %v1047
  %v1083 = vpop.f32.mrb[0].mxu0
  %v1084 = vadd.f32 0.0, %v1083
  %v1085 = vpop.f32.mrb[0].mxu0
  %v1086 = vpop.f32.mrb[0].mxu0
  %v1087 = vpop.f32.mrb[0].mxu0
  %1088 = vdwg.mxu0
  %v1089 = vadd.f32 %v239, %v1084
  %v1090 = vxor.u32 %v1041, 2147483648
  %v1091 = vmul.f32 %v1090, 1.442695
  %v1092 = vpow.pop %v1091
  %v1093 = vadd.f32 %v1092, 1.0
  %v1094 = vrcp.pop %v1093
  %v1095 = vmul.f32 1.0, %v1094
  %v1096 = vtanh.pop %v1041
  %v1097 = vmul.f32 %v1095, %v963
  %1099 = vrot.lane.b32.xlu0 %v1096, 64
  %v1100 = vpop.permute.xlu0 %1099
  %v1102 = vmul.f32 %v1095, %v1100
  %1104 = vrot.lane.b32.xlu0 %v1102, 32
  %v1105 = vpop.permute.xlu0 %1104
  %v1107 = vadd.f32 %v1097, %v1105
  %v1108 = vtanh.pop %v1107
  %1110 = vrot.lane.b32.xlu0 %v1108, 64
  %v1111 = vpop.permute.xlu0 %1110
  %v1113 = vmul.f32 %v1095, %v1111
  %v1114 = vxor.u32 %v1089, 2147483648
  %v1115 = vmul.f32 %v1114, 1.442695
  %v1116 = vpow.pop %v1115
  %v1117 = vadd.f32 %v1116, 1.0
  %v1118 = vrcp.pop %v1117
  %v1119 = vmul.f32 1.0, %v1118
  %v1120 = vtanh.pop %v1089
  %v1121 = vmul.f32 %v1119, %v987
  %1123 = vrot.lane.b32.xlu0 %v1120, 64
  %v1124 = vpop.permute.xlu0 %1123
  %v1126 = vmul.f32 %v1119, %v1124
  %1128 = vrot.lane.b32.xlu0 %v1126, 32
  %v1129 = vpop.permute.xlu0 %1128
  %v1131 = vadd.f32 %v1121, %v1129
  %v1132 = vtanh.pop %v1131
  %1134 = vrot.lane.b32.xlu0 %v1132, 64
  %v1135 = vpop.permute.xlu0 %1134
  %v1137 = vmul.f32 %v1119, %v1135
  %v1138 = vpack.c.bf16 %v1113, %v1113
  %1140 = vrot.lane.b32.xlu0 %v1138, 32
  %v1141 = vpop.permute.xlu0 %1140
  %v1143 = vsel %vm100, %v1141, 0
  %1145 = vmatprep.subr.bf16.mxu0 0
  %1146 = vmatpush1.bf16.msra.mxu0 %v269
  %1147 = vmatprep.subr.bf16.mxu0 0
  %1148 = vmatpush1.bf16.msra.mxu0 %v270
  %1149 = vmatprep.subr.bf16.mxu0 0
  %1150 = vmatpush1.bf16.msra.mxu0 0
  %1151 = vmatprep.subr.bf16.mxu0 0
  %1152 = vmatpush1.bf16.msra.mxu0 0
  %1153 = vmatprep.subr.bf16.mxu0 0
  %1154 = vmatpush1.bf16.msra.mxu0 0
  %1155 = vmatprep.subr.bf16.mxu0 0
  %1156 = vmatpush1.bf16.msra.mxu0 0
  %1157 = vmatprep.subr.bf16.mxu0 0
  %1158 = vmatpush1.bf16.msra.mxu0 0
  %1159 = vmatprep.subr.bf16.mxu0 0
  %1160 = vmatpush1.bf16.msra.mxu0 0
  %1161 = vmatprep.subr.bf16.mxu0 0
  %1162 = vmatpush1.bf16.msra.mxu0 0
  %1163 = vmatprep.subr.bf16.mxu0 0
  %1164 = vmatpush1.bf16.msra.mxu0 0
  %1165 = vmatprep.subr.bf16.mxu0 0
  %1166 = vmatpush1.bf16.msra.mxu0 0
  %1167 = vmatprep.subr.bf16.mxu0 0
  %1168 = vmatpush1.bf16.msra.mxu0 0
  %1169 = vmatprep.subr.bf16.mxu0 0
  %1170 = vmatpush1.bf16.msra.mxu0 0
  %1171 = vmatprep.subr.bf16.mxu0 0
  %1172 = vmatpush1.bf16.msra.mxu0 0
  %1173 = vmatprep.subr.bf16.mxu0 0
  %1174 = vmatpush1.bf16.msra.mxu0 0
  %1175 = vmatprep.subr.bf16.mxu0 0
  %1176 = vmatpush1.bf16.msra.mxu0 0
  %1177 = vmatprep.mubr.bf16.mxu0 0
  %1178 = vmatmul.mubr.bf16.gmra.mrb[0].mxu0 %v1143
  %v1179 = vpop.f32.mrb[0].mxu0
  %v1180 = vadd.f32 0.0, %v1179
  %v1181 = vpop.f32.mrb[0].mxu0
  %v1182 = vpop.f32.mrb[0].mxu0
  %v1183 = vpop.f32.mrb[0].mxu0
  %1184 = vdwg.mxu0
  %v1185 = vadd.f32 %v172, %v1180
  %v1186 = vpack.c.bf16 %v1137, %v1137
  %1188 = vrot.lane.b32.xlu0 %v1186, 32
  %v1189 = vpop.permute.xlu0 %1188
  %v1191 = vsel %vm100, %v1189, 0
  %1193 = vmatprep.subr.bf16.mxu0 0
  %1194 = vmatpush1.bf16.msra.mxu0 %v325
  %1195 = vmatprep.subr.bf16.mxu0 0
  %1196 = vmatpush1.bf16.msra.mxu0 %v326
  %1197 = vmatprep.subr.bf16.mxu0 0
  %1198 = vmatpush1.bf16.msra.mxu0 0
  %1199 = vmatprep.subr.bf16.mxu0 0
  %1200 = vmatpush1.bf16.msra.mxu0 0
  %1201 = vmatprep.subr.bf16.mxu0 0
  %1202 = vmatpush1.bf16.msra.mxu0 0
  %1203 = vmatprep.subr.bf16.mxu0 0
  %1204 = vmatpush1.bf16.msra.mxu0 0
  %1205 = vmatprep.subr.bf16.mxu0 0
  %1206 = vmatpush1.bf16.msra.mxu0 0
  %1207 = vmatprep.subr.bf16.mxu0 0
  %1208 = vmatpush1.bf16.msra.mxu0 0
  %1209 = vmatprep.subr.bf16.mxu0 0
  %1210 = vmatpush1.bf16.msra.mxu0 0
  %1211 = vmatprep.subr.bf16.mxu0 0
  %1212 = vmatpush1.bf16.msra.mxu0 0
  %1213 = vmatprep.subr.bf16.mxu0 0
  %1214 = vmatpush1.bf16.msra.mxu0 0
  %1215 = vmatprep.subr.bf16.mxu0 0
  %1216 = vmatpush1.bf16.msra.mxu0 0
  %1217 = vmatprep.subr.bf16.mxu0 0
  %1218 = vmatpush1.bf16.msra.mxu0 0
  %1219 = vmatprep.subr.bf16.mxu0 0
  %1220 = vmatpush1.bf16.msra.mxu0 0
  %1221 = vmatprep.subr.bf16.mxu0 0
  %1222 = vmatpush1.bf16.msra.mxu0 0
  %1223 = vmatprep.subr.bf16.mxu0 0
  %1224 = vmatpush1.bf16.msra.mxu0 0
  %1225 = vmatprep.mubr.bf16.mxu0 0
  %1226 = vmatmul.mubr.bf16.gmra.mrb[0].mxu0 %v1191
  %v1227 = vpop.f32.mrb[0].mxu0
  %v1228 = vadd.f32 0.0, %v1227
  %v1229 = vpop.f32.mrb[0].mxu0
  %v1230 = vpop.f32.mrb[0].mxu0
  %v1231 = vpop.f32.mrb[0].mxu0
  %1232 = vdwg.mxu0
  %v1233 = vadd.f32 %v234, %v1228
  %v1234 = vxor.u32 %v1185, 2147483648
  %v1235 = vmul.f32 %v1234, 1.442695
  %v1236 = vpow.pop %v1235
  %v1237 = vadd.f32 %v1236, 1.0
  %v1238 = vrcp.pop %v1237
  %v1239 = vmul.f32 1.0, %v1238
  %v1240 = vtanh.pop %v1185
  %v1241 = vmul.f32 %v1239, %v1107
  %1243 = vrot.lane.b32.xlu0 %v1240, 64
  %v1244 = vpop.permute.xlu0 %1243
  %v1246 = vmul.f32 %v1239, %v1244
  %1248 = vrot.lane.b32.xlu0 %v1246, 32
  %v1249 = vpop.permute.xlu0 %1248
  %v1251 = vadd.f32 %v1241, %v1249
  %v1252 = vtanh.pop %v1251
  %1254 = vrot.lane.b32.xlu0 %v1252, 64
  %v1255 = vpop.permute.xlu0 %1254
  %v1257 = vmul.f32 %v1239, %v1255
  %v1258 = vxor.u32 %v1233, 2147483648
  %v1259 = vmul.f32 %v1258, 1.442695
  %v1260 = vpow.pop %v1259
  %v1261 = vadd.f32 %v1260, 1.0
  %v1262 = vrcp.pop %v1261
  %v1263 = vmul.f32 1.0, %v1262
  %v1264 = vtanh.pop %v1233
  %v1265 = vmul.f32 %v1263, %v1131
  %1267 = vrot.lane.b32.xlu0 %v1264, 64
  %v1268 = vpop.permute.xlu0 %1267
  %v1270 = vmul.f32 %v1263, %v1268
  %1272 = vrot.lane.b32.xlu0 %v1270, 32
  %v1273 = vpop.permute.xlu0 %1272
  %v1275 = vadd.f32 %v1265, %v1273
  %v1276 = vtanh.pop %v1275
  %1278 = vrot.lane.b32.xlu0 %v1276, 64
  %v1279 = vpop.permute.xlu0 %1278
  %v1281 = vmul.f32 %v1263, %v1279
  %v1282 = vpack.c.bf16 %v1257, %v1257
  %1284 = vrot.lane.b32.xlu0 %v1282, 32
  %v1285 = vpop.permute.xlu0 %1284
  %v1287 = vsel %vm100, %v1285, 0
  %1289 = vmatprep.subr.bf16.mxu0 0
  %1290 = vmatpush1.bf16.msra.mxu0 %v269
  %1291 = vmatprep.subr.bf16.mxu0 0
  %1292 = vmatpush1.bf16.msra.mxu0 %v270
  %1293 = vmatprep.subr.bf16.mxu0 0
  %1294 = vmatpush1.bf16.msra.mxu0 0
  %1295 = vmatprep.subr.bf16.mxu0 0
  %1296 = vmatpush1.bf16.msra.mxu0 0
  %1297 = vmatprep.subr.bf16.mxu0 0
  %1298 = vmatpush1.bf16.msra.mxu0 0
  %1299 = vmatprep.subr.bf16.mxu0 0
  %1300 = vmatpush1.bf16.msra.mxu0 0
  %1301 = vmatprep.subr.bf16.mxu0 0
  %1302 = vmatpush1.bf16.msra.mxu0 0
  %1303 = vmatprep.subr.bf16.mxu0 0
  %1304 = vmatpush1.bf16.msra.mxu0 0
  %1305 = vmatprep.subr.bf16.mxu0 0
  %1306 = vmatpush1.bf16.msra.mxu0 0
  %1307 = vmatprep.subr.bf16.mxu0 0
  %1308 = vmatpush1.bf16.msra.mxu0 0
  %1309 = vmatprep.subr.bf16.mxu0 0
  %1310 = vmatpush1.bf16.msra.mxu0 0
  %1311 = vmatprep.subr.bf16.mxu0 0
  %1312 = vmatpush1.bf16.msra.mxu0 0
  %1313 = vmatprep.subr.bf16.mxu0 0
  %1314 = vmatpush1.bf16.msra.mxu0 0
  %1315 = vmatprep.subr.bf16.mxu0 0
  %1316 = vmatpush1.bf16.msra.mxu0 0
  %1317 = vmatprep.subr.bf16.mxu0 0
  %1318 = vmatpush1.bf16.msra.mxu0 0
  %1319 = vmatprep.subr.bf16.mxu0 0
  %1320 = vmatpush1.bf16.msra.mxu0 0
  %1321 = vmatprep.mubr.bf16.mxu0 0
  %1322 = vmatmul.mubr.bf16.gmra.mrb[0].mxu0 %v1287
  %v1323 = vpop.f32.mrb[0].mxu0
  %v1324 = vadd.f32 0.0, %v1323
  %v1325 = vpop.f32.mrb[0].mxu0
  %v1326 = vpop.f32.mrb[0].mxu0
  %v1327 = vpop.f32.mrb[0].mxu0
  %1328 = vdwg.mxu0
  %v1329 = vadd.f32 %v175, %v1324
  %v1330 = vpack.c.bf16 %v1281, %v1281
  %1332 = vrot.lane.b32.xlu0 %v1330, 32
  %v1333 = vpop.permute.xlu0 %1332
  %v1335 = vsel %vm100, %v1333, 0
  %1337 = vmatprep.subr.bf16.mxu0 0
  %1338 = vmatpush1.bf16.msra.mxu0 %v325
  %1339 = vmatprep.subr.bf16.mxu0 0
  %1340 = vmatpush1.bf16.msra.mxu0 %v326
  %1341 = vmatprep.subr.bf16.mxu0 0
  %1342 = vmatpush1.bf16.msra.mxu0 0
  %1343 = vmatprep.subr.bf16.mxu0 0
  %1344 = vmatpush1.bf16.msra.mxu0 0
  %1345 = vmatprep.subr.bf16.mxu0 0
  %1346 = vmatpush1.bf16.msra.mxu0 0
  %1347 = vmatprep.subr.bf16.mxu0 0
  %1348 = vmatpush1.bf16.msra.mxu0 0
  %1349 = vmatprep.subr.bf16.mxu0 0
  %1350 = vmatpush1.bf16.msra.mxu0 0
  %1351 = vmatprep.subr.bf16.mxu0 0
  %1352 = vmatpush1.bf16.msra.mxu0 0
  %1353 = vmatprep.subr.bf16.mxu0 0
  %1354 = vmatpush1.bf16.msra.mxu0 0
  %1355 = vmatprep.subr.bf16.mxu0 0
  %1356 = vmatpush1.bf16.msra.mxu0 0
  %1357 = vmatprep.subr.bf16.mxu0 0
  %1358 = vmatpush1.bf16.msra.mxu0 0
  %1359 = vmatprep.subr.bf16.mxu0 0
  %1360 = vmatpush1.bf16.msra.mxu0 0
  %1361 = vmatprep.subr.bf16.mxu0 0
  %1362 = vmatpush1.bf16.msra.mxu0 0
  %1363 = vmatprep.subr.bf16.mxu0 0
  %1364 = vmatpush1.bf16.msra.mxu0 0
  %1365 = vmatprep.subr.bf16.mxu0 0
  %1366 = vmatpush1.bf16.msra.mxu0 0
  %1367 = vmatprep.subr.bf16.mxu0 0
  %1368 = vmatpush1.bf16.msra.mxu0 0
  %1369 = vmatprep.mubr.bf16.mxu0 0
  %1370 = vmatmul.mubr.bf16.gmra.mrb[0].mxu0 %v1335
  %v1371 = vpop.f32.mrb[0].mxu0
  %v1372 = vadd.f32 0.0, %v1371
  %v1373 = vpop.f32.mrb[0].mxu0
  %v1374 = vpop.f32.mrb[0].mxu0
  %v1375 = vpop.f32.mrb[0].mxu0
  %1376 = vdwg.mxu0
  %v1377 = vadd.f32 %v231, %v1372
  %v1378 = vxor.u32 %v1329, 2147483648
  %v1379 = vmul.f32 %v1378, 1.442695
  %v1380 = vpow.pop %v1379
  %v1381 = vadd.f32 %v1380, 1.0
  %v1382 = vrcp.pop %v1381
  %v1383 = vmul.f32 1.0, %v1382
  %v1384 = vtanh.pop %v1329
  %v1385 = vmul.f32 %v1383, %v1251
  %1387 = vrot.lane.b32.xlu0 %v1384, 64
  %v1388 = vpop.permute.xlu0 %1387
  %v1390 = vmul.f32 %v1383, %v1388
  %1392 = vrot.lane.b32.xlu0 %v1390, 32
  %v1393 = vpop.permute.xlu0 %1392
  %v1395 = vadd.f32 %v1385, %v1393
  %v1396 = vtanh.pop %v1395
  %1398 = vrot.lane.b32.xlu0 %v1396, 64
  %v1399 = vpop.permute.xlu0 %1398
  %v1401 = vmul.f32 %v1383, %v1399
  %v1402 = vxor.u32 %v1377, 2147483648
  %v1403 = vmul.f32 %v1402, 1.442695
  %v1404 = vpow.pop %v1403
  %v1405 = vadd.f32 %v1404, 1.0
  %v1406 = vrcp.pop %v1405
  %v1407 = vmul.f32 1.0, %v1406
  %v1408 = vtanh.pop %v1377
  %v1409 = vmul.f32 %v1407, %v1275
  %1411 = vrot.lane.b32.xlu0 %v1408, 64
  %v1412 = vpop.permute.xlu0 %1411
  %v1414 = vmul.f32 %v1407, %v1412
  %1416 = vrot.lane.b32.xlu0 %v1414, 32
  %v1417 = vpop.permute.xlu0 %1416
  %v1419 = vadd.f32 %v1409, %v1417
  %v1420 = vtanh.pop %v1419
  %1422 = vrot.lane.b32.xlu0 %v1420, 64
  %v1423 = vpop.permute.xlu0 %1422
  %v1425 = vmul.f32 %v1407, %v1423
  %1434 = vrot.lane.b32.xlu0 %v393, 32
  %v1435 = vpop.permute.xlu0 %1434
  %1436 = vrot.lane.b32.xlu0 %v537, 32
  %v1437 = vpop.permute.xlu0 %1436
  %1438 = vrot.lane.b32.xlu0 %v681, 32
  %v1439 = vpop.permute.xlu0 %1438
  %1440 = vrot.lane.b32.xlu0 %v825, 32
  %v1441 = vpop.permute.xlu0 %1440
  %1442 = vrot.lane.b32.xlu0 %v969, 32
  %v1443 = vpop.permute.xlu0 %1442
  %1444 = vrot.lane.b32.xlu0 %v1113, 32
  %v1445 = vpop.permute.xlu0 %1444
  %1446 = vrot.lane.b32.xlu0 %v1257, 32
  %v1447 = vpop.permute.xlu0 %1446
  %1448 = vrot.lane.b32.xlu0 %v1401, 32
  %v1449 = vpop.permute.xlu0 %1448
  %1466 = vrot.lane.b32.xlu0 %v1425, 64
  %v1467 = vpop.permute.xlu0 %1466
  %1468 = vrot.lane.b32.xlu0 %v1281, 64
  %v1469 = vpop.permute.xlu0 %1468
  %1470 = vrot.lane.b32.xlu0 %v1137, 64
  %v1471 = vpop.permute.xlu0 %1470
  %1472 = vrot.lane.b32.xlu0 %v993, 64
  %v1473 = vpop.permute.xlu0 %1472
  %1474 = vrot.lane.b32.xlu0 %v849, 64
  %v1475 = vpop.permute.xlu0 %1474
  %1476 = vrot.lane.b32.xlu0 %v705, 64
  %v1477 = vpop.permute.xlu0 %1476
  %1478 = vrot.lane.b32.xlu0 %v561, 64
  %v1479 = vpop.permute.xlu0 %1478
  %1480 = vrot.lane.b32.xlu0 %v417, 64
  %v1481 = vpop.permute.xlu0 %1480
  %v1490 = vsel %vm100, %v1435, %v1467
  %v1491 = vsel %vm100, %v1437, %v1469
  %v1492 = vsel %vm100, %v1439, %v1471
  %v1493 = vsel %vm100, %v1441, %v1473
  %v1494 = vsel %vm100, %v1443, %v1475
  %v1495 = vsel %vm100, %v1445, %v1477
  %v1496 = vsel %vm100, %v1447, %v1479
  %v1497 = vsel %vm100, %v1449, %v1481
  %v1498 = vpack.c.bf16 %v1491, %v1490
  %v1499 = vpack.c.bf16 %v1493, %v1492
  %v1500 = vpack.c.bf16 %v1495, %v1494
  %v1501 = vpack.c.bf16 %v1497, %v1496
  %v1502 = vld [vmem:[%s4] sm:$0xf]
  %v1503 = vld [vmem:[%s4 + $0x4] sm:$0xf]
  %v1504 = vld [vmem:[%s4 + $0x8] sm:$0xf]
  %v1505 = vld [vmem:[%s4 + $0xc] sm:$0xf]
  %v1506 = vld [vmem:[%s4 + $0x10] sm:$0xf]
  %v1507 = vld [vmem:[%s4 + $0x14] sm:$0xf]
  %v1508 = vld [vmem:[%s4 + $0x18] sm:$0xf]
  %v1509 = vld [vmem:[%s4 + $0x1c] sm:$0xf]
  %s1510 = scalar_lea.vmem %s4, 32
  %v1511 = vld [vmem:[%s1510] sm:$0xf]
  %v1512 = vld [vmem:[%s1510 + $0x4] sm:$0xf]
  %v1513 = vld [vmem:[%s1510 + $0x8] sm:$0xf]
  %v1514 = vld [vmem:[%s1510 + $0xc] sm:$0xf]
  %v1515 = vld [vmem:[%s1510 + $0x10] sm:$0xf]
  %v1516 = vld [vmem:[%s1510 + $0x14] sm:$0xf]
  %v1517 = vld [vmem:[%s1510 + $0x18] sm:$0xf]
  %v1518 = vld [vmem:[%s1510 + $0x1c] sm:$0xf]
  %v1519 = vld [vmem:[%s5] sm:$0xf]
  %v1520 = vld [vmem:[%s5 + $0x4] sm:$0xf]
  %v1521 = vld [vmem:[%s5 + $0x8] sm:$0xf]
  %v1522 = vld [vmem:[%s5 + $0xc] sm:$0xf]
  %v1523 = vld [vmem:[%s6] sm:$0x1]
  %s1524 = scalar_lea.vmem %s6, 1
  %v1525 = vld [vmem:[%s1524] sm:$0x1]
  %v1527 = vlaneseq
  %v1528 = vshrl.u32 %v1527, 7
  %v1529 = vsub.s32 0, %v1528
  %v1530 = vrot.slane %v1523, %v1529
  %v1540 = vunpack.c.l.b16 %v1502
  %v1541 = vunpack.c.l.b16 %v1503
  %v1542 = vunpack.c.l.b16 %v1504
  %v1543 = vunpack.c.l.b16 %v1505
  %v1544 = vunpack.c.l.b16 %v1506
  %v1545 = vunpack.c.l.b16 %v1507
  %v1546 = vunpack.c.l.b16 %v1508
  %v1547 = vunpack.c.l.b16 %v1509
  %v1548 = vpack.c.b16 %v1541, %v1540
  %v1549 = vpack.c.b16 %v1543, %v1542
  %v1550 = vpack.c.b16 %v1545, %v1544
  %v1551 = vpack.c.b16 %v1547, %v1546
  %vm1556 = vcmask 523264
  %v1558 = vsel %vm1556, %v1498, 0
  %v1561 = vsel %vm1556, %v1499, 0
  %v1564 = vsel %vm1556, %v1500, 0
  %v1567 = vsel %vm1556, %v1501, 0
  %1569 = vmatprep.subr.bf16.mxu0 0
  %1570 = vmatpush1.bf16.msra.mxu0 %v1548
  %1571 = vmatprep.subr.bf16.mxu0 0
  %1572 = vmatpush1.bf16.msra.mxu0 %v1549
  %1573 = vmatprep.subr.bf16.mxu0 0
  %1574 = vmatpush1.bf16.msra.mxu0 %v1550
  %1575 = vmatprep.subr.bf16.mxu0 0
  %1576 = vmatpush1.bf16.msra.mxu0 %v1551
  %1577 = vmatprep.subr.bf16.mxu0 0
  %1578 = vmatpush1.bf16.msra.mxu0 0
  %1579 = vmatprep.subr.bf16.mxu0 0
  %1580 = vmatpush1.bf16.msra.mxu0 0
  %1581 = vmatprep.subr.bf16.mxu0 0
  %1582 = vmatpush1.bf16.msra.mxu0 0
  %1583 = vmatprep.subr.bf16.mxu0 0
  %1584 = vmatpush1.bf16.msra.mxu0 0
  %1585 = vmatprep.subr.bf16.mxu0 0
  %1586 = vmatpush1.bf16.msra.mxu0 0
  %1587 = vmatprep.subr.bf16.mxu0 0
  %1588 = vmatpush1.bf16.msra.mxu0 0
  %1589 = vmatprep.subr.bf16.mxu0 0
  %1590 = vmatpush1.bf16.msra.mxu0 0
  %1591 = vmatprep.subr.bf16.mxu0 0
  %1592 = vmatpush1.bf16.msra.mxu0 0
  %1593 = vmatprep.subr.bf16.mxu0 0
  %1594 = vmatpush1.bf16.msra.mxu0 0
  %1595 = vmatprep.subr.bf16.mxu0 0
  %1596 = vmatpush1.bf16.msra.mxu0 0
  %1597 = vmatprep.subr.bf16.mxu0 0
  %1598 = vmatpush1.bf16.msra.mxu0 0
  %1599 = vmatprep.subr.bf16.mxu0 0
  %1600 = vmatpush1.bf16.msra.mxu0 0
  %1601 = vmatprep.mubr.bf16.mxu0 0
  %1602 = vmatmul.mubr.bf16.gmra.mrb[0].mxu0 %v1558
  %v1603 = vpop.f32.mrb[0].mxu0
  %v1604 = vadd.f32 %v1530, %v1603
  %v1605 = vpop.f32.mrb[0].mxu0
  %v1606 = vpop.f32.mrb[0].mxu0
  %v1607 = vadd.f32 %v1530, %v1606
  %v1608 = vpop.f32.mrb[0].mxu0
  %1609 = vmatprep.mubr.bf16.mxu0 0
  %1610 = vmatmul.mubr.bf16.gmra.mrb[0].mxu0 %v1561
  %v1611 = vpop.f32.mrb[0].mxu0
  %v1612 = vadd.f32 %v1530, %v1611
  %v1613 = vpop.f32.mrb[0].mxu0
  %v1614 = vpop.f32.mrb[0].mxu0
  %v1615 = vadd.f32 %v1530, %v1614
  %v1616 = vpop.f32.mrb[0].mxu0
  %1617 = vmatprep.mubr.bf16.mxu0 0
  %1618 = vmatmul.mubr.bf16.gmra.mrb[0].mxu0 %v1564
  %v1619 = vpop.f32.mrb[0].mxu0
  %v1620 = vadd.f32 %v1530, %v1619
  %v1621 = vpop.f32.mrb[0].mxu0
  %v1622 = vpop.f32.mrb[0].mxu0
  %v1623 = vadd.f32 %v1530, %v1622
  %v1624 = vpop.f32.mrb[0].mxu0
  %1625 = vmatprep.mubr.bf16.mxu0 0
  %1626 = vmatmul.mubr.bf16.gmra.mrb[0].mxu0 %v1567
  %v1627 = vpop.f32.mrb[0].mxu0
  %v1628 = vadd.f32 %v1530, %v1627
  %v1629 = vpop.f32.mrb[0].mxu0
  %v1630 = vpop.f32.mrb[0].mxu0
  %v1631 = vadd.f32 %v1530, %v1630
  %v1632 = vpop.f32.mrb[0].mxu0
  %1633 = vdwg.mxu0
  %v1635 = vlaneseq
  %v1636 = vshrl.u32 %v1635, 7
  %v1637 = vsub.s32 0, %v1636
  %v1638 = vrot.slane %v1525, %v1637
  %v1641 = vrot.slane %v1501, 4
  %v1650 = vunpack.c.l.b16 %v1511
  %v1651 = vunpack.c.l.b16 %v1512
  %v1652 = vunpack.c.l.b16 %v1513
  %v1653 = vunpack.c.l.b16 %v1514
  %v1654 = vunpack.c.l.b16 %v1515
  %v1655 = vunpack.c.l.b16 %v1516
  %v1656 = vunpack.c.l.b16 %v1517
  %v1657 = vunpack.c.l.b16 %v1518
  %v1658 = vpack.c.b16 %v1651, %v1650
  %v1659 = vpack.c.b16 %v1653, %v1652
  %v1660 = vpack.c.b16 %v1655, %v1654
  %v1661 = vpack.c.b16 %v1657, %v1656
  %v1667 = vsel %vm1556, %v1641, 0
  %1669 = vmatprep.subr.bf16.mxu0 0
  %1670 = vmatpush1.bf16.msra.mxu0 %v1658
  %1671 = vmatprep.subr.bf16.mxu0 0
  %1672 = vmatpush1.bf16.msra.mxu0 %v1659
  %1673 = vmatprep.subr.bf16.mxu0 0
  %1674 = vmatpush1.bf16.msra.mxu0 %v1660
  %1675 = vmatprep.subr.bf16.mxu0 0
  %1676 = vmatpush1.bf16.msra.mxu0 %v1661
  %1677 = vmatprep.subr.bf16.mxu0 0
  %1678 = vmatpush1.bf16.msra.mxu0 0
  %1679 = vmatprep.subr.bf16.mxu0 0
  %1680 = vmatpush1.bf16.msra.mxu0 0
  %1681 = vmatprep.subr.bf16.mxu0 0
  %1682 = vmatpush1.bf16.msra.mxu0 0
  %1683 = vmatprep.subr.bf16.mxu0 0
  %1684 = vmatpush1.bf16.msra.mxu0 0
  %1685 = vmatprep.subr.bf16.mxu0 0
  %1686 = vmatpush1.bf16.msra.mxu0 0
  %1687 = vmatprep.subr.bf16.mxu0 0
  %1688 = vmatpush1.bf16.msra.mxu0 0
  %1689 = vmatprep.subr.bf16.mxu0 0
  %1690 = vmatpush1.bf16.msra.mxu0 0
  %1691 = vmatprep.subr.bf16.mxu0 0
  %1692 = vmatpush1.bf16.msra.mxu0 0
  %1693 = vmatprep.subr.bf16.mxu0 0
  %1694 = vmatpush1.bf16.msra.mxu0 0
  %1695 = vmatprep.subr.bf16.mxu0 0
  %1696 = vmatpush1.bf16.msra.mxu0 0
  %1697 = vmatprep.subr.bf16.mxu0 0
  %1698 = vmatpush1.bf16.msra.mxu0 0
  %1699 = vmatprep.subr.bf16.mxu0 0
  %1700 = vmatpush1.bf16.msra.mxu0 0
  %1701 = vmatprep.mubr.bf16.mxu0 0
  %1702 = vmatmul.mubr.bf16.gmra.mrb[0].mxu0 %v1667
  %v1703 = vpop.f32.mrb[0].mxu0
  %v1704 = vadd.f32 %v1638, %v1703
  %v1705 = vpop.f32.mrb[0].mxu0
  %v1706 = vpop.f32.mrb[0].mxu0
  %v1707 = vpop.f32.mrb[0].mxu0
  %1708 = vdwg.mxu0
  %v1713 = vunpack.c.l.b16 %v1519
  %v1714 = vunpack.c.l.b16 %v1520
  %v1715 = vunpack.c.l.b16 %v1521
  %v1716 = vunpack.c.l.b16 %v1522
  %v1717 = vpack.c.b16 %v1714, %v1713
  %v1718 = vpack.c.b16 %v1716, %v1715
  %1721 = vmatprep.subr.bf16.mxu0 0
  %1722 = vmatpush1.bf16.msra.mxu0 %v1717
  %1723 = vmatprep.subr.bf16.mxu0 0
  %1724 = vmatpush1.bf16.msra.mxu0 %v1718
  %1725 = vmatprep.subr.bf16.mxu0 0
  %1726 = vmatpush1.bf16.msra.mxu0 0
  %1727 = vmatprep.subr.bf16.mxu0 0
  %1728 = vmatpush1.bf16.msra.mxu0 0
  %1729 = vmatprep.subr.bf16.mxu0 0
  %1730 = vmatpush1.bf16.msra.mxu0 0
  %1731 = vmatprep.subr.bf16.mxu0 0
  %1732 = vmatpush1.bf16.msra.mxu0 0
  %1733 = vmatprep.subr.bf16.mxu0 0
  %1734 = vmatpush1.bf16.msra.mxu0 0
  %1735 = vmatprep.subr.bf16.mxu0 0
  %1736 = vmatpush1.bf16.msra.mxu0 0
  %1737 = vmatprep.subr.bf16.mxu0 0
  %1738 = vmatpush1.bf16.msra.mxu0 0
  %1739 = vmatprep.subr.bf16.mxu0 0
  %1740 = vmatpush1.bf16.msra.mxu0 0
  %1741 = vmatprep.subr.bf16.mxu0 0
  %1742 = vmatpush1.bf16.msra.mxu0 0
  %1743 = vmatprep.subr.bf16.mxu0 0
  %1744 = vmatpush1.bf16.msra.mxu0 0
  %1745 = vmatprep.subr.bf16.mxu0 0
  %1746 = vmatpush1.bf16.msra.mxu0 0
  %1747 = vmatprep.subr.bf16.mxu0 0
  %1748 = vmatpush1.bf16.msra.mxu0 0
  %1749 = vmatprep.subr.bf16.mxu0 0
  %1750 = vmatpush1.bf16.msra.mxu0 0
  %1751 = vmatprep.subr.bf16.mxu0 0
  %1752 = vmatpush1.bf16.msra.mxu0 0
  %1753 = vmatprep.mubr.bf16.mxu0 0
  %1754 = vmatmul.mubr.bf16.gmra.mrb[0].mxu0 %v274
  %v1755 = vpop.f32.mrb[0].mxu0
  %v1756 = vadd.f32 0.0, %v1755
  %v1757 = vpop.f32.mrb[0].mxu0
  %v1758 = vpop.f32.mrb[0].mxu0
  %v1759 = vpop.f32.mrb[0].mxu0
  %1760 = vdwg.mxu0
  %v1761 = vadd.f32 %v1604, %v1756
  %v1762 = vxor.u32 %v1761, 2147483648
  %v1763 = vmul.f32 %v1762, 1.442695
  %v1764 = vpow.pop %v1763
  %v1765 = vadd.f32 %v1764, 1.0
  %v1766 = vrcp.pop %v1765
  %v1767 = vmul.f32 1.0, %v1766
  %v1768 = vtanh.pop %v1761
  %v1769 = vmul.f32 %v1767, 0.0
  %1771 = vrot.lane.b32.xlu0 %v1768, 64
  %v1772 = vpop.permute.xlu0 %1771
  %v1774 = vmul.f32 %v1767, %v1772
  %1776 = vrot.lane.b32.xlu0 %v1774, 32
  %v1777 = vpop.permute.xlu0 %1776
  %v1779 = vadd.f32 %v1769, %v1777
  %v1780 = vtanh.pop %v1779
  %1782 = vrot.lane.b32.xlu0 %v1780, 64
  %v1783 = vpop.permute.xlu0 %1782
  %v1785 = vmul.f32 %v1767, %v1783
  %v1786 = vpack.c.bf16 %v1785, %v1785
  %1788 = vrot.lane.b32.xlu0 %v1786, 32
  %v1789 = vpop.permute.xlu0 %1788
  %v1791 = vsel %vm100, %v1789, 0
  %1793 = vmatprep.subr.bf16.mxu0 0
  %1794 = vmatpush1.bf16.msra.mxu0 %v1717
  %1795 = vmatprep.subr.bf16.mxu0 0
  %1796 = vmatpush1.bf16.msra.mxu0 %v1718
  %1797 = vmatprep.subr.bf16.mxu0 0
  %1798 = vmatpush1.bf16.msra.mxu0 0
  %1799 = vmatprep.subr.bf16.mxu0 0
  %1800 = vmatpush1.bf16.msra.mxu0 0
  %1801 = vmatprep.subr.bf16.mxu0 0
  %1802 = vmatpush1.bf16.msra.mxu0 0
  %1803 = vmatprep.subr.bf16.mxu0 0
  %1804 = vmatpush1.bf16.msra.mxu0 0
  %1805 = vmatprep.subr.bf16.mxu0 0
  %1806 = vmatpush1.bf16.msra.mxu0 0
  %1807 = vmatprep.subr.bf16.mxu0 0
  %1808 = vmatpush1.bf16.msra.mxu0 0
  %1809 = vmatprep.subr.bf16.mxu0 0
  %1810 = vmatpush1.bf16.msra.mxu0 0
  %1811 = vmatprep.subr.bf16.mxu0 0
  %1812 = vmatpush1.bf16.msra.mxu0 0
  %1813 = vmatprep.subr.bf16.mxu0 0
  %1814 = vmatpush1.bf16.msra.mxu0 0
  %1815 = vmatprep.subr.bf16.mxu0 0
  %1816 = vmatpush1.bf16.msra.mxu0 0
  %1817 = vmatprep.subr.bf16.mxu0 0
  %1818 = vmatpush1.bf16.msra.mxu0 0
  %1819 = vmatprep.subr.bf16.mxu0 0
  %1820 = vmatpush1.bf16.msra.mxu0 0
  %1821 = vmatprep.subr.bf16.mxu0 0
  %1822 = vmatpush1.bf16.msra.mxu0 0
  %1823 = vmatprep.subr.bf16.mxu0 0
  %1824 = vmatpush1.bf16.msra.mxu0 0
  %1825 = vmatprep.mubr.bf16.mxu0 0
  %1826 = vmatmul.mubr.bf16.gmra.mrb[0].mxu0 %v1791
  %v1827 = vpop.f32.mrb[0].mxu0
  %v1828 = vadd.f32 0.0, %v1827
  %v1829 = vpop.f32.mrb[0].mxu0
  %v1830 = vpop.f32.mrb[0].mxu0
  %v1831 = vpop.f32.mrb[0].mxu0
  %1832 = vdwg.mxu0
  %v1833 = vadd.f32 %v1607, %v1828
  %v1834 = vxor.u32 %v1833, 2147483648
  %v1835 = vmul.f32 %v1834, 1.442695
  %v1836 = vpow.pop %v1835
  %v1837 = vadd.f32 %v1836, 1.0
  %v1838 = vrcp.pop %v1837
  %v1839 = vmul.f32 1.0, %v1838
  %v1840 = vtanh.pop %v1833
  %v1841 = vmul.f32 %v1839, %v1779
  %1843 = vrot.lane.b32.xlu0 %v1840, 64
  %v1844 = vpop.permute.xlu0 %1843
  %v1846 = vmul.f32 %v1839, %v1844
  %1848 = vrot.lane.b32.xlu0 %v1846, 32
  %v1849 = vpop.permute.xlu0 %1848
  %v1851 = vadd.f32 %v1841, %v1849
  %v1852 = vtanh.pop %v1851
  %1854 = vrot.lane.b32.xlu0 %v1852, 64
  %v1855 = vpop.permute.xlu0 %1854
  %v1857 = vmul.f32 %v1839, %v1855
  %v1858 = vpack.c.bf16 %v1857, %v1857
  %1860 = vrot.lane.b32.xlu0 %v1858, 32
  %v1861 = vpop.permute.xlu0 %1860
  %v1863 = vsel %vm100, %v1861, 0
  %1865 = vmatprep.subr.bf16.mxu0 0
  %1866 = vmatpush1.bf16.msra.mxu0 %v1717
  %1867 = vmatprep.subr.bf16.mxu0 0
  %1868 = vmatpush1.bf16.msra.mxu0 %v1718
  %1869 = vmatprep.subr.bf16.mxu0 0
  %1870 = vmatpush1.bf16.msra.mxu0 0
  %1871 = vmatprep.subr.bf16.mxu0 0
  %1872 = vmatpush1.bf16.msra.mxu0 0
  %1873 = vmatprep.subr.bf16.mxu0 0
  %1874 = vmatpush1.bf16.msra.mxu0 0
  %1875 = vmatprep.subr.bf16.mxu0 0
  %1876 = vmatpush1.bf16.msra.mxu0 0
  %1877 = vmatprep.subr.bf16.mxu0 0
  %1878 = vmatpush1.bf16.msra.mxu0 0
  %1879 = vmatprep.subr.bf16.mxu0 0
  %1880 = vmatpush1.bf16.msra.mxu0 0
  %1881 = vmatprep.subr.bf16.mxu0 0
  %1882 = vmatpush1.bf16.msra.mxu0 0
  %1883 = vmatprep.subr.bf16.mxu0 0
  %1884 = vmatpush1.bf16.msra.mxu0 0
  %1885 = vmatprep.subr.bf16.mxu0 0
  %1886 = vmatpush1.bf16.msra.mxu0 0
  %1887 = vmatprep.subr.bf16.mxu0 0
  %1888 = vmatpush1.bf16.msra.mxu0 0
  %1889 = vmatprep.subr.bf16.mxu0 0
  %1890 = vmatpush1.bf16.msra.mxu0 0
  %1891 = vmatprep.subr.bf16.mxu0 0
  %1892 = vmatpush1.bf16.msra.mxu0 0
  %1893 = vmatprep.subr.bf16.mxu0 0
  %1894 = vmatpush1.bf16.msra.mxu0 0
  %1895 = vmatprep.subr.bf16.mxu0 0
  %1896 = vmatpush1.bf16.msra.mxu0 0
  %1897 = vmatprep.mubr.bf16.mxu0 0
  %1898 = vmatmul.mubr.bf16.gmra.mrb[0].mxu0 %v1863
  %v1899 = vpop.f32.mrb[0].mxu0
  %v1900 = vadd.f32 0.0, %v1899
  %v1901 = vpop.f32.mrb[0].mxu0
  %v1902 = vpop.f32.mrb[0].mxu0
  %v1903 = vpop.f32.mrb[0].mxu0
  %1904 = vdwg.mxu0
  %v1905 = vadd.f32 %v1612, %v1900
  %v1906 = vxor.u32 %v1905, 2147483648
  %v1907 = vmul.f32 %v1906, 1.442695
  %v1908 = vpow.pop %v1907
  %v1909 = vadd.f32 %v1908, 1.0
  %v1910 = vrcp.pop %v1909
  %v1911 = vmul.f32 1.0, %v1910
  %v1912 = vtanh.pop %v1905
  %v1913 = vmul.f32 %v1911, %v1851
  %1915 = vrot.lane.b32.xlu0 %v1912, 64
  %v1916 = vpop.permute.xlu0 %1915
  %v1918 = vmul.f32 %v1911, %v1916
  %1920 = vrot.lane.b32.xlu0 %v1918, 32
  %v1921 = vpop.permute.xlu0 %1920
  %v1923 = vadd.f32 %v1913, %v1921
  %v1924 = vtanh.pop %v1923
  %1926 = vrot.lane.b32.xlu0 %v1924, 64
  %v1927 = vpop.permute.xlu0 %1926
  %v1929 = vmul.f32 %v1911, %v1927
  %v1930 = vpack.c.bf16 %v1929, %v1929
  %1932 = vrot.lane.b32.xlu0 %v1930, 32
  %v1933 = vpop.permute.xlu0 %1932
  %v1935 = vsel %vm100, %v1933, 0
  %1937 = vmatprep.subr.bf16.mxu0 0
  %1938 = vmatpush1.bf16.msra.mxu0 %v1717
  %1939 = vmatprep.subr.bf16.mxu0 0
  %1940 = vmatpush1.bf16.msra.mxu0 %v1718
  %1941 = vmatprep.subr.bf16.mxu0 0
  %1942 = vmatpush1.bf16.msra.mxu0 0
  %1943 = vmatprep.subr.bf16.mxu0 0
  %1944 = vmatpush1.bf16.msra.mxu0 0
  %1945 = vmatprep.subr.bf16.mxu0 0
  %1946 = vmatpush1.bf16.msra.mxu0 0
  %1947 = vmatprep.subr.bf16.mxu0 0
  %1948 = vmatpush1.bf16.msra.mxu0 0
  %1949 = vmatprep.subr.bf16.mxu0 0
  %1950 = vmatpush1.bf16.msra.mxu0 0
  %1951 = vmatprep.subr.bf16.mxu0 0
  %1952 = vmatpush1.bf16.msra.mxu0 0
  %1953 = vmatprep.subr.bf16.mxu0 0
  %1954 = vmatpush1.bf16.msra.mxu0 0
  %1955 = vmatprep.subr.bf16.mxu0 0
  %1956 = vmatpush1.bf16.msra.mxu0 0
  %1957 = vmatprep.subr.bf16.mxu0 0
  %1958 = vmatpush1.bf16.msra.mxu0 0
  %1959 = vmatprep.subr.bf16.mxu0 0
  %1960 = vmatpush1.bf16.msra.mxu0 0
  %1961 = vmatprep.subr.bf16.mxu0 0
  %1962 = vmatpush1.bf16.msra.mxu0 0
  %1963 = vmatprep.subr.bf16.mxu0 0
  %1964 = vmatpush1.bf16.msra.mxu0 0
  %1965 = vmatprep.subr.bf16.mxu0 0
  %1966 = vmatpush1.bf16.msra.mxu0 0
  %1967 = vmatprep.subr.bf16.mxu0 0
  %1968 = vmatpush1.bf16.msra.mxu0 0
  %1969 = vmatprep.mubr.bf16.mxu0 0
  %1970 = vmatmul.mubr.bf16.gmra.mrb[0].mxu0 %v1935
  %v1971 = vpop.f32.mrb[0].mxu0
  %v1972 = vadd.f32 0.0, %v1971
  %v1973 = vpop.f32.mrb[0].mxu0
  %v1974 = vpop.f32.mrb[0].mxu0
  %v1975 = vpop.f32.mrb[0].mxu0
  %1976 = vdwg.mxu0
  %v1977 = vadd.f32 %v1615, %v1972
  %v1978 = vxor.u32 %v1977, 2147483648
  %v1979 = vmul.f32 %v1978, 1.442695
  %v1980 = vpow.pop %v1979
  %v1981 = vadd.f32 %v1980, 1.0
  %v1982 = vrcp.pop %v1981
  %v1983 = vmul.f32 1.0, %v1982
  %v1984 = vtanh.pop %v1977
  %v1985 = vmul.f32 %v1983, %v1923
  %1987 = vrot.lane.b32.xlu0 %v1984, 64
  %v1988 = vpop.permute.xlu0 %1987
  %v1990 = vmul.f32 %v1983, %v1988
  %1992 = vrot.lane.b32.xlu0 %v1990, 32
  %v1993 = vpop.permute.xlu0 %1992
  %v1995 = vadd.f32 %v1985, %v1993
  %v1996 = vtanh.pop %v1995
  %1998 = vrot.lane.b32.xlu0 %v1996, 64
  %v1999 = vpop.permute.xlu0 %1998
  %v2001 = vmul.f32 %v1983, %v1999
  %v2002 = vpack.c.bf16 %v2001, %v2001
  %2004 = vrot.lane.b32.xlu0 %v2002, 32
  %v2005 = vpop.permute.xlu0 %2004
  %v2007 = vsel %vm100, %v2005, 0
  %2009 = vmatprep.subr.bf16.mxu0 0
  %2010 = vmatpush1.bf16.msra.mxu0 %v1717
  %2011 = vmatprep.subr.bf16.mxu0 0
  %2012 = vmatpush1.bf16.msra.mxu0 %v1718
  %2013 = vmatprep.subr.bf16.mxu0 0
  %2014 = vmatpush1.bf16.msra.mxu0 0
  %2015 = vmatprep.subr.bf16.mxu0 0
  %2016 = vmatpush1.bf16.msra.mxu0 0
  %2017 = vmatprep.subr.bf16.mxu0 0
  %2018 = vmatpush1.bf16.msra.mxu0 0
  %2019 = vmatprep.subr.bf16.mxu0 0
  %2020 = vmatpush1.bf16.msra.mxu0 0
  %2021 = vmatprep.subr.bf16.mxu0 0
  %2022 = vmatpush1.bf16.msra.mxu0 0
  %2023 = vmatprep.subr.bf16.mxu0 0
  %2024 = vmatpush1.bf16.msra.mxu0 0
  %2025 = vmatprep.subr.bf16.mxu0 0
  %2026 = vmatpush1.bf16.msra.mxu0 0
  %2027 = vmatprep.subr.bf16.mxu0 0
  %2028 = vmatpush1.bf16.msra.mxu0 0
  %2029 = vmatprep.subr.bf16.mxu0 0
  %2030 = vmatpush1.bf16.msra.mxu0 0
  %2031 = vmatprep.subr.bf16.mxu0 0
  %2032 = vmatpush1.bf16.msra.mxu0 0
  %2033 = vmatprep.subr.bf16.mxu0 0
  %2034 = vmatpush1.bf16.msra.mxu0 0
  %2035 = vmatprep.subr.bf16.mxu0 0
  %2036 = vmatpush1.bf16.msra.mxu0 0
  %2037 = vmatprep.subr.bf16.mxu0 0
  %2038 = vmatpush1.bf16.msra.mxu0 0
  %2039 = vmatprep.subr.bf16.mxu0 0
  %2040 = vmatpush1.bf16.msra.mxu0 0
  %2041 = vmatprep.mubr.bf16.mxu0 0
  %2042 = vmatmul.mubr.bf16.gmra.mrb[0].mxu0 %v2007
  %v2043 = vpop.f32.mrb[0].mxu0
  %v2044 = vadd.f32 0.0, %v2043
  %v2045 = vpop.f32.mrb[0].mxu0
  %v2046 = vpop.f32.mrb[0].mxu0
  %v2047 = vpop.f32.mrb[0].mxu0
  %2048 = vdwg.mxu0
  %v2049 = vadd.f32 %v1620, %v2044
  %v2050 = vxor.u32 %v2049, 2147483648
  %v2051 = vmul.f32 %v2050, 1.442695
  %v2052 = vpow.pop %v2051
  %v2053 = vadd.f32 %v2052, 1.0
  %v2054 = vrcp.pop %v2053
  %v2055 = vmul.f32 1.0, %v2054
  %v2056 = vtanh.pop %v2049
  %v2057 = vmul.f32 %v2055, %v1995
  %2059 = vrot.lane.b32.xlu0 %v2056, 64
  %v2060 = vpop.permute.xlu0 %2059
  %v2062 = vmul.f32 %v2055, %v2060
  %2064 = vrot.lane.b32.xlu0 %v2062, 32
  %v2065 = vpop.permute.xlu0 %2064
  %v2067 = vadd.f32 %v2057, %v2065
  %v2068 = vtanh.pop %v2067
  %2070 = vrot.lane.b32.xlu0 %v2068, 64
  %v2071 = vpop.permute.xlu0 %2070
  %v2073 = vmul.f32 %v2055, %v2071
  %v2074 = vpack.c.bf16 %v2073, %v2073
  %2076 = vrot.lane.b32.xlu0 %v2074, 32
  %v2077 = vpop.permute.xlu0 %2076
  %v2079 = vsel %vm100, %v2077, 0
  %2081 = vmatprep.subr.bf16.mxu0 0
  %2082 = vmatpush1.bf16.msra.mxu0 %v1717
  %2083 = vmatprep.subr.bf16.mxu0 0
  %2084 = vmatpush1.bf16.msra.mxu0 %v1718
  %2085 = vmatprep.subr.bf16.mxu0 0
  %2086 = vmatpush1.bf16.msra.mxu0 0
  %2087 = vmatprep.subr.bf16.mxu0 0
  %2088 = vmatpush1.bf16.msra.mxu0 0
  %2089 = vmatprep.subr.bf16.mxu0 0
  %2090 = vmatpush1.bf16.msra.mxu0 0
  %2091 = vmatprep.subr.bf16.mxu0 0
  %2092 = vmatpush1.bf16.msra.mxu0 0
  %2093 = vmatprep.subr.bf16.mxu0 0
  %2094 = vmatpush1.bf16.msra.mxu0 0
  %2095 = vmatprep.subr.bf16.mxu0 0
  %2096 = vmatpush1.bf16.msra.mxu0 0
  %2097 = vmatprep.subr.bf16.mxu0 0
  %2098 = vmatpush1.bf16.msra.mxu0 0
  %2099 = vmatprep.subr.bf16.mxu0 0
  %2100 = vmatpush1.bf16.msra.mxu0 0
  %2101 = vmatprep.subr.bf16.mxu0 0
  %2102 = vmatpush1.bf16.msra.mxu0 0
  %2103 = vmatprep.subr.bf16.mxu0 0
  %2104 = vmatpush1.bf16.msra.mxu0 0
  %2105 = vmatprep.subr.bf16.mxu0 0
  %2106 = vmatpush1.bf16.msra.mxu0 0
  %2107 = vmatprep.subr.bf16.mxu0 0
  %2108 = vmatpush1.bf16.msra.mxu0 0
  %2109 = vmatprep.subr.bf16.mxu0 0
  %2110 = vmatpush1.bf16.msra.mxu0 0
  %2111 = vmatprep.subr.bf16.mxu0 0
  %2112 = vmatpush1.bf16.msra.mxu0 0
  %2113 = vmatprep.mubr.bf16.mxu0 0
  %2114 = vmatmul.mubr.bf16.gmra.mrb[0].mxu0 %v2079
  %v2115 = vpop.f32.mrb[0].mxu0
  %v2116 = vadd.f32 0.0, %v2115
  %v2117 = vpop.f32.mrb[0].mxu0
  %v2118 = vpop.f32.mrb[0].mxu0
  %v2119 = vpop.f32.mrb[0].mxu0
  %2120 = vdwg.mxu0
  %v2121 = vadd.f32 %v1623, %v2116
  %v2122 = vxor.u32 %v2121, 2147483648
  %v2123 = vmul.f32 %v2122, 1.442695
  %v2124 = vpow.pop %v2123
  %v2125 = vadd.f32 %v2124, 1.0
  %v2126 = vrcp.pop %v2125
  %v2127 = vmul.f32 1.0, %v2126
  %v2128 = vtanh.pop %v2121
  %v2129 = vmul.f32 %v2127, %v2067
  %2131 = vrot.lane.b32.xlu0 %v2128, 64
  %v2132 = vpop.permute.xlu0 %2131
  %v2134 = vmul.f32 %v2127, %v2132
  %2136 = vrot.lane.b32.xlu0 %v2134, 32
  %v2137 = vpop.permute.xlu0 %2136
  %v2139 = vadd.f32 %v2129, %v2137
  %v2140 = vtanh.pop %v2139
  %2142 = vrot.lane.b32.xlu0 %v2140, 64
  %v2143 = vpop.permute.xlu0 %2142
  %v2145 = vmul.f32 %v2127, %v2143
  %v2146 = vpack.c.bf16 %v2145, %v2145
  %2148 = vrot.lane.b32.xlu0 %v2146, 32
  %v2149 = vpop.permute.xlu0 %2148
  %v2151 = vsel %vm100, %v2149, 0
  %2153 = vmatprep.subr.bf16.mxu0 0
  %2154 = vmatpush1.bf16.msra.mxu0 %v1717
  %2155 = vmatprep.subr.bf16.mxu0 0
  %2156 = vmatpush1.bf16.msra.mxu0 %v1718
  %2157 = vmatprep.subr.bf16.mxu0 0
  %2158 = vmatpush1.bf16.msra.mxu0 0
  %2159 = vmatprep.subr.bf16.mxu0 0
  %2160 = vmatpush1.bf16.msra.mxu0 0
  %2161 = vmatprep.subr.bf16.mxu0 0
  %2162 = vmatpush1.bf16.msra.mxu0 0
  %2163 = vmatprep.subr.bf16.mxu0 0
  %2164 = vmatpush1.bf16.msra.mxu0 0
  %2165 = vmatprep.subr.bf16.mxu0 0
  %2166 = vmatpush1.bf16.msra.mxu0 0
  %2167 = vmatprep.subr.bf16.mxu0 0
  %2168 = vmatpush1.bf16.msra.mxu0 0
  %2169 = vmatprep.subr.bf16.mxu0 0
  %2170 = vmatpush1.bf16.msra.mxu0 0
  %2171 = vmatprep.subr.bf16.mxu0 0
  %2172 = vmatpush1.bf16.msra.mxu0 0
  %2173 = vmatprep.subr.bf16.mxu0 0
  %2174 = vmatpush1.bf16.msra.mxu0 0
  %2175 = vmatprep.subr.bf16.mxu0 0
  %2176 = vmatpush1.bf16.msra.mxu0 0
  %2177 = vmatprep.subr.bf16.mxu0 0
  %2178 = vmatpush1.bf16.msra.mxu0 0
  %2179 = vmatprep.subr.bf16.mxu0 0
  %2180 = vmatpush1.bf16.msra.mxu0 0
  %2181 = vmatprep.subr.bf16.mxu0 0
  %2182 = vmatpush1.bf16.msra.mxu0 0
  %2183 = vmatprep.subr.bf16.mxu0 0
  %2184 = vmatpush1.bf16.msra.mxu0 0
  %2185 = vmatprep.mubr.bf16.mxu0 0
  %2186 = vmatmul.mubr.bf16.gmra.mrb[0].mxu0 %v2151
  %v2187 = vpop.f32.mrb[0].mxu0
  %v2188 = vadd.f32 0.0, %v2187
  %v2189 = vpop.f32.mrb[0].mxu0
  %v2190 = vpop.f32.mrb[0].mxu0
  %v2191 = vpop.f32.mrb[0].mxu0
  %2192 = vdwg.mxu0
  %v2193 = vadd.f32 %v1628, %v2188
  %v2194 = vxor.u32 %v2193, 2147483648
  %v2195 = vmul.f32 %v2194, 1.442695
  %v2196 = vpow.pop %v2195
  %v2197 = vadd.f32 %v2196, 1.0
  %v2198 = vrcp.pop %v2197
  %v2199 = vmul.f32 1.0, %v2198
  %v2200 = vtanh.pop %v2193
  %v2201 = vmul.f32 %v2199, %v2139
  %2203 = vrot.lane.b32.xlu0 %v2200, 64
  %v2204 = vpop.permute.xlu0 %2203
  %v2206 = vmul.f32 %v2199, %v2204
  %2208 = vrot.lane.b32.xlu0 %v2206, 32
  %v2209 = vpop.permute.xlu0 %2208
  %v2211 = vadd.f32 %v2201, %v2209
  %v2212 = vtanh.pop %v2211
  %2214 = vrot.lane.b32.xlu0 %v2212, 64
  %v2215 = vpop.permute.xlu0 %2214
  %v2217 = vmul.f32 %v2199, %v2215
  %v2218 = vpack.c.bf16 %v2217, %v2217
  %2220 = vrot.lane.b32.xlu0 %v2218, 32
  %v2221 = vpop.permute.xlu0 %2220
  %v2223 = vsel %vm100, %v2221, 0
  %2225 = vmatprep.subr.bf16.mxu0 0
  %2226 = vmatpush1.bf16.msra.mxu0 %v1717
  %2227 = vmatprep.subr.bf16.mxu0 0
  %2228 = vmatpush1.bf16.msra.mxu0 %v1718
  %2229 = vmatprep.subr.bf16.mxu0 0
  %2230 = vmatpush1.bf16.msra.mxu0 0
  %2231 = vmatprep.subr.bf16.mxu0 0
  %2232 = vmatpush1.bf16.msra.mxu0 0
  %2233 = vmatprep.subr.bf16.mxu0 0
  %2234 = vmatpush1.bf16.msra.mxu0 0
  %2235 = vmatprep.subr.bf16.mxu0 0
  %2236 = vmatpush1.bf16.msra.mxu0 0
  %2237 = vmatprep.subr.bf16.mxu0 0
  %2238 = vmatpush1.bf16.msra.mxu0 0
  %2239 = vmatprep.subr.bf16.mxu0 0
  %2240 = vmatpush1.bf16.msra.mxu0 0
  %2241 = vmatprep.subr.bf16.mxu0 0
  %2242 = vmatpush1.bf16.msra.mxu0 0
  %2243 = vmatprep.subr.bf16.mxu0 0
  %2244 = vmatpush1.bf16.msra.mxu0 0
  %2245 = vmatprep.subr.bf16.mxu0 0
  %2246 = vmatpush1.bf16.msra.mxu0 0
  %2247 = vmatprep.subr.bf16.mxu0 0
  %2248 = vmatpush1.bf16.msra.mxu0 0
  %2249 = vmatprep.subr.bf16.mxu0 0
  %2250 = vmatpush1.bf16.msra.mxu0 0
  %2251 = vmatprep.subr.bf16.mxu0 0
  %2252 = vmatpush1.bf16.msra.mxu0 0
  %2253 = vmatprep.subr.bf16.mxu0 0
  %2254 = vmatpush1.bf16.msra.mxu0 0
  %2255 = vmatprep.subr.bf16.mxu0 0
  %2256 = vmatpush1.bf16.msra.mxu0 0
  %2257 = vmatprep.mubr.bf16.mxu0 0
  %2258 = vmatmul.mubr.bf16.gmra.mrb[0].mxu0 %v2223
  %v2259 = vpop.f32.mrb[0].mxu0
  %v2260 = vadd.f32 0.0, %v2259
  %v2261 = vpop.f32.mrb[0].mxu0
  %v2262 = vpop.f32.mrb[0].mxu0
  %v2263 = vpop.f32.mrb[0].mxu0
  %2264 = vdwg.mxu0
  %v2265 = vadd.f32 %v1631, %v2260
  %v2266 = vxor.u32 %v2265, 2147483648
  %v2267 = vmul.f32 %v2266, 1.442695
  %v2268 = vpow.pop %v2267
  %v2269 = vadd.f32 %v2268, 1.0
  %v2270 = vrcp.pop %v2269
  %v2271 = vmul.f32 1.0, %v2270
  %v2272 = vtanh.pop %v2265
  %v2273 = vmul.f32 %v2271, %v2211
  %2275 = vrot.lane.b32.xlu0 %v2272, 64
  %v2276 = vpop.permute.xlu0 %2275
  %v2278 = vmul.f32 %v2271, %v2276
  %2280 = vrot.lane.b32.xlu0 %v2278, 32
  %v2281 = vpop.permute.xlu0 %2280
  %v2283 = vadd.f32 %v2273, %v2281
  %v2284 = vtanh.pop %v2283
  %2286 = vrot.lane.b32.xlu0 %v2284, 64
  %v2287 = vpop.permute.xlu0 %2286
  %v2289 = vmul.f32 %v2271, %v2287
  %v2290 = vxor.u32 %v1704, 2147483648
  %v2291 = vmul.f32 %v2290, 1.442695
  %v2292 = vpow.pop %v2291
  %v2293 = vadd.f32 %v2292, 1.0
  %v2294 = vrcp.pop %v2293
  %v2295 = vmul.f32 1.0, %v2294
  %v2296 = vtanh.pop %v1704
  %2298 = vrot.lane.b32.xlu0 %v2296, 64
  %v2299 = vpop.permute.xlu0 %2298
  %v2301 = vmul.f32 %v2295, %v2299
  %v2302 = vtanh.pop %v2301
  %2304 = vrot.lane.b32.xlu0 %v2302, 96
  %v2305 = vpop.permute.xlu0 %2304
  %v2307 = vmul.f32 %v2295, %v2305
  %v2308 = vld [vmem:[%s7] sm:$0xff]
  %v2309 = vld [vmem:[%s7 + $0x8] sm:$0xff]
  %v2310 = vld [vmem:[%s7 + $0x10] sm:$0xff]
  %v2311 = vld [vmem:[%s7 + $0x18] sm:$0xff]
  %v2312 = vld [vmem:[%s7 + $0x20] sm:$0xff]
  %v2313 = vld [vmem:[%s7 + $0x28] sm:$0xff]
  %v2314 = vld [vmem:[%s7 + $0x30] sm:$0xff]
  %v2315 = vld [vmem:[%s7 + $0x38] sm:$0xff]
  %2317 = vrot.lane.b32.xlu0 %v2307, 32
  %v2318 = vpop.permute.xlu0 %2317
  %v2319 = vsel %vm100, %v2318, 0
  %2321 = vmatprep.subr.mxu0 0.0
  %2322 = vmatpush1.msra.mxu0 %v2312
  %2323 = vmatprep.subr.mxu0 0.0
  %2324 = vmatpush1.msra.mxu0 %v2313
  %2325 = vmatprep.subr.mxu0 0.0
  %2326 = vmatpush1.msra.mxu0 %v2314
  %2327 = vmatprep.subr.mxu0 0.0
  %2328 = vmatpush1.msra.mxu0 %v2315
  %2329 = vmatprep.subr.mxu0 0.0
  %2330 = vmatpush1.msra.mxu0 0.0
  %2331 = vmatprep.subr.mxu0 0.0
  %2332 = vmatpush1.msra.mxu0 0.0
  %2333 = vmatprep.subr.mxu0 0.0
  %2334 = vmatpush1.msra.mxu0 0.0
  %2335 = vmatprep.subr.mxu0 0.0
  %2336 = vmatpush1.msra.mxu0 0.0
  %2337 = vmatprep.subr.mxu0 0.0
  %2338 = vmatpush1.msra.mxu0 0.0
  %2339 = vmatprep.subr.mxu0 0.0
  %2340 = vmatpush1.msra.mxu0 0.0
  %2341 = vmatprep.subr.mxu0 0.0
  %2342 = vmatpush1.msra.mxu0 0.0
  %2343 = vmatprep.subr.mxu0 0.0
  %2344 = vmatpush1.msra.mxu0 0.0
  %2345 = vmatprep.subr.mxu0 0.0
  %2346 = vmatpush1.msra.mxu0 0.0
  %2347 = vmatprep.subr.mxu0 0.0
  %2348 = vmatpush1.msra.mxu0 0.0
  %2349 = vmatprep.subr.mxu0 0.0
  %2350 = vmatpush1.msra.mxu0 0.0
  %2351 = vmatprep.subr.mxu0 0.0
  %2352 = vmatpush1.msra.mxu0 0.0
  %2353 = vmatprep.subr.mxu0 0.0
  %2354 = vmatpush1.msra.mxu0 0.0
  %2355 = vmatprep.subr.mxu0 0.0
  %2356 = vmatpush1.msra.mxu0 0.0
  %2357 = vmatprep.subr.mxu0 0.0
  %2358 = vmatpush1.msra.mxu0 0.0
  %2359 = vmatprep.subr.mxu0 0.0
  %2360 = vmatpush1.msra.mxu0 0.0
  %2361 = vmatprep.subr.mxu0 0.0
  %2362 = vmatpush1.msra.mxu0 0.0
  %2363 = vmatprep.subr.mxu0 0.0
  %2364 = vmatpush1.msra.mxu0 0.0
  %2365 = vmatprep.subr.mxu0 0.0
  %2366 = vmatpush1.msra.mxu0 0.0
  %2367 = vmatprep.subr.mxu0 0.0
  %2368 = vmatpush1.msra.mxu0 0.0
  %2369 = vmatprep.subr.mxu0 0.0
  %2370 = vmatpush1.msra.mxu0 0.0
  %2371 = vmatprep.subr.mxu0 0.0
  %2372 = vmatpush1.msra.mxu0 0.0
  %2373 = vmatprep.subr.mxu0 0.0
  %2374 = vmatpush1.msra.mxu0 0.0
  %2375 = vmatprep.subr.mxu0 0.0
  %2376 = vmatpush1.msra.mxu0 0.0
  %2377 = vmatprep.subr.mxu0 0.0
  %2378 = vmatpush1.msra.mxu0 0.0
  %2379 = vmatprep.subr.mxu0 0.0
  %2380 = vmatpush1.msra.mxu0 0.0
  %2381 = vmatprep.subr.mxu0 0.0
  %2382 = vmatpush1.msra.mxu0 0.0
  %2383 = vmatprep.subr.mxu0 0.0
  %2384 = vmatpush1.msra.mxu0 0.0
  %2385 = vmatprep.mubr.f32.mxu0 0.0
  %2386 = vmatmul.mubr.f32.gmra.mrb[0].mxu0 %v2319
  %v2387 = vpop.f32.mrb[0].mxu0
  %v2388 = vadd.f32 0.0, %v2387
  %v2389 = vpop.f32.mrb[0].mxu0
  %2390 = vdwg.mxu0
  %2392 = vrot.lane.b32.xlu0 %v2289, 32
  %v2393 = vpop.permute.xlu0 %2392
  %v2394 = vsel %vm100, %v2393, 0
  %2396 = vmatprep.subr.mxu0 0.0
  %2397 = vmatpush1.msra.mxu0 %v2308
  %2398 = vmatprep.subr.mxu0 0.0
  %2399 = vmatpush1.msra.mxu0 %v2309
  %2400 = vmatprep.subr.mxu0 0.0
  %2401 = vmatpush1.msra.mxu0 %v2310
  %2402 = vmatprep.subr.mxu0 0.0
  %2403 = vmatpush1.msra.mxu0 %v2311
  %2404 = vmatprep.subr.mxu0 0.0
  %2405 = vmatpush1.msra.mxu0 0.0
  %2406 = vmatprep.subr.mxu0 0.0
  %2407 = vmatpush1.msra.mxu0 0.0
  %2408 = vmatprep.subr.mxu0 0.0
  %2409 = vmatpush1.msra.mxu0 0.0
  %2410 = vmatprep.subr.mxu0 0.0
  %2411 = vmatpush1.msra.mxu0 0.0
  %2412 = vmatprep.subr.mxu0 0.0
  %2413 = vmatpush1.msra.mxu0 0.0
  %2414 = vmatprep.subr.mxu0 0.0
  %2415 = vmatpush1.msra.mxu0 0.0
  %2416 = vmatprep.subr.mxu0 0.0
  %2417 = vmatpush1.msra.mxu0 0.0
  %2418 = vmatprep.subr.mxu0 0.0
  %2419 = vmatpush1.msra.mxu0 0.0
  %2420 = vmatprep.subr.mxu0 0.0
  %2421 = vmatpush1.msra.mxu0 0.0
  %2422 = vmatprep.subr.mxu0 0.0
  %2423 = vmatpush1.msra.mxu0 0.0
  %2424 = vmatprep.subr.mxu0 0.0
  %2425 = vmatpush1.msra.mxu0 0.0
  %2426 = vmatprep.subr.mxu0 0.0
  %2427 = vmatpush1.msra.mxu0 0.0
  %2428 = vmatprep.subr.mxu0 0.0
  %2429 = vmatpush1.msra.mxu0 0.0
  %2430 = vmatprep.subr.mxu0 0.0
  %2431 = vmatpush1.msra.mxu0 0.0
  %2432 = vmatprep.subr.mxu0 0.0
  %2433 = vmatpush1.msra.mxu0 0.0
  %2434 = vmatprep.subr.mxu0 0.0
  %2435 = vmatpush1.msra.mxu0 0.0
  %2436 = vmatprep.subr.mxu0 0.0
  %2437 = vmatpush1.msra.mxu0 0.0
  %2438 = vmatprep.subr.mxu0 0.0
  %2439 = vmatpush1.msra.mxu0 0.0
  %2440 = vmatprep.subr.mxu0 0.0
  %2441 = vmatpush1.msra.mxu0 0.0
  %2442 = vmatprep.subr.mxu0 0.0
  %2443 = vmatpush1.msra.mxu0 0.0
  %2444 = vmatprep.subr.mxu0 0.0
  %2445 = vmatpush1.msra.mxu0 0.0
  %2446 = vmatprep.subr.mxu0 0.0
  %2447 = vmatpush1.msra.mxu0 0.0
  %2448 = vmatprep.subr.mxu0 0.0
  %2449 = vmatpush1.msra.mxu0 0.0
  %2450 = vmatprep.subr.mxu0 0.0
  %2451 = vmatpush1.msra.mxu0 0.0
  %2452 = vmatprep.subr.mxu0 0.0
  %2453 = vmatpush1.msra.mxu0 0.0
  %2454 = vmatprep.subr.mxu0 0.0
  %2455 = vmatpush1.msra.mxu0 0.0
  %2456 = vmatprep.subr.mxu0 0.0
  %2457 = vmatpush1.msra.mxu0 0.0
  %2458 = vmatprep.subr.mxu0 0.0
  %2459 = vmatpush1.msra.mxu0 0.0
  %2460 = vmatprep.mubr.f32.mxu0 0.0
  %2461 = vmatmul.mubr.f32.gmra.mrb[0].mxu0 %v2394
  %v2462 = vpop.f32.mrb[0].mxu0
  %v2463 = vadd.f32 %v2388, %v2462
  %v2464 = vpop.f32.mrb[0].mxu0
  %2465 = vdwg.mxu0
  %v2466 = vld [vmem:[%s8] sm:$0x1]
  %v2468 = vlaneseq
  %v2469 = vshrl.u32 %v2468, 7
  %v2470 = vsub.s32 0, %v2469
  %v2471 = vrot.slane %v2466, %v2470
  %v2473 = vadd.f32 %v2463, %v2471
  %vm2474 = vcmask 31744
  %2475 = vst.msk [vmem:[%s9] sm:$0xff] %vm2474, %v2473
  // Predicated region
  $region38: #{textrnn_forward.1} parent=0 // pred_check
    _
  $region39: #{textrnn_forward.1} parent=0 // pred_check_branch
    %2477 = sbr.rel (0) target = $region41
  $region40: #{textrnn_forward.1} parent=0 // pred_region
    _
  $region41: #{textrnn_forward.1} parent=0 // pred_fallthru
    _
  // Predicated region
  $region42: #{textrnn_forward.1} parent=0 // pred_check
    _
  $region43: #{textrnn_forward.1} parent=0 // pred_check_branch
    %2479 = sbr.rel (0) target = $region45
  $region44: #{textrnn_forward.1} parent=0 // pred_region
    _
  $region45: #{textrnn_forward.1} parent=0 // pred_fallthru
    _

</llo_original>
